<compile_context>
chip_gen: v5e
topology: v5e:2x2
jax: 0.10.0
libtpu: 0.0.40
codegen_flags: <defaults>
</compile_context>

<pallas_src>
import functools

import jax
import jax.numpy as jnp
import numpy as np
from jax.experimental import pallas as pl
from jax.experimental.pallas import tpu as pltpu


# --------------------------------------------------------------------------
# Pallas kernel: TB windows, all heads batched, per grid step
# --------------------------------------------------------------------------
def _window_attn_kernel(x_ref, wqkv_ref, qkvb_ref, scale_ref, bias_ref, *rest,
                        num_heads, head_dim, tb, n_tok, n_mask_windows,
                        approx_recip):
    # Ref shapes (per grid step g over window-blocks):
    #   x_ref    : (TB*N, C)   bf16   TB windows, flattened tokens
    #   wqkv_ref : (C, 3C)     bf16   pre-transposed qkv weight (resident)
    #   qkvb_ref : (1, 3C)     f32    stacked (q_bias, 0, v_bias)
    #   scale_ref: (H, 1)      f32    exp(clamp(logit_scale))
    #   bias_ref : (H, N, N)   f32    16*sigmoid(rel_pos_bias), VMEM-resident
    #   mask_ref : (nW, N, N)  f32    whole mask, VMEM-resident (if any)
    #   wproj_ref: (C, C)      bf16   pre-transposed proj weight (resident)
    #   bproj_ref: (1, C)      f32
    #   o_ref    : (TB*N, C)   x.dtype
    if n_mask_windows:
        mask_ref, wproj_ref, bproj_ref, o_ref = rest
    else:
        mask_ref = None
        wproj_ref, bproj_ref, o_ref = rest

    H, hd, N, TB = num_heads, head_dim, n_tok, tb
    C = H * hd
    T = TB * N
    f32 = jnp.float32
    bf16 = jnp.bfloat16
    eps2 = f32(1e-24)  # (F.normalize eps=1e-12)^2

    # ---- fused QKV projection: one (TB*N, C) @ (C, 3C) bf16 MXU matmul ----
    qkv = jnp.dot(x_ref[...], wqkv_ref[...], preferred_element_type=f32)
    qkv = qkv + qkvb_ref[...]                                   # (T, 3C) f32

    # ---- regroup heads into the batch axis: (H*TB, N, hd) --------------
    # (lane slice per head + axis-0 concat; v cast to bf16 immediately so the
    #  large f32 live set is only q/k during normalization)
    q_parts, k_parts, v_parts = [], [], []
    for h in range(H):
        lo = h * hd
        q_parts.append(qkv[:, lo:lo + hd].reshape(TB, N, hd))
        k_parts.append(qkv[:, C + lo:C + lo + hd].reshape(TB, N, hd))
        v_parts.append(
            qkv[:, 2 * C + lo:2 * C + lo + hd].reshape(TB, N, hd).astype(bf16))
    q3 = jnp.concatenate(q_parts, axis=0)                       # (H*TB, N, hd) f32
    k3 = jnp.concatenate(k_parts, axis=0)                       # (H*TB, N, hd) f32
    v3 = jnp.concatenate(v_parts, axis=0)                       # (H*TB, N, hd) bf16

    # ---- cosine attention: wide L2 normalize (f32, EUP rsqrt), fold scale ----
    def _l2n(t):
        ss = jnp.sum(t * t, axis=-1, keepdims=True)
        return t * jax.lax.rsqrt(jnp.maximum(ss, eps2))

    kn = _l2n(k3).astype(bf16)
    qn = _l2n(q3).reshape(H, TB, N, hd)
    qn = (qn * scale_ref[...].reshape(H, 1, 1, 1))              # scale into q: N*hd muls
    qn = qn.reshape(H * TB, N, hd).astype(bf16)

    # ---- batched QK^T on the MXU (bf16 in, f32 accumulate) ----
    attn = jnp.einsum("bnd,bmd->bnm", qn, kn,
                      preferred_element_type=f32)               # (H*TB, N, N)

    # relative position bias (+ shifted-window mask) via 4-D leading view
    attn = attn.reshape(H, TB, N, N) + bias_ref[...][:, None, :, :]
    if n_mask_windows:
        nW = n_mask_windows
        if TB == nW:
            mask_blk = mask_ref[...]
        elif TB < nW:                          # TB | nW (enforced in wrapper)
            start = (pl.program_id(0) * TB) % nW
            mask_blk = mask_ref[pl.ds(start, TB), :, :]
        else:                                  # nW | TB (enforced in wrapper)
            rep = TB // nW
            mask_blk = jnp.broadcast_to(
                mask_ref[...][None], (rep, nW, N, N)).reshape(TB, N, N)
        attn = attn + mask_blk[None, :, :, :]
    attn = attn.reshape(H * TB, N, N)

    # ---- numerically-stable softmax over keys (f32) ----
    m = jnp.max(attn, axis=-1, keepdims=True)
    e = jnp.exp(attn - m)
    denom = jnp.sum(e, axis=-1, keepdims=True)
    if approx_recip:
        p = e * pl.reciprocal(denom, approx=True)   # EUP slot; precision trade-off
    else:
        p = e / denom
    p = p.astype(bf16)

    # ---- batched P @ V on the MXU ----
    o3 = jnp.einsum("bnm,bmd->bnd", p, v3,
                    preferred_element_type=f32)                 # (H*TB, N, hd) f32

    # ---- merge heads back to (T, C) bf16 (cast before the lane concat) ----
    y = jnp.concatenate(
        [o3[h * TB:(h + 1) * TB].reshape(T, hd).astype(bf16) for h in range(H)],
        axis=-1)                                                # (T, C) bf16

    # ---- fused output projection (full-C contraction on the MXU) ----
    y = jnp.dot(y, wproj_ref[...], preferred_element_type=f32) + bproj_ref[...]
    o_ref[...] = y.astype(o_ref.dtype)


# --------------------------------------------------------------------------
# Parameter construction / host-side glue
# --------------------------------------------------------------------------
def make_params(key, dim, window_size, num_heads):
    ks = jax.random.split(key, 8)
    return {
        "logit_scale": jnp.log(10.0 * jnp.ones((num_heads, 1, 1), jnp.float32)),
        "cpb_w1": 0.02 * jax.random.normal(ks[0], (512, 2), jnp.float32),
        "cpb_b1": 0.02 * jax.random.normal(ks[1], (512,), jnp.float32),
        "cpb_w2": 0.02 * jax.random.normal(ks[2], (num_heads, 512), jnp.float32),
        "w_qkv": 0.02 * jax.random.normal(ks[3], (3 * dim, dim), jnp.float32),
        "q_bias": 0.02 * jax.random.normal(ks[4], (dim,), jnp.float32),
        "v_bias": 0.02 * jax.random.normal(ks[5], (dim,), jnp.float32),
        "w_proj": 0.02 * jax.random.normal(ks[6], (dim, dim), jnp.float32),
        "b_proj": 0.02 * jax.random.normal(ks[7], (dim,), jnp.float32),
    }


def _relative_tables(window_size):
    """relative_coords_table and relative_position_index (as in __init__)."""
    Wh, Ww = window_size
    rh = np.arange(-(Wh - 1), Wh, dtype=np.float32)
    rw = np.arange(-(Ww - 1), Ww, dtype=np.float32)
    table = np.stack(np.meshgrid(rh, rw, indexing="ij"))              # (2, 2Wh-1, 2Ww-1)
    table = np.transpose(table, (1, 2, 0))[None]                      # (1, 2Wh-1, 2Ww-1, 2)
    table[:, :, :, 0] /= max(Wh - 1, 1)
    table[:, :, :, 1] /= max(Ww - 1, 1)
    table *= 8.0
    table = np.sign(table) * np.log2(np.abs(table) + 1.0) / np.log2(8.0)

    ch = np.arange(Wh)
    cw = np.arange(Ww)
    coords = np.stack(np.meshgrid(ch, cw, indexing="ij"))             # (2, Wh, Ww)
    coords_flat = coords.reshape(2, -1)                               # (2, N)
    rel = coords_flat[:, :, None] - coords_flat[:, None, :]           # (2, N, N)
    rel = np.transpose(rel, (1, 2, 0)).astype(np.int64)               # (N, N, 2)
    rel[:, :, 0] += Wh - 1
    rel[:, :, 1] += Ww - 1
    rel[:, :, 0] *= 2 * Ww - 1
    index = rel.sum(-1)                                               # (N, N)
    return jnp.asarray(table, jnp.float32), jnp.asarray(index, jnp.int32)


def _relative_position_bias(params, window_size, num_heads):
    """cpb_mlp(table) gathered by relative_position_index -> 16*sigmoid, (H, N, N)."""
    table, index = _relative_tables(window_size)
    h = table @ params["cpb_w1"].T + params["cpb_b1"]
    h = jax.nn.relu(h)
    bias_table = (h @ params["cpb_w2"].T).reshape(-1, num_heads)
    N = window_size[0] * window_size[1]
    bias = bias_table[index.reshape(-1)].reshape(N, N, num_heads)
    bias = jnp.transpose(bias, (2, 0, 1))                              # (H, N, N)
    return 16.0 * jax.nn.sigmoid(bias)


# --------------------------------------------------------------------------
# Arch-dependent budgets / block sizing
# --------------------------------------------------------------------------
def _tpu_kind():
    try:
        return jax.devices()[0].device_kind.lower()
    except Exception:
        return ""


def _arch_budgets():
    """Returns (kind, TB-sizing byte budget, vmem_limit_bytes)."""
    kind = _tpu_kind()
    if "v7" in kind:
        return kind, 28 << 20, 48 << 20      # 64 MiB physical VMEM part
    if "v4" in kind or "v5" in kind or "v6" in kind:
        return kind, 64 << 20, 100 << 20     # 128 MiB physical VMEM parts
    return kind, 24 << 20, 64 << 20          # unknown: stay conservative


def _pick_block_windows(B_, N, C, H, nW, out_itemsize, vmem_budget, kind=""):
    """Windows per grid step: large enough to feed the MXU / amortize per-step
    overhead, bounded by an arch-dependent VMEM estimate, layout-legal, and
    (when masked) compatible with the resident-mask indexing (TB|nW or nW|TB).
    Also keeps the grid >= 2 (prefer even) so both v7x TensorCores get work."""
    # resident single-buffered constants (bf16 weights, f32 bias/mask/biases)
    resident = 2 * (3 * C * C + C * C) + 4 * (H * N * N + nW * N * N) + 32 * C
    # per-window: double-buffered x/out blocks + rough f32/bf16 temporaries
    per_win = (2 * 2 * N * C                 # x block (bf16) x2 buffers
               + 2 * out_itemsize * N * C    # out block x2 buffers
               + 28 * N * C                  # qkv/q/k/o f32 (+ bf16 copies)
               + 12 * H * N * N)             # attn / exp / p temporaries
    cap_vmem = max(1, (vmem_budget - resident) // max(1, per_win))
    row_cap = 1024 if "v7" in kind else 2048
    cap = max(1, min(cap_vmem, max(1, row_cap // max(1, N)), B_))
    if B_ >= 2:
        cap = min(cap, max(1, B_ // 2))      # grid >= 2

    def legal(d, sub):
        if B_ % d or d > cap:
            return False
        if nW and (nW % d != 0 and d % nW != 0):
            return False
        return (d * N) % sub == 0

    for sub in (16, 8):                      # prefer bf16-native sublane tiles
        cands = [d for d in range(1, B_ + 1) if legal(d, sub)]
        if cands:
            best = max(cands)
            even = [d for d in cands if (B_ // d) % 2 == 0]
            if even and 2 * max(even) >= best:
                best = max(even)             # prefer an even grid (dual TC)
            return best
    return B_   # full-extent block is always layout-legal (rare fallback)


# Single-buffer constant-index blocks (never re-fetched across grid steps).
_BUFFERED = getattr(pl, "Buffered", None)


def _const_spec(shape):
    idx = lambda g: (0,) * len(shape)
    if _BUFFERED is not None:
        try:
            return pl.BlockSpec(shape, idx, pipeline_mode=_BUFFERED(1))
        except Exception:
            pass
    return pl.BlockSpec(shape, idx)


# --------------------------------------------------------------------------
# Wrapper calling pallas_call
# --------------------------------------------------------------------------
def window_attention(x, params, window_size, num_heads, mask=None,
                     block_windows=None, approx_softmax=True):
    B_, N, C = x.shape
    assert N == window_size[0] * window_size[1]
    assert C % num_heads == 0
    H = num_heads
    head_dim = C // H
    f32, bf16 = jnp.float32, jnp.bfloat16

    nW = int(mask.shape[0]) if mask is not None else 0
    if mask is not None:
        assert B_ % nW == 0

    kind, sizing_budget, vmem_limit = _arch_budgets()
    TB = block_windows or _pick_block_windows(
        B_, N, C, H, nW, jnp.dtype(x.dtype).itemsize, sizing_budget, kind)
    assert B_ % TB == 0
    if nW:
        assert (nW % TB == 0) or (TB % nW == 0), "TB must divide nW or vice versa"
    grid = (B_ // TB,)

    # ---- host-side parameter prep -----------------------------------------
    # pre-transposed bf16 weights (y = x @ W): no in-kernel .T, half the DMA
    w_qkv_t = jnp.transpose(params["w_qkv"]).astype(bf16)      # (C, 3C)
    w_proj_t = jnp.transpose(params["w_proj"]).astype(bf16)    # (C, C)

    qkv_bias = jnp.concatenate(
        [params["q_bias"], jnp.zeros_like(params["v_bias"]), params["v_bias"]]
    ).reshape(1, 3 * C).astype(f32)
    b_proj = params["b_proj"].reshape(1, C).astype(f32)

    # clamp(max=log(1/0.01)).exp()  -> (H, 1)
    scale = jnp.exp(
        jnp.minimum(params["logit_scale"], jnp.log(jnp.float32(1.0 / 0.01)))
    ).reshape(H, 1).astype(f32)

    # continuous relative position bias, computed once in plain JAX
    rel_bias = _relative_position_bias(params, window_size, H)  # (H, N, N) f32

    # tokens flattened so the projections are plain 2-D MXU matmuls
    x2 = x.reshape(B_ * N, C).astype(bf16)

    in_specs = [
        pl.BlockSpec((TB * N, C), lambda g: (g, 0)),            # streamed x (bf16)
        _const_spec((C, 3 * C)),                                # qkv weight^T
        _const_spec((1, 3 * C)),                                # qkv bias
        _const_spec((H, 1)),                                    # logit scale
        _const_spec((H, N, N)),                                 # rel pos bias (resident)
    ]
    args = [x2, w_qkv_t, qkv_bias, scale, rel_bias]

    if mask is not None:
        # whole (nW, N, N) mask VMEM-resident; no host-side (B_, N, N) tiling
        in_specs.append(_const_spec((nW, N, N)))
        args.append(mask.astype(f32))

    in_specs += [
        _const_spec((C, C)),                                    # proj weight^T
        _const_spec((1, C)),                                    # proj bias
    ]
    args += [w_proj_t, b_proj]

    kernel = functools.partial(
        _window_attn_kernel, num_heads=H, head_dim=head_dim,
        tb=TB, n_tok=N, n_mask_windows=nW, approx_recip=approx_softmax)

    grid_spec = pltpu.PrefetchScalarGridSpec(
        num_scalar_prefetch=0,
        grid=grid,
        in_specs=in_specs,
        out_specs=pl.BlockSpec((TB * N, C), lambda g: (g, 0)),
    )

    out2 = pl.pallas_call(
        kernel,
        out_shape=jax.ShapeDtypeStruct((B_ * N, C), x.dtype),
        grid_spec=grid_spec,
        compiler_params=pltpu.CompilerParams(
            dimension_semantics=("parallel",),
            vmem_limit_bytes=int(vmem_limit)),
    )(*args)
    return out2.reshape(B_, N, C)


# --------------------------------------------------------------------------
# Pure-JAX reference (mirrors the PyTorch forward) for verification
# --------------------------------------------------------------------------
def window_attention_ref(x, params, window_size, num_heads, mask=None):
    B_, N, C = x.shape
    hd = C // num_heads
    qkv_bias = jnp.concatenate(
        [params["q_bias"], jnp.zeros_like(params["v_bias"]), params["v_bias"]]
    )
    qkv = x @ params["w_qkv"].T + qkv_bias
    qkv = qkv.reshape(B_, N, 3, num_heads, hd).transpose(2, 0, 3, 1, 4)
    q, k, v = qkv[0], qkv[1], qkv[2]

    def l2norm(t):
        return t / jnp.maximum(jnp.linalg.norm(t, axis=-1, keepdims=True), 1e-12)

    attn = l2norm(q) @ jnp.swapaxes(l2norm(k), -2, -1)
    scale = jnp.exp(jnp.minimum(params["logit_scale"], jnp.log(jnp.float32(100.0))))
    attn = attn * scale
    attn = attn + _relative_position_bias(params, window_size, num_heads)[None]
    if mask is not None:
        nW = mask.shape[0]
        attn = attn.reshape(B_ // nW, nW, num_heads, N, N) + mask[None, :, None]
        attn = attn.reshape(B_, num_heads, N, N)
    attn = jax.nn.softmax(attn, axis=-1)
    out = (attn @ v).transpose(0, 2, 1, 3).reshape(B_, N, C)
    return out @ params["w_proj"].T + params["b_proj"]


# --------------------------------------------------------------------------
if __name__ == "__main__":
    dim = 32
    window_size = (4, 4)          # N = 16
    num_heads = 4
    batch, n_windows = 2, 4
    B_ = batch * n_windows
    N = window_size[0] * window_size[1]

    key = jax.random.PRNGKey(0)
    kx, kp, km = jax.random.split(key, 3)
    x = jax.random.normal(kx, (B_, N, dim), jnp.float32)
    params = make_params(kp, dim, window_size, num_heads)

    # ---- no-mask (regular window attention) path ----
    out = jax.block_until_ready(window_attention(x, params, window_size, num_heads))
    ref = window_attention_ref(x, params, window_size, num_heads)
    np.testing.assert_allclose(np.asarray(out), np.asarray(ref), rtol=2e-2, atol=1e-2)

    # ---- masked (shifted-window) path ----
    mask = jnp.where(jax.random.uniform(km, (n_windows, N, N)) < 0.5,
                     0.0, -100.0).astype(jnp.float32)
    out_m = jax.block_until_ready(
        window_attention(x, params, window_size, num_heads, mask=mask))
    ref_m = window_attention_ref(x, params, window_size, num_heads, mask=mask)
    np.testing.assert_allclose(np.asarray(out_m), np.asarray(ref_m), rtol=2e-2, atol=1e-2)

    print("KERNEL_OK")
</pallas_src>

<mosaic_0001>
module attributes {stable_mosaic.version = 11 : i64} {
  func.func @_window_attn_kernel(%arg0: i32, %arg1: memref<64x32xbf16, #tpu.memory_space<vmem>>, %arg2: memref<32x96xbf16, #tpu.memory_space<vmem>>, %arg3: memref<1x96xf32, #tpu.memory_space<vmem>>, %arg4: memref<4x1xf32, #tpu.memory_space<vmem>>, %arg5: memref<4x16x16xf32, #tpu.memory_space<vmem>>, %arg6: memref<32x32xbf16, #tpu.memory_space<vmem>>, %arg7: memref<1x32xf32, #tpu.memory_space<vmem>>, %arg8: memref<64x32xf32, #tpu.memory_space<vmem>>) attributes {dimension_semantics = [#tpu.dimension_semantics<parallel>], iteration_bounds = array<i64: 2>, scalar_prefetch = 0 : i64, scratch_operands = 0 : i64, tpu.core_type = #tpu.core_type<tc>, window_params = [{transform_indices = @transform_0, window_bounds = array<i64: 64, 32>}, {pipeline_mode = #tpu.pipeline_mode<synchronous>, transform_indices = @transform_1, window_bounds = array<i64: 32, 96>}, {pipeline_mode = #tpu.pipeline_mode<synchronous>, transform_indices = @transform_2, window_bounds = array<i64: 1, 96>}, {pipeline_mode = #tpu.pipeline_mode<synchronous>, transform_indices = @transform_3, window_bounds = array<i64: 4, 1>}, {pipeline_mode = #tpu.pipeline_mode<synchronous>, transform_indices = @transform_4, window_bounds = array<i64: 4, 16, 16>}, {pipeline_mode = #tpu.pipeline_mode<synchronous>, transform_indices = @transform_5, window_bounds = array<i64: 32, 32>}, {pipeline_mode = #tpu.pipeline_mode<synchronous>, transform_indices = @transform_6, window_bounds = array<i64: 1, 32>}, {transform_indices = @transform_7, window_bounds = array<i64: 64, 32>}]} {
    %c0 = arith.constant 0 : index
    %c0_0 = arith.constant 0 : index
    %0 = vector.load %arg1[%c0, %c0_0] : memref<64x32xbf16, #tpu.memory_space<vmem>>, vector<64x32xbf16>
    %c0_1 = arith.constant 0 : index
    %c0_2 = arith.constant 0 : index
    %1 = vector.load %arg2[%c0_1, %c0_2] : memref<32x96xbf16, #tpu.memory_space<vmem>>, vector<32x96xbf16>
    %cst = arith.constant dense<0.000000e+00> : vector<64x96xf32>
    %2 = tpu.matmul %0, %1, %cst {dimension_numbers = #tpu.dot_dimension_numbers<[1], [0], [0], [1], [0, 0, 1, 1], [], []>} : vector<64x32xbf16>, vector<32x96xbf16>, vector<64x96xf32> -> vector<64x96xf32>
    %c0_3 = arith.constant 0 : index
    %c0_4 = arith.constant 0 : index
    %3 = vector.load %arg3[%c0_3, %c0_4] : memref<1x96xf32, #tpu.memory_space<vmem>>, vector<1x96xf32>
    %4 = vector.broadcast %3 : vector<1x96xf32> to vector<64x96xf32>
    %5 = arith.addf %2, %4 : vector<64x96xf32>
    %6 = vector.extract_strided_slice %5 {offsets = [0, 0], sizes = [64, 8], strides = [1, 1]} : vector<64x96xf32> to vector<64x8xf32>
    %7 = vector.shape_cast %6 : vector<64x8xf32> to vector<4x16x8xf32>
    %8 = vector.extract_strided_slice %5 {offsets = [0, 32], sizes = [64, 8], strides = [1, 1]} : vector<64x96xf32> to vector<64x8xf32>
    %9 = vector.shape_cast %8 : vector<64x8xf32> to vector<4x16x8xf32>
    %10 = vector.extract_strided_slice %5 {offsets = [0, 64], sizes = [64, 8], strides = [1, 1]} : vector<64x96xf32> to vector<64x8xf32>
    %11 = vector.shape_cast %10 : vector<64x8xf32> to vector<4x16x8xf32>
    %12 = arith.truncf %11 : vector<4x16x8xf32> to vector<4x16x8xbf16>
    %13 = vector.extract_strided_slice %5 {offsets = [0, 8], sizes = [64, 8], strides = [1, 1]} : vector<64x96xf32> to vector<64x8xf32>
    %14 = vector.shape_cast %13 : vector<64x8xf32> to vector<4x16x8xf32>
    %15 = vector.extract_strided_slice %5 {offsets = [0, 40], sizes = [64, 8], strides = [1, 1]} : vector<64x96xf32> to vector<64x8xf32>
    %16 = vector.shape_cast %15 : vector<64x8xf32> to vector<4x16x8xf32>
    %17 = vector.extract_strided_slice %5 {offsets = [0, 72], sizes = [64, 8], strides = [1, 1]} : vector<64x96xf32> to vector<64x8xf32>
    %18 = vector.shape_cast %17 : vector<64x8xf32> to vector<4x16x8xf32>
    %19 = arith.truncf %18 : vector<4x16x8xf32> to vector<4x16x8xbf16>
    %20 = vector.extract_strided_slice %5 {offsets = [0, 16], sizes = [64, 8], strides = [1, 1]} : vector<64x96xf32> to vector<64x8xf32>
    %21 = vector.shape_cast %20 : vector<64x8xf32> to vector<4x16x8xf32>
    %22 = vector.extract_strided_slice %5 {offsets = [0, 48], sizes = [64, 8], strides = [1, 1]} : vector<64x96xf32> to vector<64x8xf32>
    %23 = vector.shape_cast %22 : vector<64x8xf32> to vector<4x16x8xf32>
    %24 = vector.extract_strided_slice %5 {offsets = [0, 80], sizes = [64, 8], strides = [1, 1]} : vector<64x96xf32> to vector<64x8xf32>
    %25 = vector.shape_cast %24 : vector<64x8xf32> to vector<4x16x8xf32>
    %26 = arith.truncf %25 : vector<4x16x8xf32> to vector<4x16x8xbf16>
    %27 = vector.extract_strided_slice %5 {offsets = [0, 24], sizes = [64, 8], strides = [1, 1]} : vector<64x96xf32> to vector<64x8xf32>
    %28 = vector.shape_cast %27 : vector<64x8xf32> to vector<4x16x8xf32>
    %29 = vector.extract_strided_slice %5 {offsets = [0, 56], sizes = [64, 8], strides = [1, 1]} : vector<64x96xf32> to vector<64x8xf32>
    %30 = vector.shape_cast %29 : vector<64x8xf32> to vector<4x16x8xf32>
    %31 = vector.extract_strided_slice %5 {offsets = [0, 88], sizes = [64, 8], strides = [1, 1]} : vector<64x96xf32> to vector<64x8xf32>
    %32 = vector.shape_cast %31 : vector<64x8xf32> to vector<4x16x8xf32>
    %33 = arith.truncf %32 : vector<4x16x8xf32> to vector<4x16x8xbf16>
    %34 = tpu.concatenate %7, %14, %21, %28 in 0 : vector<4x16x8xf32>, vector<4x16x8xf32>, vector<4x16x8xf32>, vector<4x16x8xf32> -> vector<16x16x8xf32>
    %35 = tpu.concatenate %9, %16, %23, %30 in 0 : vector<4x16x8xf32>, vector<4x16x8xf32>, vector<4x16x8xf32>, vector<4x16x8xf32> -> vector<16x16x8xf32>
    %36 = tpu.concatenate %12, %19, %26, %33 in 0 : vector<4x16x8xbf16>, vector<4x16x8xbf16>, vector<4x16x8xbf16>, vector<4x16x8xbf16> -> vector<16x16x8xbf16>
    %37 = arith.mulf %35, %35 : vector<16x16x8xf32>
    %cst_5 = arith.constant dense<0.000000e+00> : vector<16x16xf32>
    %38 = vector.multi_reduction <add>, %37, %cst_5 [2] : vector<16x16x8xf32> to vector<16x16xf32>
    %39 = vector.shape_cast %38 : vector<16x16xf32> to vector<16x16x1xf32>
    %cst_6 = arith.constant 1.000000e-24 : f32
    %40 = vector.broadcast %cst_6 : f32 to vector<16x16x1xf32>
    %41 = arith.maximumf %39, %40 : vector<16x16x1xf32>
    %42 = math.rsqrt %41 : vector<16x16x1xf32>
    %43 = vector.broadcast %42 : vector<16x16x1xf32> to vector<16x16x8xf32>
    %44 = arith.mulf %35, %43 : vector<16x16x8xf32>
    %45 = arith.truncf %44 : vector<16x16x8xf32> to vector<16x16x8xbf16>
    %46 = arith.mulf %34, %34 : vector<16x16x8xf32>
    %cst_7 = arith.constant dense<0.000000e+00> : vector<16x16xf32>
    %47 = vector.multi_reduction <add>, %46, %cst_7 [2] : vector<16x16x8xf32> to vector<16x16xf32>
    %48 = vector.shape_cast %47 : vector<16x16xf32> to vector<16x16x1xf32>
    %cst_8 = arith.constant 1.000000e-24 : f32
    %49 = vector.broadcast %cst_8 : f32 to vector<16x16x1xf32>
    %50 = arith.maximumf %48, %49 : vector<16x16x1xf32>
    %51 = math.rsqrt %50 : vector<16x16x1xf32>
    %52 = vector.broadcast %51 : vector<16x16x1xf32> to vector<16x16x8xf32>
    %53 = arith.mulf %34, %52 : vector<16x16x8xf32>
    %54 = vector.shape_cast %53 : vector<16x16x8xf32> to vector<4x4x16x8xf32>
    %c0_9 = arith.constant 0 : index
    %c0_10 = arith.constant 0 : index
    %55 = vector.load %arg4[%c0_9, %c0_10] : memref<4x1xf32, #tpu.memory_space<vmem>>, vector<4x1xf32>
    %56 = vector.shape_cast %55 : vector<4x1xf32> to vector<4x1x1x1xf32>
    %57 = vector.broadcast %56 : vector<4x1x1x1xf32> to vector<4x4x16x8xf32>
    %58 = arith.mulf %54, %57 : vector<4x4x16x8xf32>
    %59 = vector.shape_cast %58 : vector<4x4x16x8xf32> to vector<16x16x8xf32>
    %60 = arith.truncf %59 : vector<16x16x8xf32> to vector<16x16x8xbf16>
    "tpu.trace_start"() <{level = 10 : i32, message = "bnd,bmd->bnm"}> : () -> ()
    %cst_11 = arith.constant dense<0.000000e+00> : vector<16x16x16xf32>
    %61 = tpu.matmul %60, %45, %cst_11 {dimension_numbers = #tpu.dot_dimension_numbers<[2], [2], [1], [1], [0, 0, 0, 1, 1, 1], [0], [0]>} : vector<16x16x8xbf16>, vector<16x16x8xbf16>, vector<16x16x16xf32> -> vector<16x16x16xf32>
    "tpu.trace_stop"() : () -> ()
    %62 = vector.shape_cast %61 : vector<16x16x16xf32> to vector<4x4x16x16xf32>
    %c0_12 = arith.constant 0 : index
    %c0_13 = arith.constant 0 : index
    %c0_14 = arith.constant 0 : index
    %63 = vector.load %arg5[%c0_12, %c0_13, %c0_14] : memref<4x16x16xf32, #tpu.memory_space<vmem>>, vector<4x16x16xf32>
    %64 = vector.shape_cast %63 : vector<4x16x16xf32> to vector<4x1x16x16xf32>
    %65 = vector.broadcast %64 : vector<4x1x16x16xf32> to vector<4x4x16x16xf32>
    %66 = arith.addf %62, %65 : vector<4x4x16x16xf32>
    %67 = vector.shape_cast %66 : vector<4x4x16x16xf32> to vector<16x16x16xf32>
    %cst_15 = arith.constant dense<0xFF800000> : vector<16x16xf32>
    %68 = vector.multi_reduction <maximumf>, %67, %cst_15 [2] : vector<16x16x16xf32> to vector<16x16xf32>
    %69 = vector.shape_cast %68 : vector<16x16xf32> to vector<16x16x1xf32>
    %70 = vector.broadcast %69 : vector<16x16x1xf32> to vector<16x16x16xf32>
    %71 = arith.subf %67, %70 : vector<16x16x16xf32>
    %72 = math.exp %71 : vector<16x16x16xf32>
    %cst_16 = arith.constant dense<0.000000e+00> : vector<16x16xf32>
    %73 = vector.multi_reduction <add>, %72, %cst_16 [2] : vector<16x16x16xf32> to vector<16x16xf32>
    %74 = vector.shape_cast %73 : vector<16x16xf32> to vector<16x16x1xf32>
    %75 = tpu.reciprocal %74 {approx = true} : vector<16x16x1xf32> -> vector<16x16x1xf32>
    %76 = vector.broadcast %75 : vector<16x16x1xf32> to vector<16x16x16xf32>
    %77 = arith.mulf %72, %76 : vector<16x16x16xf32>
    %78 = arith.truncf %77 : vector<16x16x16xf32> to vector<16x16x16xbf16>
    "tpu.trace_start"() <{level = 10 : i32, message = "bnm,bmd->bnd"}> : () -> ()
    %cst_17 = arith.constant dense<0.000000e+00> : vector<16x16x8xf32>
    %79 = tpu.matmul %78, %36, %cst_17 {dimension_numbers = #tpu.dot_dimension_numbers<[2], [1], [1], [2], [0, 0, 0, 1, 1, 2], [0], [0]>} : vector<16x16x16xbf16>, vector<16x16x8xbf16>, vector<16x16x8xf32> -> vector<16x16x8xf32>
    "tpu.trace_stop"() : () -> ()
    %80 = vector.extract_strided_slice %79 {offsets = [0, 0, 0], sizes = [4, 16, 8], strides = [1, 1, 1]} : vector<16x16x8xf32> to vector<4x16x8xf32>
    %81 = vector.shape_cast %80 : vector<4x16x8xf32> to vector<64x8xf32>
    %82 = arith.truncf %81 : vector<64x8xf32> to vector<64x8xbf16>
    %83 = vector.extract_strided_slice %79 {offsets = [4, 0, 0], sizes = [4, 16, 8], strides = [1, 1, 1]} : vector<16x16x8xf32> to vector<4x16x8xf32>
    %84 = vector.shape_cast %83 : vector<4x16x8xf32> to vector<64x8xf32>
    %85 = arith.truncf %84 : vector<64x8xf32> to vector<64x8xbf16>
    %86 = vector.extract_strided_slice %79 {offsets = [8, 0, 0], sizes = [4, 16, 8], strides = [1, 1, 1]} : vector<16x16x8xf32> to vector<4x16x8xf32>
    %87 = vector.shape_cast %86 : vector<4x16x8xf32> to vector<64x8xf32>
    %88 = arith.truncf %87 : vector<64x8xf32> to vector<64x8xbf16>
    %89 = vector.extract_strided_slice %79 {offsets = [12, 0, 0], sizes = [4, 16, 8], strides = [1, 1, 1]} : vector<16x16x8xf32> to vector<4x16x8xf32>
    %90 = vector.shape_cast %89 : vector<4x16x8xf32> to vector<64x8xf32>
    %91 = arith.truncf %90 : vector<64x8xf32> to vector<64x8xbf16>
    %92 = tpu.concatenate %82, %85, %88, %91 in 1 : vector<64x8xbf16>, vector<64x8xbf16>, vector<64x8xbf16>, vector<64x8xbf16> -> vector<64x32xbf16>
    %c0_18 = arith.constant 0 : index
    %c0_19 = arith.constant 0 : index
    %93 = vector.load %arg6[%c0_18, %c0_19] : memref<32x32xbf16, #tpu.memory_space<vmem>>, vector<32x32xbf16>
    %cst_20 = arith.constant dense<0.000000e+00> : vector<64x32xf32>
    %94 = tpu.matmul %92, %93, %cst_20 {dimension_numbers = #tpu.dot_dimension_numbers<[1], [0], [0], [1], [0, 0, 1, 1], [], []>} : vector<64x32xbf16>, vector<32x32xbf16>, vector<64x32xf32> -> vector<64x32xf32>
    %c0_21 = arith.constant 0 : index
    %c0_22 = arith.constant 0 : index
    %95 = vector.load %arg7[%c0_21, %c0_22] : memref<1x32xf32, #tpu.memory_space<vmem>>, vector<1x32xf32>
    %96 = vector.broadcast %95 : vector<1x32xf32> to vector<64x32xf32>
    %97 = arith.addf %94, %96 : vector<64x32xf32>
    %c0_23 = arith.constant 0 : index
    %c0_24 = arith.constant 0 : index
    %98 = vector.load %arg8[%c0_23, %c0_24] : memref<64x32xf32, #tpu.memory_space<vmem>>, vector<64x32xf32>
    tpu.vector_store %arg8[%c0_23, %c0_24], %97 {strides = array<i32>} : memref<64x32xf32, #tpu.memory_space<vmem>>, vector<64x32xf32>,
    return
  }
  func.func @transform_0(%arg0: i32) -> (i32, i32) {
    %c0_i32 = arith.constant 0 : i32
    %c0_i32_0 = arith.constant 0 : i32
    return %arg0, %c0_i32 : i32, i32
  }
  func.func @transform_1(%arg0: i32) -> (i32, i32) {
    %c0_i32 = arith.constant 0 : i32
    %c0_i32_0 = arith.constant 0 : i32
    %c0_i32_1 = arith.constant 0 : i32
    return %c0_i32, %c0_i32_0 : i32, i32
  }
  func.func @transform_2(%arg0: i32) -> (i32, i32) {
    %c0_i32 = arith.constant 0 : i32
    %c0_i32_0 = arith.constant 0 : i32
    %c0_i32_1 = arith.constant 0 : i32
    return %c0_i32, %c0_i32_0 : i32, i32
  }
  func.func @transform_3(%arg0: i32) -> (i32, i32) {
    %c0_i32 = arith.constant 0 : i32
    %c0_i32_0 = arith.constant 0 : i32
    %c0_i32_1 = arith.constant 0 : i32
    return %c0_i32, %c0_i32_0 : i32, i32
  }
  func.func @transform_4(%arg0: i32) -> (i32, i32, i32) {
    %c0_i32 = arith.constant 0 : i32
    %c0_i32_0 = arith.constant 0 : i32
    %c0_i32_1 = arith.constant 0 : i32
    %c0_i32_2 = arith.constant 0 : i32
    return %c0_i32, %c0_i32_0, %c0_i32_1 : i32, i32, i32
  }
  func.func @transform_5(%arg0: i32) -> (i32, i32) {
    %c0_i32 = arith.constant 0 : i32
    %c0_i32_0 = arith.constant 0 : i32
    %c0_i32_1 = arith.constant 0 : i32
    return %c0_i32, %c0_i32_0 : i32, i32
  }
  func.func @transform_6(%arg0: i32) -> (i32, i32) {
    %c0_i32 = arith.constant 0 : i32
    %c0_i32_0 = arith.constant 0 : i32
    %c0_i32_1 = arith.constant 0 : i32
    return %c0_i32, %c0_i32_0 : i32, i32
  }
  func.func @transform_7(%arg0: i32) -> (i32, i32) {
    %c0_i32 = arith.constant 0 : i32
    %c0_i32_0 = arith.constant 0 : i32
    return %arg0, %c0_i32 : i32, i32
  }
}

</mosaic_0001>

<llo_original>
// kernel: tpu_custom_call.1
$region0: #{tpu_custom_call.1}
  #allocation0 [shape = 'u32[]', space=smem, size = 0x4, offset = 0x4, fixed_abs, tag = 'smem constant byte address 0x4 - core index']
  #allocation1 [shape = 'u32[72,128]{1,0:T(1,128)}', space=vmem, size = 0x9000, scoped, tag = 'internal scratch']
  %s0 = inlined_call_operand.vmem [shape: bf16[128,32], index: 0, kind: input, shape index: {}]
  %s1 = inlined_call_operand.vmem [shape: bf16[32,96], index: 1, kind: input, shape index: {}]
  %s2 = inlined_call_operand.vmem [shape: f32[1,96], index: 2, kind: input, shape index: {}]
  %s3 = inlined_call_operand.vmem [shape: f32[4,1], index: 3, kind: input, shape index: {}]
  %s4 = inlined_call_operand.vmem [shape: f32[4,16,16], index: 4, kind: input, shape index: {}]
  %s5 = inlined_call_operand.hbm [shape: bf16[32,32], index: 5, kind: input, shape index: {}]
  %s6 = inlined_call_operand.vmem [shape: f32[1,32], index: 6, kind: input, shape index: {}]
  %s7 = inlined_call_operand.vmem [shape: f32[128,32], index: 7, kind: output, shape index: {}]
  %s8 = sld [smem:[#allocation0]]
  $region65: #{tpu_custom_call.1} parent=0
    _
  %s10 = ssub.s32 1, %s8
  %s11 = scalar_select 0, %s10, %s8
  $region1: #{tpu_custom_call.1} parent=0
    #allocation2 [shape = 'u8[8192]{0}', space=vmem, size = 0x2000, scoped, tag = 'input window, operand 5, single buffered']
    #allocation3 [shape = 's32[2]{0}', space=sflag, size = 0x8, scoped, tag = 'scoped memory for tpu_custom_call.1']
    %12 = vsyncpa [#allocation3], 0
    loop: start=0, step=1, limit=4
    $region2: #{tpu_custom_call.1} parent=1 // loop_pre_header
      _
    $region3: #{tpu_custom_call.1} parent=1 // loop_header
      %s14 = sphi 0, %s18
      %p15 = scmp.ge.s32.totalorder %s14, 4
      %s24 = sphi 0, %s26
      %s27 = sphi 0, %s24
      %s28 = sphi 0, %s27
      %s44 = sphi 0, %s28
      %s48 = sphi 0, %s48
      %s50 = sphi 0, %s48
      %s51 = sphi 0, %s50
      %s65 = sphi 0, %s51
      %s69 = sphi 0, %s69
      %s71 = sphi 0, %s69
      %s72 = sphi 0, %s71
      %s86 = sphi 0, %s72
      %s90 = sphi 0, %s90
      %s92 = sphi 0, %s90
      %s93 = sphi 0, %s92
      %s107 = sphi 0, %s93
      %s111 = sphi 0, %s111
      %s113 = sphi 0, %s111
      %s114 = sphi 0, %s113
      %s128 = sphi 0, %s114
      %s132 = sphi 0, %s132
      %s134 = sphi 0, %s132
      %s135 = sphi 0, %s134
      %s149 = sphi 0, %s135
      %s153 = sphi 0, %s153
      %s155 = sphi 0, %s153
      %s156 = sphi 0, %s155
      %s170 = sphi 0, %s156
      %s176 = sphi 0, %s178
      %s179 = sphi 0, %s176
      %s180 = sphi 0, %s179
      %s196 = sphi 0, %s180
    $region4: #{tpu_custom_call.1} parent=1 // loop_header_branch
      %17 = sbr.rel (%p15) target = $region8
    $region5: #{tpu_custom_call.1} parent=1 // loop_body
      %s19 = ssub.s32 %s14, 1
      %s20 = ssub.s32 %s14, 2
      %s21 = sadd.s32 %s14, 1
      %s22 = ssub.s32 %s14, %s21
      %p23 = scmp.eq.s32.totalorder %s22, 0
      %s25 = sadd.s32 %s24, 1
      %s26 = scalar_select %p23, %s24, %s25
      %p29 = pneg %p23
      %p30 = scmp.eq.s32.totalorder %s14, 1
      %p31 = por %p29, %p30
      %p32 = scmp.ne.s32.totalorder %s24, %s27
      %p33 = scmp.eq.s32.totalorder %s14, 0
      %p34 = por %p32, %p33
      %p35 = scmp.ne.s32.totalorder %s24, %s27
      %p36 = scmp.eq.s32.totalorder %s19, 1
      %p37 = por %p35, %p36
      %p38 = scmp.ne.s32.totalorder %s27, %s28
      %p39 = scmp.eq.s32.totalorder %s19, 0
      %p40 = por %p38, %p39
      %p41 = scmp.ne.s32.totalorder %s27, %s28
      %p42 = scmp.eq.s32.totalorder %s20, 1
      %p43 = por %p41, %p42
      %p45 = scmp.ne.s32.totalorder %s28, %s44
      %p46 = scmp.eq.s32.totalorder %s20, 0
      %p47 = por %p45, %p46
      %s49 = sadd.s32 %s48, 1
      %p52 = scmp.eq.s32.totalorder %s14, 1
      %p53 = scmp.ne.s32.totalorder %s48, %s50
      %p54 = scmp.eq.s32.totalorder %s14, 0
      %p55 = por %p53, %p54
      %p56 = scmp.ne.s32.totalorder %s48, %s50
      %p57 = scmp.eq.s32.totalorder %s19, 1
      %p58 = por %p56, %p57
      %p59 = scmp.ne.s32.totalorder %s50, %s51
      %p60 = scmp.eq.s32.totalorder %s19, 0
      %p61 = por %p59, %p60
      %p62 = scmp.ne.s32.totalorder %s50, %s51
      %p63 = scmp.eq.s32.totalorder %s20, 1
      %p64 = por %p62, %p63
      %p66 = scmp.ne.s32.totalorder %s51, %s65
      %p67 = scmp.eq.s32.totalorder %s20, 0
      %p68 = por %p66, %p67
      %s70 = sadd.s32 %s69, 1
      %p73 = scmp.eq.s32.totalorder %s14, 1
      %p74 = scmp.ne.s32.totalorder %s69, %s71
      %p75 = scmp.eq.s32.totalorder %s14, 0
      %p76 = por %p74, %p75
      %p77 = scmp.ne.s32.totalorder %s69, %s71
      %p78 = scmp.eq.s32.totalorder %s19, 1
      %p79 = por %p77, %p78
      %p80 = scmp.ne.s32.totalorder %s71, %s72
      %p81 = scmp.eq.s32.totalorder %s19, 0
      %p82 = por %p80, %p81
      %p83 = scmp.ne.s32.totalorder %s71, %s72
      %p84 = scmp.eq.s32.totalorder %s20, 1
      %p85 = por %p83, %p84
      %p87 = scmp.ne.s32.totalorder %s72, %s86
      %p88 = scmp.eq.s32.totalorder %s20, 0
      %p89 = por %p87, %p88
      %s91 = sadd.s32 %s90, 1
      %p94 = scmp.eq.s32.totalorder %s14, 1
      %p95 = scmp.ne.s32.totalorder %s90, %s92
      %p96 = scmp.eq.s32.totalorder %s14, 0
      %p97 = por %p95, %p96
      %p98 = scmp.ne.s32.totalorder %s90, %s92
      %p99 = scmp.eq.s32.totalorder %s19, 1
      %p100 = por %p98, %p99
      %p101 = scmp.ne.s32.totalorder %s92, %s93
      %p102 = scmp.eq.s32.totalorder %s19, 0
      %p103 = por %p101, %p102
      %p104 = scmp.ne.s32.totalorder %s92, %s93
      %p105 = scmp.eq.s32.totalorder %s20, 1
      %p106 = por %p104, %p105
      %p108 = scmp.ne.s32.totalorder %s93, %s107
      %p109 = scmp.eq.s32.totalorder %s20, 0
      %p110 = por %p108, %p109
      %s112 = sadd.s32 %s111, 1
      %p115 = scmp.eq.s32.totalorder %s14, 1
      %p116 = scmp.ne.s32.totalorder %s111, %s113
      %p117 = scmp.eq.s32.totalorder %s14, 0
      %p118 = por %p116, %p117
      %p119 = scmp.ne.s32.totalorder %s111, %s113
      %p120 = scmp.eq.s32.totalorder %s19, 1
      %p121 = por %p119, %p120
      %p122 = scmp.ne.s32.totalorder %s113, %s114
      %p123 = scmp.eq.s32.totalorder %s19, 0
      %p124 = por %p122, %p123
      %p125 = scmp.ne.s32.totalorder %s113, %s114
      %p126 = scmp.eq.s32.totalorder %s20, 1
      %p127 = por %p125, %p126
      %p129 = scmp.ne.s32.totalorder %s114, %s128
      %p130 = scmp.eq.s32.totalorder %s20, 0
      %p131 = por %p129, %p130
      %s133 = sadd.s32 %s132, 1
      %p136 = scmp.eq.s32.totalorder %s14, 1
      %p137 = scmp.ne.s32.totalorder %s132, %s134
      %p138 = scmp.eq.s32.totalorder %s14, 0
      %p139 = por %p137, %p138
      %p140 = scmp.ne.s32.totalorder %s132, %s134
      %p141 = scmp.eq.s32.totalorder %s19, 1
      %p142 = por %p140, %p141
      %p143 = scmp.ne.s32.totalorder %s134, %s135
      %p144 = scmp.eq.s32.totalorder %s19, 0
      %p145 = por %p143, %p144
      %p146 = scmp.ne.s32.totalorder %s134, %s135
      %p147 = scmp.eq.s32.totalorder %s20, 1
      %p148 = por %p146, %p147
      %p150 = scmp.ne.s32.totalorder %s135, %s149
      %p151 = scmp.eq.s32.totalorder %s20, 0
      %p152 = por %p150, %p151
      %s154 = sadd.s32 %s153, 1
      %p157 = scmp.eq.s32.totalorder %s14, 1
      %p158 = scmp.ne.s32.totalorder %s153, %s155
      %p159 = scmp.eq.s32.totalorder %s14, 0
      %p160 = por %p158, %p159
      %p161 = scmp.ne.s32.totalorder %s153, %s155
      %p162 = scmp.eq.s32.totalorder %s19, 1
      %p163 = por %p161, %p162
      %p164 = scmp.ne.s32.totalorder %s155, %s156
      %p165 = scmp.eq.s32.totalorder %s19, 0
      %p166 = por %p164, %p165
      %p167 = scmp.ne.s32.totalorder %s155, %s156
      %p168 = scmp.eq.s32.totalorder %s20, 1
      %p169 = por %p167, %p168
      %p171 = scmp.ne.s32.totalorder %s156, %s170
      %p172 = scmp.eq.s32.totalorder %s20, 0
      %p173 = por %p171, %p172
      %s174 = ssub.s32 %s14, %s21
      %p175 = scmp.eq.s32.totalorder %s174, 0
      %s177 = sadd.s32 %s176, 1
      %s178 = scalar_select %p175, %s176, %s177
      %p181 = pneg %p175
      %p182 = scmp.eq.s32.totalorder %s14, 1
      %p183 = por %p181, %p182
      %p184 = scmp.ne.s32.totalorder %s176, %s179
      %p185 = scmp.eq.s32.totalorder %s14, 0
      %p186 = por %p184, %p185
      %p187 = scmp.ne.s32.totalorder %s176, %s179
      %p188 = scmp.eq.s32.totalorder %s19, 1
      %p189 = por %p187, %p188
      %p190 = scmp.ne.s32.totalorder %s179, %s180
      %p191 = scmp.eq.s32.totalorder %s19, 0
      %p192 = por %p190, %p191
      %p193 = scmp.ne.s32.totalorder %s179, %s180
      %p194 = scmp.eq.s32.totalorder %s20, 1
      %p195 = por %p193, %p194
      %p197 = scmp.ne.s32.totalorder %s180, %s196
      %p198 = scmp.eq.s32.totalorder %s20, 0
      %p199 = por %p197, %p198
      %p200 = scmp.le.s32.totalorder 1, %s14
      %p201 = scmp.lt.s32.totalorder %s14, 3
      %p202 = pnand %p200, %p201
      %p203 = pneg %p202
      // Predicated region
      $region9: #{tpu_custom_call.1} parent=5 // pred_check
        _
      $region10: #{tpu_custom_call.1} parent=5 // pred_check_branch
        %205 = sbr.rel (%p202) target = $region12
      $region11: #{tpu_custom_call.1} parent=5 // pred_region
        %s206 = ssub.s32 %s14, 1
        // Predicated region
        $region13: #{tpu_custom_call.1} parent=11 // pred_check
          %p207 = pneg %p61
        $region14: #{tpu_custom_call.1} parent=11 // pred_check_branch
          %209 = sbr.rel (%p207) target = $region16
        $region15: #{tpu_custom_call.1} parent=11 // pred_region
          _
        $region16: #{tpu_custom_call.1} parent=11 // pred_fallthru
          _
        // Predicated region
        $region17: #{tpu_custom_call.1} parent=11 // pred_check
          %p210 = pneg %p82
        $region18: #{tpu_custom_call.1} parent=11 // pred_check_branch
          %212 = sbr.rel (%p210) target = $region20
        $region19: #{tpu_custom_call.1} parent=11 // pred_region
          _
        $region20: #{tpu_custom_call.1} parent=11 // pred_fallthru
          _
        // Predicated region
        $region21: #{tpu_custom_call.1} parent=11 // pred_check
          %p213 = pneg %p103
        $region22: #{tpu_custom_call.1} parent=11 // pred_check_branch
          %215 = sbr.rel (%p213) target = $region24
        $region23: #{tpu_custom_call.1} parent=11 // pred_region
          _
        $region24: #{tpu_custom_call.1} parent=11 // pred_fallthru
          _
        // Predicated region
        $region25: #{tpu_custom_call.1} parent=11 // pred_check
          %p216 = pneg %p124
        $region26: #{tpu_custom_call.1} parent=11 // pred_check_branch
          %218 = sbr.rel (%p216) target = $region28
        $region27: #{tpu_custom_call.1} parent=11 // pred_region
          _
        $region28: #{tpu_custom_call.1} parent=11 // pred_fallthru
          _
        // Predicated region
        $region29: #{tpu_custom_call.1} parent=11 // pred_check
          %p219 = pneg %p145
        $region30: #{tpu_custom_call.1} parent=11 // pred_check_branch
          %221 = sbr.rel (%p219) target = $region32
        $region31: #{tpu_custom_call.1} parent=11 // pred_region
          %223 = vsyncadd [#allocation3], 0
          %s224 = sshll.u32 %s5, 4
          %s225 = int_to_ptr.hbm [resolvable:$true] %s224
          %s226 = sshll.u32 [#allocation2], 4
          %s227 = int_to_ptr.vmem [resolvable:$true] %s226
          %232 = dma.hbm_to_vmem [thread:$0]  %s225, 256, %s227, [#allocation3], 64, 64, 4
        $region32: #{tpu_custom_call.1} parent=11 // pred_fallthru
          _
        // Predicated region
        $region33: #{tpu_custom_call.1} parent=11 // pred_check
          %p233 = pneg %p166
        $region34: #{tpu_custom_call.1} parent=11 // pred_check_branch
          %235 = sbr.rel (%p233) target = $region36
        $region35: #{tpu_custom_call.1} parent=11 // pred_region
          _
        $region36: #{tpu_custom_call.1} parent=11 // pred_fallthru
          _
      $region12: #{tpu_custom_call.1} parent=5 // pred_fallthru
        _
      %p236 = scmp.lt.s32.totalorder %s14, 2
      // Predicated region
      $region37: #{tpu_custom_call.1} parent=5 // pred_check
        %p237 = pneg %p236
      $region38: #{tpu_custom_call.1} parent=5 // pred_check_branch
        %239 = sbr.rel (%p237) target = $region40
      $region39: #{tpu_custom_call.1} parent=5 // pred_region
        // Predicated region
        $region41: #{tpu_custom_call.1} parent=39 // pred_check
          %p240 = pneg %p34
        $region42: #{tpu_custom_call.1} parent=39 // pred_check_branch
          %242 = sbr.rel (%p240) target = $region44
        $region43: #{tpu_custom_call.1} parent=39 // pred_region
          %s243 = smul.u32 8, %s14
          %p244 = scmp.lt.s32.totalorder %s243, 15
          %s245 = scalar_select %p244, %s243, 15
          %s246 = smul.addr %s245, 4
          %s247 = scalar_lea.vmem %s0, %s246
          %s248 = smul.u32 8, %s14
        $region44: #{tpu_custom_call.1} parent=39 // pred_fallthru
          _
      $region40: #{tpu_custom_call.1} parent=5 // pred_fallthru
        _
      %p249 = scmp.le.s32.totalorder 1, %s14
      %p250 = scmp.lt.s32.totalorder %s14, 3
      %p251 = pnand %p249, %p250
      %p252 = pneg %p251
      // Predicated region
      $region45: #{tpu_custom_call.1} parent=5 // pred_check
        _
      $region46: #{tpu_custom_call.1} parent=5 // pred_check_branch
        %254 = sbr.rel (%p251) target = $region48
      $region47: #{tpu_custom_call.1} parent=5 // pred_region
        %s255 = ssub.s32 %s14, 1
        // Predicated region
        $region49: #{tpu_custom_call.1} parent=47 // pred_check
          %p256 = pneg %p145
        $region50: #{tpu_custom_call.1} parent=47 // pred_check_branch
          %258 = sbr.rel (%p256) target = $region52
        $region51: #{tpu_custom_call.1} parent=47 // pred_region
          %260 = dma.done [#allocation3], 256
        $region52: #{tpu_custom_call.1} parent=47 // pred_fallthru
          _
        %s261 = smul.u32 8, %s19
        %p262 = scmp.lt.s32.totalorder %s261, 15
        %s263 = scalar_select %p262, %s261, 15
        %s264 = smul.addr %s263, 4
        %s265 = scalar_lea.vmem %s0, %s264
        %p266 = pneg %p40
        %p267 = pneg %p37
        %p268 = pneg %p61
        %p269 = pneg %p58
        %p270 = pneg %p82
        %p271 = pneg %p79
        %p272 = pneg %p103
        %p273 = pneg %p100
        %p274 = pneg %p124
        %p275 = pneg %p121
        %p276 = pneg %p145
        %p277 = pneg %p142
        %p278 = pneg %p166
        %p279 = pneg %p163
        %p280 = pneg %p192
        %p281 = pneg %p189
        %s282 = smul.u32 8, %s19
        %p283 = scmp.lt.s32.totalorder %s282, 15
        %s284 = scalar_select %p283, %s282, 15
        %s285 = smul.addr %s284, 8
        %s286 = scalar_lea.vmem %s7, %s285
        %s287 = smul.u32 8, %s19
        %p288 = scmp.lt.s32.totalorder %s287, 15
        %s289 = scalar_select %p288, %s287, 15
        %s290 = smul.addr %s289, 4
        %s291 = scalar_lea.vmem %s0, %s290
        %s292 = smul.u32 8, %s19
        %s293 = smul.u32 8, %s19
        %p294 = scmp.lt.s32.totalorder %s293, 15
        %s295 = scalar_select %p294, %s293, 15
        %s296 = smul.addr %s295, 8
        %s297 = scalar_lea.vmem %s7, %s296
        %s298 = smul.u32 8, %s19
        %v300 = vld [vmem:[%s291] sm:$0xf]
        %v301 = vld [vmem:[%s291 + $0x4] sm:$0xf]
        %v302 = vld [vmem:[%s291 + $0x8] sm:$0xf]
        %v303 = vld [vmem:[%s291 + $0xc] sm:$0xf]
        %v304 = vld [vmem:[%s291 + $0x10] sm:$0xf]
        %v305 = vld [vmem:[%s291 + $0x14] sm:$0xf]
        %v306 = vld [vmem:[%s291 + $0x18] sm:$0xf]
        %v307 = vld [vmem:[%s291 + $0x1c] sm:$0xf]
        %v308 = vld [vmem:[%s1] sm:$0xf]
        %v309 = vld [vmem:[%s1 + $0x4] sm:$0xf]
        %v310 = vld [vmem:[%s1 + $0x8] sm:$0xf]
        %v311 = vld [vmem:[%s1 + $0xc] sm:$0xf]
        %v312 = vld [vmem:[%s2] sm:$0x1]
        %v314 = vperm.slane %v312, 0
        %v324 = vunpack.c.l.b16 %v300
        %v325 = vunpack.c.l.b16 %v301
        %v326 = vunpack.c.l.b16 %v302
        %v327 = vunpack.c.l.b16 %v303
        %v328 = vunpack.c.l.b16 %v304
        %v329 = vunpack.c.l.b16 %v305
        %v330 = vunpack.c.l.b16 %v306
        %v331 = vunpack.c.l.b16 %v307
        %v332 = vpack.c.b16 %v325, %v324
        %v333 = vpack.c.b16 %v327, %v326
        %v334 = vpack.c.b16 %v329, %v328
        %v335 = vpack.c.b16 %v331, %v330
        %v340 = vunpack.c.l.b16 %v308
        %v341 = vunpack.c.l.b16 %v309
        %v342 = vunpack.c.l.b16 %v310
        %v343 = vunpack.c.l.b16 %v311
        %v344 = vpack.c.b16 %v341, %v340
        %v345 = vpack.c.b16 %v343, %v342
        %vm348 = vcmask 261120
        %v350 = vsel %vm348, %v332, 0
        %v353 = vsel %vm348, %v333, 0
        %v356 = vsel %vm348, %v334, 0
        %v359 = vsel %vm348, %v335, 0
        %361 = vmatpush.bf16.msra.mxu0 0
        %362 = vmatpush.bf16.msra.mxu0 0
        %363 = vmatpush.bf16.msra.mxu0 0
        %364 = vmatpush.bf16.msra.mxu0 0
        %365 = vmatpush.bf16.msra.mxu0 0
        %366 = vmatpush.bf16.msra.mxu0 0
        %367 = vmatpush.bf16.msra.mxu0 %v345
        %368 = vmatpush.bf16.msra.mxu0 %v344
        %369 = vmatmul.bf16.gmra.mxu0 %v350
        %v370 = vpop.f32.mrf.mxu0
        %v371 = vadd.f32 %v314, %v370
        %v372 = vpop.f32.mrf.mxu0
        %v373 = vadd.f32 %v314, %v372
        %374 = vmatmul.bf16.gmra.mxu0 %v353
        %v375 = vpop.f32.mrf.mxu0
        %v376 = vadd.f32 %v314, %v375
        %v377 = vpop.f32.mrf.mxu0
        %v378 = vadd.f32 %v314, %v377
        %379 = vmatmul.bf16.gmra.mxu0 %v356
        %v380 = vpop.f32.mrf.mxu0
        %v381 = vadd.f32 %v314, %v380
        %v382 = vpop.f32.mrf.mxu0
        %v383 = vadd.f32 %v314, %v382
        %384 = vmatmul.bf16.gmra.mxu0 %v359
        %v385 = vpop.f32.mrf.mxu0
        %v386 = vadd.f32 %v314, %v385
        %v387 = vpop.f32.mrf.mxu0
        %v388 = vadd.f32 %v314, %v387
        %389 = vdwg.mxu0
        %v390 = vpack.c.bf16 %v371, %v371
        %v391 = vpack.c.bf16 %v373, %v373
        %v392 = vpack.c.bf16 %v376, %v376
        %v393 = vpack.c.bf16 %v378, %v378
        %v394 = vpack.c.bf16 %v381, %v381
        %v395 = vpack.c.bf16 %v383, %v383
        %v396 = vpack.c.bf16 %v386, %v386
        %v397 = vpack.c.bf16 %v388, %v388
        %406 = vrot.lane.b32.xlu0 %v371, 120
        %v407 = vpop.permute.xlu0 %406
        %408 = vrot.lane.b32.xlu0 %v373, 120
        %v409 = vpop.permute.xlu0 %408
        %410 = vrot.lane.b32.xlu0 %v376, 120
        %v411 = vpop.permute.xlu0 %410
        %412 = vrot.lane.b32.xlu0 %v378, 120
        %v413 = vpop.permute.xlu0 %412
        %414 = vrot.lane.b32.xlu0 %v381, 120
        %v415 = vpop.permute.xlu0 %414
        %416 = vrot.lane.b32.xlu0 %v383, 120
        %v417 = vpop.permute.xlu0 %416
        %418 = vrot.lane.b32.xlu0 %v386, 120
        %v419 = vpop.permute.xlu0 %418
        %420 = vrot.lane.b32.xlu0 %v388, 120
        %v421 = vpop.permute.xlu0 %420
        %430 = vrot.lane.b32.xlu0 %v371, 112
        %v431 = vpop.permute.xlu0 %430
        %432 = vrot.lane.b32.xlu0 %v373, 112
        %v433 = vpop.permute.xlu0 %432
        %434 = vrot.lane.b32.xlu0 %v376, 112
        %v435 = vpop.permute.xlu0 %434
        %436 = vrot.lane.b32.xlu0 %v378, 112
        %v437 = vpop.permute.xlu0 %436
        %438 = vrot.lane.b32.xlu0 %v381, 112
        %v439 = vpop.permute.xlu0 %438
        %440 = vrot.lane.b32.xlu0 %v383, 112
        %v441 = vpop.permute.xlu0 %440
        %442 = vrot.lane.b32.xlu0 %v386, 112
        %v443 = vpop.permute.xlu0 %442
        %444 = vrot.lane.b32.xlu0 %v388, 112
        %v445 = vpop.permute.xlu0 %444
        %454 = vrot.lane.b32.xlu0 %v371, 104
        %v455 = vpop.permute.xlu0 %454
        %456 = vrot.lane.b32.xlu0 %v373, 104
        %v457 = vpop.permute.xlu0 %456
        %458 = vrot.lane.b32.xlu0 %v376, 104
        %v459 = vpop.permute.xlu0 %458
        %460 = vrot.lane.b32.xlu0 %v378, 104
        %v461 = vpop.permute.xlu0 %460
        %462 = vrot.lane.b32.xlu0 %v381, 104
        %v463 = vpop.permute.xlu0 %462
        %464 = vrot.lane.b32.xlu0 %v383, 104
        %v465 = vpop.permute.xlu0 %464
        %466 = vrot.lane.b32.xlu0 %v386, 104
        %v467 = vpop.permute.xlu0 %466
        %468 = vrot.lane.b32.xlu0 %v388, 104
        %v469 = vpop.permute.xlu0 %468
        %486 = vrot.lane.b32.xlu0 %v390, 120
        %v487 = vpop.permute.xlu0 %486
        %488 = vrot.lane.b32.xlu0 %v391, 120
        %v489 = vpop.permute.xlu0 %488
        %490 = vrot.lane.b32.xlu0 %v392, 120
        %v491 = vpop.permute.xlu0 %490
        %492 = vrot.lane.b32.xlu0 %v393, 120
        %v493 = vpop.permute.xlu0 %492
        %494 = vrot.lane.b32.xlu0 %v394, 120
        %v495 = vpop.permute.xlu0 %494
        %496 = vrot.lane.b32.xlu0 %v395, 120
        %v497 = vpop.permute.xlu0 %496
        %498 = vrot.lane.b32.xlu0 %v396, 120
        %v499 = vpop.permute.xlu0 %498
        %500 = vrot.lane.b32.xlu0 %v397, 120
        %v501 = vpop.permute.xlu0 %500
        %502 = vrot.lane.b32.xlu0 %v390, 112
        %v503 = vpop.permute.xlu0 %502
        %504 = vrot.lane.b32.xlu0 %v391, 112
        %v505 = vpop.permute.xlu0 %504
        %506 = vrot.lane.b32.xlu0 %v392, 112
        %v507 = vpop.permute.xlu0 %506
        %508 = vrot.lane.b32.xlu0 %v393, 112
        %v509 = vpop.permute.xlu0 %508
        %510 = vrot.lane.b32.xlu0 %v394, 112
        %v511 = vpop.permute.xlu0 %510
        %512 = vrot.lane.b32.xlu0 %v395, 112
        %v513 = vpop.permute.xlu0 %512
        %514 = vrot.lane.b32.xlu0 %v396, 112
        %v515 = vpop.permute.xlu0 %514
        %516 = vrot.lane.b32.xlu0 %v397, 112
        %v517 = vpop.permute.xlu0 %516
        %518 = vrot.lane.b32.xlu0 %v390, 104
        %v519 = vpop.permute.xlu0 %518
        %520 = vrot.lane.b32.xlu0 %v391, 104
        %v521 = vpop.permute.xlu0 %520
        %522 = vrot.lane.b32.xlu0 %v392, 104
        %v523 = vpop.permute.xlu0 %522
        %524 = vrot.lane.b32.xlu0 %v393, 104
        %v525 = vpop.permute.xlu0 %524
        %526 = vrot.lane.b32.xlu0 %v394, 104
        %v527 = vpop.permute.xlu0 %526
        %528 = vrot.lane.b32.xlu0 %v395, 104
        %v529 = vpop.permute.xlu0 %528
        %530 = vrot.lane.b32.xlu0 %v396, 104
        %v531 = vpop.permute.xlu0 %530
        %532 = vrot.lane.b32.xlu0 %v397, 104
        %v533 = vpop.permute.xlu0 %532
        %v534 = vmul.f32 %v371, %v371
        %v535 = vmul.f32 %v373, %v373
        %v536 = vmul.f32 %v376, %v376
        %v537 = vmul.f32 %v378, %v378
        %v538 = vmul.f32 %v381, %v381
        %v539 = vmul.f32 %v383, %v383
        %v540 = vmul.f32 %v386, %v386
        %v541 = vmul.f32 %v388, %v388
        %v542 = vmul.f32 %v407, %v407
        %v543 = vmul.f32 %v409, %v409
        %v544 = vmul.f32 %v411, %v411
        %v545 = vmul.f32 %v413, %v413
        %v546 = vmul.f32 %v415, %v415
        %v547 = vmul.f32 %v417, %v417
        %v548 = vmul.f32 %v419, %v419
        %v549 = vmul.f32 %v421, %v421
        %v550 = vmul.f32 %v431, %v431
        %v551 = vmul.f32 %v433, %v433
        %v552 = vmul.f32 %v435, %v435
        %v553 = vmul.f32 %v437, %v437
        %v554 = vmul.f32 %v439, %v439
        %v555 = vmul.f32 %v441, %v441
        %v556 = vmul.f32 %v443, %v443
        %v557 = vmul.f32 %v445, %v445
        %v558 = vmul.f32 %v455, %v455
        %v559 = vmul.f32 %v457, %v457
        %v560 = vmul.f32 %v459, %v459
        %v561 = vmul.f32 %v461, %v461
        %v562 = vmul.f32 %v463, %v463
        %v563 = vmul.f32 %v465, %v465
        %v564 = vmul.f32 %v467, %v467
        %v565 = vmul.f32 %v469, %v469
        %598 = vrot.lane.b32.xlu0 %v534, 96
        %v599 = vpop.permute.xlu0 %598
        %600 = vrot.lane.b32.xlu0 %v535, 96
        %v601 = vpop.permute.xlu0 %600
        %602 = vrot.lane.b32.xlu0 %v536, 96
        %v603 = vpop.permute.xlu0 %602
        %604 = vrot.lane.b32.xlu0 %v537, 96
        %v605 = vpop.permute.xlu0 %604
        %606 = vrot.lane.b32.xlu0 %v538, 96
        %v607 = vpop.permute.xlu0 %606
        %608 = vrot.lane.b32.xlu0 %v539, 96
        %v609 = vpop.permute.xlu0 %608
        %610 = vrot.lane.b32.xlu0 %v540, 96
        %v611 = vpop.permute.xlu0 %610
        %612 = vrot.lane.b32.xlu0 %v541, 96
        %v613 = vpop.permute.xlu0 %612
        %614 = vrot.lane.b32.xlu0 %v542, 96
        %v615 = vpop.permute.xlu0 %614
        %616 = vrot.lane.b32.xlu0 %v543, 96
        %v617 = vpop.permute.xlu0 %616
        %618 = vrot.lane.b32.xlu0 %v544, 96
        %v619 = vpop.permute.xlu0 %618
        %620 = vrot.lane.b32.xlu0 %v545, 96
        %v621 = vpop.permute.xlu0 %620
        %622 = vrot.lane.b32.xlu0 %v546, 96
        %v623 = vpop.permute.xlu0 %622
        %624 = vrot.lane.b32.xlu0 %v547, 96
        %v625 = vpop.permute.xlu0 %624
        %626 = vrot.lane.b32.xlu0 %v548, 96
        %v627 = vpop.permute.xlu0 %626
        %628 = vrot.lane.b32.xlu0 %v549, 96
        %v629 = vpop.permute.xlu0 %628
        %630 = vrot.lane.b32.xlu0 %v550, 96
        %v631 = vpop.permute.xlu0 %630
        %632 = vrot.lane.b32.xlu0 %v551, 96
        %v633 = vpop.permute.xlu0 %632
        %634 = vrot.lane.b32.xlu0 %v552, 96
        %v635 = vpop.permute.xlu0 %634
        %636 = vrot.lane.b32.xlu0 %v553, 96
        %v637 = vpop.permute.xlu0 %636
        %638 = vrot.lane.b32.xlu0 %v554, 96
        %v639 = vpop.permute.xlu0 %638
        %640 = vrot.lane.b32.xlu0 %v555, 96
        %v641 = vpop.permute.xlu0 %640
        %642 = vrot.lane.b32.xlu0 %v556, 96
        %v643 = vpop.permute.xlu0 %642
        %644 = vrot.lane.b32.xlu0 %v557, 96
        %v645 = vpop.permute.xlu0 %644
        %646 = vrot.lane.b32.xlu0 %v558, 96
        %v647 = vpop.permute.xlu0 %646
        %648 = vrot.lane.b32.xlu0 %v559, 96
        %v649 = vpop.permute.xlu0 %648
        %650 = vrot.lane.b32.xlu0 %v560, 96
        %v651 = vpop.permute.xlu0 %650
        %652 = vrot.lane.b32.xlu0 %v561, 96
        %v653 = vpop.permute.xlu0 %652
        %654 = vrot.lane.b32.xlu0 %v562, 96
        %v655 = vpop.permute.xlu0 %654
        %656 = vrot.lane.b32.xlu0 %v563, 96
        %v657 = vpop.permute.xlu0 %656
        %658 = vrot.lane.b32.xlu0 %v564, 96
        %v659 = vpop.permute.xlu0 %658
        %660 = vrot.lane.b32.xlu0 %v565, 96
        %v661 = vpop.permute.xlu0 %660
        %vm694 = vcmask 64512
        %v695 = vsel %vm694, %v599, 0.0
        %696 = vadd.xlane.f32.xlu0 %v695
        %v697 = vpop.xlane.xlu0 %696
        %v698 = vsel %vm694, %v601, 0.0
        %699 = vadd.xlane.f32.xlu0 %v698
        %v700 = vpop.xlane.xlu0 %699
        %v701 = vsel %vm694, %v603, 0.0
        %702 = vadd.xlane.f32.xlu0 %v701
        %v703 = vpop.xlane.xlu0 %702
        %v704 = vsel %vm694, %v605, 0.0
        %705 = vadd.xlane.f32.xlu0 %v704
        %v706 = vpop.xlane.xlu0 %705
        %v707 = vsel %vm694, %v607, 0.0
        %708 = vadd.xlane.f32.xlu0 %v707
        %v709 = vpop.xlane.xlu0 %708
        %v710 = vsel %vm694, %v609, 0.0
        %711 = vadd.xlane.f32.xlu0 %v710
        %v712 = vpop.xlane.xlu0 %711
        %v713 = vsel %vm694, %v611, 0.0
        %714 = vadd.xlane.f32.xlu0 %v713
        %v715 = vpop.xlane.xlu0 %714
        %v716 = vsel %vm694, %v613, 0.0
        %717 = vadd.xlane.f32.xlu0 %v716
        %v718 = vpop.xlane.xlu0 %717
        %v719 = vsel %vm694, %v615, 0.0
        %720 = vadd.xlane.f32.xlu0 %v719
        %v721 = vpop.xlane.xlu0 %720
        %v722 = vsel %vm694, %v617, 0.0
        %723 = vadd.xlane.f32.xlu0 %v722
        %v724 = vpop.xlane.xlu0 %723
        %v725 = vsel %vm694, %v619, 0.0
        %726 = vadd.xlane.f32.xlu0 %v725
        %v727 = vpop.xlane.xlu0 %726
        %v728 = vsel %vm694, %v621, 0.0
        %729 = vadd.xlane.f32.xlu0 %v728
        %v730 = vpop.xlane.xlu0 %729
        %v731 = vsel %vm694, %v623, 0.0
        %732 = vadd.xlane.f32.xlu0 %v731
        %v733 = vpop.xlane.xlu0 %732
        %v734 = vsel %vm694, %v625, 0.0
        %735 = vadd.xlane.f32.xlu0 %v734
        %v736 = vpop.xlane.xlu0 %735
        %v737 = vsel %vm694, %v627, 0.0
        %738 = vadd.xlane.f32.xlu0 %v737
        %v739 = vpop.xlane.xlu0 %738
        %v740 = vsel %vm694, %v629, 0.0
        %741 = vadd.xlane.f32.xlu0 %v740
        %v742 = vpop.xlane.xlu0 %741
        %v743 = vsel %vm694, %v631, 0.0
        %744 = vadd.xlane.f32.xlu0 %v743
        %v745 = vpop.xlane.xlu0 %744
        %v746 = vsel %vm694, %v633, 0.0
        %747 = vadd.xlane.f32.xlu0 %v746
        %v748 = vpop.xlane.xlu0 %747
        %v749 = vsel %vm694, %v635, 0.0
        %750 = vadd.xlane.f32.xlu0 %v749
        %v751 = vpop.xlane.xlu0 %750
        %v752 = vsel %vm694, %v637, 0.0
        %753 = vadd.xlane.f32.xlu0 %v752
        %v754 = vpop.xlane.xlu0 %753
        %v755 = vsel %vm694, %v639, 0.0
        %756 = vadd.xlane.f32.xlu0 %v755
        %v757 = vpop.xlane.xlu0 %756
        %v758 = vsel %vm694, %v641, 0.0
        %759 = vadd.xlane.f32.xlu0 %v758
        %v760 = vpop.xlane.xlu0 %759
        %v761 = vsel %vm694, %v643, 0.0
        %762 = vadd.xlane.f32.xlu0 %v761
        %v763 = vpop.xlane.xlu0 %762
        %v764 = vsel %vm694, %v645, 0.0
        %765 = vadd.xlane.f32.xlu0 %v764
        %v766 = vpop.xlane.xlu0 %765
        %v767 = vsel %vm694, %v647, 0.0
        %768 = vadd.xlane.f32.xlu0 %v767
        %v769 = vpop.xlane.xlu0 %768
        %v770 = vsel %vm694, %v649, 0.0
        %771 = vadd.xlane.f32.xlu0 %v770
        %v772 = vpop.xlane.xlu0 %771
        %v773 = vsel %vm694, %v651, 0.0
        %774 = vadd.xlane.f32.xlu0 %v773
        %v775 = vpop.xlane.xlu0 %774
        %v776 = vsel %vm694, %v653, 0.0
        %777 = vadd.xlane.f32.xlu0 %v776
        %v778 = vpop.xlane.xlu0 %777
        %v779 = vsel %vm694, %v655, 0.0
        %780 = vadd.xlane.f32.xlu0 %v779
        %v781 = vpop.xlane.xlu0 %780
        %v782 = vsel %vm694, %v657, 0.0
        %783 = vadd.xlane.f32.xlu0 %v782
        %v784 = vpop.xlane.xlu0 %783
        %v785 = vsel %vm694, %v659, 0.0
        %786 = vadd.xlane.f32.xlu0 %v785
        %v787 = vpop.xlane.xlu0 %786
        %v788 = vsel %vm694, %v661, 0.0
        %789 = vadd.xlane.f32.xlu0 %v788
        %v790 = vpop.xlane.xlu0 %789
        %v791 = vmax.f32 %v697, 1e-24
        %v792 = vmax.f32 %v700, 1e-24
        %v793 = vmax.f32 %v703, 1e-24
        %v794 = vmax.f32 %v706, 1e-24
        %v795 = vmax.f32 %v709, 1e-24
        %v796 = vmax.f32 %v712, 1e-24
        %v797 = vmax.f32 %v715, 1e-24
        %v798 = vmax.f32 %v718, 1e-24
        %v799 = vmax.f32 %v721, 1e-24
        %v800 = vmax.f32 %v724, 1e-24
        %v801 = vmax.f32 %v727, 1e-24
        %v802 = vmax.f32 %v730, 1e-24
        %v803 = vmax.f32 %v733, 1e-24
        %v804 = vmax.f32 %v736, 1e-24
        %v805 = vmax.f32 %v739, 1e-24
        %v806 = vmax.f32 %v742, 1e-24
        %v807 = vmax.f32 %v745, 1e-24
        %v808 = vmax.f32 %v748, 1e-24
        %v809 = vmax.f32 %v751, 1e-24
        %v810 = vmax.f32 %v754, 1e-24
        %v811 = vmax.f32 %v757, 1e-24
        %v812 = vmax.f32 %v760, 1e-24
        %v813 = vmax.f32 %v763, 1e-24
        %v814 = vmax.f32 %v766, 1e-24
        %v815 = vmax.f32 %v769, 1e-24
        %v816 = vmax.f32 %v772, 1e-24
        %v817 = vmax.f32 %v775, 1e-24
        %v818 = vmax.f32 %v778, 1e-24
        %v819 = vmax.f32 %v781, 1e-24
        %v820 = vmax.f32 %v784, 1e-24
        %v821 = vmax.f32 %v787, 1e-24
        %v822 = vmax.f32 %v790, 1e-24
        %v823 = vrsqrt.pop %v791
        %v824 = vmul.f32 %v823, %v791
        %v825 = vmul.f32 %v824, %v823
        %v826 = vmul.f32 0.5, %v825
        %v827 = vsub.f32 1.5, %v826
        %v828 = vmul.f32 %v823, %v827
        %vm829 = vweird.f32 %v791
        %vm830 = vweird.f32 %v823
        %vm831 = vmor %vm829, %vm830
        %v832 = vsel %vm831, %v823, %v828
        %v833 = vrsqrt.pop %v792
        %v834 = vmul.f32 %v833, %v792
        %v835 = vmul.f32 %v834, %v833
        %v836 = vmul.f32 0.5, %v835
        %v837 = vsub.f32 1.5, %v836
        %v838 = vmul.f32 %v833, %v837
        %vm839 = vweird.f32 %v792
        %vm840 = vweird.f32 %v833
        %vm841 = vmor %vm839, %vm840
        %v842 = vsel %vm841, %v833, %v838
        %v843 = vrsqrt.pop %v793
        %v844 = vmul.f32 %v843, %v793
        %v845 = vmul.f32 %v844, %v843
        %v846 = vmul.f32 0.5, %v845
        %v847 = vsub.f32 1.5, %v846
        %v848 = vmul.f32 %v843, %v847
        %vm849 = vweird.f32 %v793
        %vm850 = vweird.f32 %v843
        %vm851 = vmor %vm849, %vm850
        %v852 = vsel %vm851, %v843, %v848
        %v853 = vrsqrt.pop %v794
        %v854 = vmul.f32 %v853, %v794
        %v855 = vmul.f32 %v854, %v853
        %v856 = vmul.f32 0.5, %v855
        %v857 = vsub.f32 1.5, %v856
        %v858 = vmul.f32 %v853, %v857
        %vm859 = vweird.f32 %v794
        %vm860 = vweird.f32 %v853
        %vm861 = vmor %vm859, %vm860
        %v862 = vsel %vm861, %v853, %v858
        %v863 = vrsqrt.pop %v795
        %v864 = vmul.f32 %v863, %v795
        %v865 = vmul.f32 %v864, %v863
        %v866 = vmul.f32 0.5, %v865
        %v867 = vsub.f32 1.5, %v866
        %v868 = vmul.f32 %v863, %v867
        %vm869 = vweird.f32 %v795
        %vm870 = vweird.f32 %v863
        %vm871 = vmor %vm869, %vm870
        %v872 = vsel %vm871, %v863, %v868
        %v873 = vrsqrt.pop %v796
        %v874 = vmul.f32 %v873, %v796
        %v875 = vmul.f32 %v874, %v873
        %v876 = vmul.f32 0.5, %v875
        %v877 = vsub.f32 1.5, %v876
        %v878 = vmul.f32 %v873, %v877
        %vm879 = vweird.f32 %v796
        %vm880 = vweird.f32 %v873
        %vm881 = vmor %vm879, %vm880
        %v882 = vsel %vm881, %v873, %v878
        %v883 = vrsqrt.pop %v797
        %v884 = vmul.f32 %v883, %v797
        %v885 = vmul.f32 %v884, %v883
        %v886 = vmul.f32 0.5, %v885
        %v887 = vsub.f32 1.5, %v886
        %v888 = vmul.f32 %v883, %v887
        %vm889 = vweird.f32 %v797
        %vm890 = vweird.f32 %v883
        %vm891 = vmor %vm889, %vm890
        %v892 = vsel %vm891, %v883, %v888
        %v893 = vrsqrt.pop %v798
        %v894 = vmul.f32 %v893, %v798
        %v895 = vmul.f32 %v894, %v893
        %v896 = vmul.f32 0.5, %v895
        %v897 = vsub.f32 1.5, %v896
        %v898 = vmul.f32 %v893, %v897
        %vm899 = vweird.f32 %v798
        %vm900 = vweird.f32 %v893
        %vm901 = vmor %vm899, %vm900
        %v902 = vsel %vm901, %v893, %v898
        %v903 = vrsqrt.pop %v799
        %v904 = vmul.f32 %v903, %v799
        %v905 = vmul.f32 %v904, %v903
        %v906 = vmul.f32 0.5, %v905
        %v907 = vsub.f32 1.5, %v906
        %v908 = vmul.f32 %v903, %v907
        %vm909 = vweird.f32 %v799
        %vm910 = vweird.f32 %v903
        %vm911 = vmor %vm909, %vm910
        %v912 = vsel %vm911, %v903, %v908
        %v913 = vrsqrt.pop %v800
        %v914 = vmul.f32 %v913, %v800
        %v915 = vmul.f32 %v914, %v913
        %v916 = vmul.f32 0.5, %v915
        %v917 = vsub.f32 1.5, %v916
        %v918 = vmul.f32 %v913, %v917
        %vm919 = vweird.f32 %v800
        %vm920 = vweird.f32 %v913
        %vm921 = vmor %vm919, %vm920
        %v922 = vsel %vm921, %v913, %v918
        %v923 = vrsqrt.pop %v801
        %v924 = vmul.f32 %v923, %v801
        %v925 = vmul.f32 %v924, %v923
        %v926 = vmul.f32 0.5, %v925
        %v927 = vsub.f32 1.5, %v926
        %v928 = vmul.f32 %v923, %v927
        %vm929 = vweird.f32 %v801
        %vm930 = vweird.f32 %v923
        %vm931 = vmor %vm929, %vm930
        %v932 = vsel %vm931, %v923, %v928
        %v933 = vrsqrt.pop %v802
        %v934 = vmul.f32 %v933, %v802
        %v935 = vmul.f32 %v934, %v933
        %v936 = vmul.f32 0.5, %v935
        %v937 = vsub.f32 1.5, %v936
        %v938 = vmul.f32 %v933, %v937
        %vm939 = vweird.f32 %v802
        %vm940 = vweird.f32 %v933
        %vm941 = vmor %vm939, %vm940
        %v942 = vsel %vm941, %v933, %v938
        %v943 = vrsqrt.pop %v803
        %v944 = vmul.f32 %v943, %v803
        %v945 = vmul.f32 %v944, %v943
        %v946 = vmul.f32 0.5, %v945
        %v947 = vsub.f32 1.5, %v946
        %v948 = vmul.f32 %v943, %v947
        %vm949 = vweird.f32 %v803
        %vm950 = vweird.f32 %v943
        %vm951 = vmor %vm949, %vm950
        %v952 = vsel %vm951, %v943, %v948
        %v953 = vrsqrt.pop %v804
        %v954 = vmul.f32 %v953, %v804
        %v955 = vmul.f32 %v954, %v953
        %v956 = vmul.f32 0.5, %v955
        %v957 = vsub.f32 1.5, %v956
        %v958 = vmul.f32 %v953, %v957
        %vm959 = vweird.f32 %v804
        %vm960 = vweird.f32 %v953
        %vm961 = vmor %vm959, %vm960
        %v962 = vsel %vm961, %v953, %v958
        %v963 = vrsqrt.pop %v805
        %v964 = vmul.f32 %v963, %v805
        %v965 = vmul.f32 %v964, %v963
        %v966 = vmul.f32 0.5, %v965
        %v967 = vsub.f32 1.5, %v966
        %v968 = vmul.f32 %v963, %v967
        %vm969 = vweird.f32 %v805
        %vm970 = vweird.f32 %v963
        %vm971 = vmor %vm969, %vm970
        %v972 = vsel %vm971, %v963, %v968
        %v973 = vrsqrt.pop %v806
        %v974 = vmul.f32 %v973, %v806
        %v975 = vmul.f32 %v974, %v973
        %v976 = vmul.f32 0.5, %v975
        %v977 = vsub.f32 1.5, %v976
        %v978 = vmul.f32 %v973, %v977
        %vm979 = vweird.f32 %v806
        %vm980 = vweird.f32 %v973
        %vm981 = vmor %vm979, %vm980
        %v982 = vsel %vm981, %v973, %v978
        %v983 = vrsqrt.pop %v807
        %v984 = vmul.f32 %v983, %v807
        %v985 = vmul.f32 %v984, %v983
        %v986 = vmul.f32 0.5, %v985
        %v987 = vsub.f32 1.5, %v986
        %v988 = vmul.f32 %v983, %v987
        %vm989 = vweird.f32 %v807
        %vm990 = vweird.f32 %v983
        %vm991 = vmor %vm989, %vm990
        %v992 = vsel %vm991, %v983, %v988
        %v993 = vrsqrt.pop %v808
        %v994 = vmul.f32 %v993, %v808
        %v995 = vmul.f32 %v994, %v993
        %v996 = vmul.f32 0.5, %v995
        %v997 = vsub.f32 1.5, %v996
        %v998 = vmul.f32 %v993, %v997
        %vm999 = vweird.f32 %v808
        %vm1000 = vweird.f32 %v993
        %vm1001 = vmor %vm999, %vm1000
        %v1002 = vsel %vm1001, %v993, %v998
        %v1003 = vrsqrt.pop %v809
        %v1004 = vmul.f32 %v1003, %v809
        %v1005 = vmul.f32 %v1004, %v1003
        %v1006 = vmul.f32 0.5, %v1005
        %v1007 = vsub.f32 1.5, %v1006
        %v1008 = vmul.f32 %v1003, %v1007
        %vm1009 = vweird.f32 %v809
        %vm1010 = vweird.f32 %v1003
        %vm1011 = vmor %vm1009, %vm1010
        %v1012 = vsel %vm1011, %v1003, %v1008
        %v1013 = vrsqrt.pop %v810
        %v1014 = vmul.f32 %v1013, %v810
        %v1015 = vmul.f32 %v1014, %v1013
        %v1016 = vmul.f32 0.5, %v1015
        %v1017 = vsub.f32 1.5, %v1016
        %v1018 = vmul.f32 %v1013, %v1017
        %vm1019 = vweird.f32 %v810
        %vm1020 = vweird.f32 %v1013
        %vm1021 = vmor %vm1019, %vm1020
        %v1022 = vsel %vm1021, %v1013, %v1018
        %v1023 = vrsqrt.pop %v811
        %v1024 = vmul.f32 %v1023, %v811
        %v1025 = vmul.f32 %v1024, %v1023
        %v1026 = vmul.f32 0.5, %v1025
        %v1027 = vsub.f32 1.5, %v1026
        %v1028 = vmul.f32 %v1023, %v1027
        %vm1029 = vweird.f32 %v811
        %vm1030 = vweird.f32 %v1023
        %vm1031 = vmor %vm1029, %vm1030
        %v1032 = vsel %vm1031, %v1023, %v1028
        %v1033 = vrsqrt.pop %v812
        %v1034 = vmul.f32 %v1033, %v812
        %v1035 = vmul.f32 %v1034, %v1033
        %v1036 = vmul.f32 0.5, %v1035
        %v1037 = vsub.f32 1.5, %v1036
        %v1038 = vmul.f32 %v1033, %v1037
        %vm1039 = vweird.f32 %v812
        %vm1040 = vweird.f32 %v1033
        %vm1041 = vmor %vm1039, %vm1040
        %v1042 = vsel %vm1041, %v1033, %v1038
        %v1043 = vrsqrt.pop %v813
        %v1044 = vmul.f32 %v1043, %v813
        %v1045 = vmul.f32 %v1044, %v1043
        %v1046 = vmul.f32 0.5, %v1045
        %v1047 = vsub.f32 1.5, %v1046
        %v1048 = vmul.f32 %v1043, %v1047
        %vm1049 = vweird.f32 %v813
        %vm1050 = vweird.f32 %v1043
        %vm1051 = vmor %vm1049, %vm1050
        %v1052 = vsel %vm1051, %v1043, %v1048
        %v1053 = vrsqrt.pop %v814
        %v1054 = vmul.f32 %v1053, %v814
        %v1055 = vmul.f32 %v1054, %v1053
        %v1056 = vmul.f32 0.5, %v1055
        %v1057 = vsub.f32 1.5, %v1056
        %v1058 = vmul.f32 %v1053, %v1057
        %vm1059 = vweird.f32 %v814
        %vm1060 = vweird.f32 %v1053
        %vm1061 = vmor %vm1059, %vm1060
        %v1062 = vsel %vm1061, %v1053, %v1058
        %v1063 = vrsqrt.pop %v815
        %v1064 = vmul.f32 %v1063, %v815
        %v1065 = vmul.f32 %v1064, %v1063
        %v1066 = vmul.f32 0.5, %v1065
        %v1067 = vsub.f32 1.5, %v1066
        %v1068 = vmul.f32 %v1063, %v1067
        %vm1069 = vweird.f32 %v815
        %vm1070 = vweird.f32 %v1063
        %vm1071 = vmor %vm1069, %vm1070
        %v1072 = vsel %vm1071, %v1063, %v1068
        %v1073 = vrsqrt.pop %v816
        %v1074 = vmul.f32 %v1073, %v816
        %v1075 = vmul.f32 %v1074, %v1073
        %v1076 = vmul.f32 0.5, %v1075
        %v1077 = vsub.f32 1.5, %v1076
        %v1078 = vmul.f32 %v1073, %v1077
        %vm1079 = vweird.f32 %v816
        %vm1080 = vweird.f32 %v1073
        %vm1081 = vmor %vm1079, %vm1080
        %v1082 = vsel %vm1081, %v1073, %v1078
        %v1083 = vrsqrt.pop %v817
        %v1084 = vmul.f32 %v1083, %v817
        %v1085 = vmul.f32 %v1084, %v1083
        %v1086 = vmul.f32 0.5, %v1085
        %v1087 = vsub.f32 1.5, %v1086
        %v1088 = vmul.f32 %v1083, %v1087
        %vm1089 = vweird.f32 %v817
        %vm1090 = vweird.f32 %v1083
        %vm1091 = vmor %vm1089, %vm1090
        %v1092 = vsel %vm1091, %v1083, %v1088
        %v1093 = vrsqrt.pop %v818
        %v1094 = vmul.f32 %v1093, %v818
        %v1095 = vmul.f32 %v1094, %v1093
        %v1096 = vmul.f32 0.5, %v1095
        %v1097 = vsub.f32 1.5, %v1096
        %v1098 = vmul.f32 %v1093, %v1097
        %vm1099 = vweird.f32 %v818
        %vm1100 = vweird.f32 %v1093
        %vm1101 = vmor %vm1099, %vm1100
        %v1102 = vsel %vm1101, %v1093, %v1098
        %v1103 = vrsqrt.pop %v819
        %v1104 = vmul.f32 %v1103, %v819
        %v1105 = vmul.f32 %v1104, %v1103
        %v1106 = vmul.f32 0.5, %v1105
        %v1107 = vsub.f32 1.5, %v1106
        %v1108 = vmul.f32 %v1103, %v1107
        %vm1109 = vweird.f32 %v819
        %vm1110 = vweird.f32 %v1103
        %vm1111 = vmor %vm1109, %vm1110
        %v1112 = vsel %vm1111, %v1103, %v1108
        %v1113 = vrsqrt.pop %v820
        %v1114 = vmul.f32 %v1113, %v820
        %v1115 = vmul.f32 %v1114, %v1113
        %v1116 = vmul.f32 0.5, %v1115
        %v1117 = vsub.f32 1.5, %v1116
        %v1118 = vmul.f32 %v1113, %v1117
        %vm1119 = vweird.f32 %v820
        %vm1120 = vweird.f32 %v1113
        %vm1121 = vmor %vm1119, %vm1120
        %v1122 = vsel %vm1121, %v1113, %v1118
        %v1123 = vrsqrt.pop %v821
        %v1124 = vmul.f32 %v1123, %v821
        %v1125 = vmul.f32 %v1124, %v1123
        %v1126 = vmul.f32 0.5, %v1125
        %v1127 = vsub.f32 1.5, %v1126
        %v1128 = vmul.f32 %v1123, %v1127
        %vm1129 = vweird.f32 %v821
        %vm1130 = vweird.f32 %v1123
        %vm1131 = vmor %vm1129, %vm1130
        %v1132 = vsel %vm1131, %v1123, %v1128
        %v1133 = vrsqrt.pop %v822
        %v1134 = vmul.f32 %v1133, %v822
        %v1135 = vmul.f32 %v1134, %v1133
        %v1136 = vmul.f32 0.5, %v1135
        %v1137 = vsub.f32 1.5, %v1136
        %v1138 = vmul.f32 %v1133, %v1137
        %vm1139 = vweird.f32 %v822
        %vm1140 = vweird.f32 %v1133
        %vm1141 = vmor %vm1139, %vm1140
        %v1142 = vsel %vm1141, %v1133, %v1138
        %v1143 = vmul.f32 %v371, %v832
        %v1144 = vmul.f32 %v373, %v842
        %v1145 = vmul.f32 %v376, %v852
        %v1146 = vmul.f32 %v378, %v862
        %v1147 = vmul.f32 %v381, %v872
        %v1148 = vmul.f32 %v383, %v882
        %v1149 = vmul.f32 %v386, %v892
        %v1150 = vmul.f32 %v388, %v902
        %v1151 = vmul.f32 %v407, %v912
        %v1152 = vmul.f32 %v409, %v922
        %v1153 = vmul.f32 %v411, %v932
        %v1154 = vmul.f32 %v413, %v942
        %v1155 = vmul.f32 %v415, %v952
        %v1156 = vmul.f32 %v417, %v962
        %v1157 = vmul.f32 %v419, %v972
        %v1158 = vmul.f32 %v421, %v982
        %v1159 = vmul.f32 %v431, %v992
        %v1160 = vmul.f32 %v433, %v1002
        %v1161 = vmul.f32 %v435, %v1012
        %v1162 = vmul.f32 %v437, %v1022
        %v1163 = vmul.f32 %v439, %v1032
        %v1164 = vmul.f32 %v441, %v1042
        %v1165 = vmul.f32 %v443, %v1052
        %v1166 = vmul.f32 %v445, %v1062
        %v1167 = vmul.f32 %v455, %v1072
        %v1168 = vmul.f32 %v457, %v1082
        %v1169 = vmul.f32 %v459, %v1092
        %v1170 = vmul.f32 %v461, %v1102
        %v1171 = vmul.f32 %v463, %v1112
        %v1172 = vmul.f32 %v465, %v1122
        %v1173 = vmul.f32 %v467, %v1132
        %v1174 = vmul.f32 %v469, %v1142
        %v1175 = vpack.c.bf16 %v1143, %v1143
        %v1176 = vpack.c.bf16 %v1144, %v1144
        %v1177 = vpack.c.bf16 %v1145, %v1145
        %v1178 = vpack.c.bf16 %v1146, %v1146
        %v1179 = vpack.c.bf16 %v1147, %v1147
        %v1180 = vpack.c.bf16 %v1148, %v1148
        %v1181 = vpack.c.bf16 %v1149, %v1149
        %v1182 = vpack.c.bf16 %v1150, %v1150
        %v1183 = vpack.c.bf16 %v1151, %v1151
        %v1184 = vpack.c.bf16 %v1152, %v1152
        %v1185 = vpack.c.bf16 %v1153, %v1153
        %v1186 = vpack.c.bf16 %v1154, %v1154
        %v1187 = vpack.c.bf16 %v1155, %v1155
        %v1188 = vpack.c.bf16 %v1156, %v1156
        %v1189 = vpack.c.bf16 %v1157, %v1157
        %v1190 = vpack.c.bf16 %v1158, %v1158
        %v1191 = vpack.c.bf16 %v1159, %v1159
        %v1192 = vpack.c.bf16 %v1160, %v1160
        %v1193 = vpack.c.bf16 %v1161, %v1161
        %v1194 = vpack.c.bf16 %v1162, %v1162
        %v1195 = vpack.c.bf16 %v1163, %v1163
        %v1196 = vpack.c.bf16 %v1164, %v1164
        %v1197 = vpack.c.bf16 %v1165, %v1165
        %v1198 = vpack.c.bf16 %v1166, %v1166
        %v1199 = vpack.c.bf16 %v1167, %v1167
        %v1200 = vpack.c.bf16 %v1168, %v1168
        %v1201 = vpack.c.bf16 %v1169, %v1169
        %v1202 = vpack.c.bf16 %v1170, %v1170
        %v1203 = vpack.c.bf16 %v1171, %v1171
        %v1204 = vpack.c.bf16 %v1172, %v1172
        %v1205 = vpack.c.bf16 %v1173, %v1173
        %v1206 = vpack.c.bf16 %v1174, %v1174
        %v1207 = vsel %vm694, %v534, 0.0
        %1208 = vadd.xlane.f32.xlu0 %v1207
        %v1209 = vpop.xlane.xlu0 %1208
        %v1210 = vsel %vm694, %v535, 0.0
        %1211 = vadd.xlane.f32.xlu0 %v1210
        %v1212 = vpop.xlane.xlu0 %1211
        %v1213 = vsel %vm694, %v536, 0.0
        %1214 = vadd.xlane.f32.xlu0 %v1213
        %v1215 = vpop.xlane.xlu0 %1214
        %v1216 = vsel %vm694, %v537, 0.0
        %1217 = vadd.xlane.f32.xlu0 %v1216
        %v1218 = vpop.xlane.xlu0 %1217
        %v1219 = vsel %vm694, %v538, 0.0
        %1220 = vadd.xlane.f32.xlu0 %v1219
        %v1221 = vpop.xlane.xlu0 %1220
        %v1222 = vsel %vm694, %v539, 0.0
        %1223 = vadd.xlane.f32.xlu0 %v1222
        %v1224 = vpop.xlane.xlu0 %1223
        %v1225 = vsel %vm694, %v540, 0.0
        %1226 = vadd.xlane.f32.xlu0 %v1225
        %v1227 = vpop.xlane.xlu0 %1226
        %v1228 = vsel %vm694, %v541, 0.0
        %1229 = vadd.xlane.f32.xlu0 %v1228
        %v1230 = vpop.xlane.xlu0 %1229
        %v1231 = vsel %vm694, %v542, 0.0
        %1232 = vadd.xlane.f32.xlu0 %v1231
        %v1233 = vpop.xlane.xlu0 %1232
        %v1234 = vsel %vm694, %v543, 0.0
        %1235 = vadd.xlane.f32.xlu0 %v1234
        %v1236 = vpop.xlane.xlu0 %1235
        %v1237 = vsel %vm694, %v544, 0.0
        %1238 = vadd.xlane.f32.xlu0 %v1237
        %v1239 = vpop.xlane.xlu0 %1238
        %v1240 = vsel %vm694, %v545, 0.0
        %1241 = vadd.xlane.f32.xlu0 %v1240
        %v1242 = vpop.xlane.xlu0 %1241
        %v1243 = vsel %vm694, %v546, 0.0
        %1244 = vadd.xlane.f32.xlu0 %v1243
        %v1245 = vpop.xlane.xlu0 %1244
        %v1246 = vsel %vm694, %v547, 0.0
        %1247 = vadd.xlane.f32.xlu0 %v1246
        %v1248 = vpop.xlane.xlu0 %1247
        %v1249 = vsel %vm694, %v548, 0.0
        %1250 = vadd.xlane.f32.xlu0 %v1249
        %v1251 = vpop.xlane.xlu0 %1250
        %v1252 = vsel %vm694, %v549, 0.0
        %1253 = vadd.xlane.f32.xlu0 %v1252
        %v1254 = vpop.xlane.xlu0 %1253
        %v1255 = vsel %vm694, %v550, 0.0
        %1256 = vadd.xlane.f32.xlu0 %v1255
        %v1257 = vpop.xlane.xlu0 %1256
        %v1258 = vsel %vm694, %v551, 0.0
        %1259 = vadd.xlane.f32.xlu0 %v1258
        %v1260 = vpop.xlane.xlu0 %1259
        %v1261 = vsel %vm694, %v552, 0.0
        %1262 = vadd.xlane.f32.xlu0 %v1261
        %v1263 = vpop.xlane.xlu0 %1262
        %v1264 = vsel %vm694, %v553, 0.0
        %1265 = vadd.xlane.f32.xlu0 %v1264
        %v1266 = vpop.xlane.xlu0 %1265
        %v1267 = vsel %vm694, %v554, 0.0
        %1268 = vadd.xlane.f32.xlu0 %v1267
        %v1269 = vpop.xlane.xlu0 %1268
        %v1270 = vsel %vm694, %v555, 0.0
        %1271 = vadd.xlane.f32.xlu0 %v1270
        %v1272 = vpop.xlane.xlu0 %1271
        %v1273 = vsel %vm694, %v556, 0.0
        %1274 = vadd.xlane.f32.xlu0 %v1273
        %v1275 = vpop.xlane.xlu0 %1274
        %v1276 = vsel %vm694, %v557, 0.0
        %1277 = vadd.xlane.f32.xlu0 %v1276
        %v1278 = vpop.xlane.xlu0 %1277
        %v1279 = vsel %vm694, %v558, 0.0
        %1280 = vadd.xlane.f32.xlu0 %v1279
        %v1281 = vpop.xlane.xlu0 %1280
        %v1282 = vsel %vm694, %v559, 0.0
        %1283 = vadd.xlane.f32.xlu0 %v1282
        %v1284 = vpop.xlane.xlu0 %1283
        %v1285 = vsel %vm694, %v560, 0.0
        %1286 = vadd.xlane.f32.xlu0 %v1285
        %v1287 = vpop.xlane.xlu0 %1286
        %v1288 = vsel %vm694, %v561, 0.0
        %1289 = vadd.xlane.f32.xlu0 %v1288
        %v1290 = vpop.xlane.xlu0 %1289
        %v1291 = vsel %vm694, %v562, 0.0
        %1292 = vadd.xlane.f32.xlu0 %v1291
        %v1293 = vpop.xlane.xlu0 %1292
        %v1294 = vsel %vm694, %v563, 0.0
        %1295 = vadd.xlane.f32.xlu0 %v1294
        %v1296 = vpop.xlane.xlu0 %1295
        %v1297 = vsel %vm694, %v564, 0.0
        %1298 = vadd.xlane.f32.xlu0 %v1297
        %v1299 = vpop.xlane.xlu0 %1298
        %v1300 = vsel %vm694, %v565, 0.0
        %1301 = vadd.xlane.f32.xlu0 %v1300
        %v1302 = vpop.xlane.xlu0 %1301
        %v1303 = vmax.f32 %v1209, 1e-24
        %v1304 = vmax.f32 %v1212, 1e-24
        %v1305 = vmax.f32 %v1215, 1e-24
        %v1306 = vmax.f32 %v1218, 1e-24
        %v1307 = vmax.f32 %v1221, 1e-24
        %v1308 = vmax.f32 %v1224, 1e-24
        %v1309 = vmax.f32 %v1227, 1e-24
        %v1310 = vmax.f32 %v1230, 1e-24
        %v1311 = vmax.f32 %v1233, 1e-24
        %v1312 = vmax.f32 %v1236, 1e-24
        %v1313 = vmax.f32 %v1239, 1e-24
        %v1314 = vmax.f32 %v1242, 1e-24
        %v1315 = vmax.f32 %v1245, 1e-24
        %v1316 = vmax.f32 %v1248, 1e-24
        %v1317 = vmax.f32 %v1251, 1e-24
        %v1318 = vmax.f32 %v1254, 1e-24
        %v1319 = vmax.f32 %v1257, 1e-24
        %v1320 = vmax.f32 %v1260, 1e-24
        %v1321 = vmax.f32 %v1263, 1e-24
        %v1322 = vmax.f32 %v1266, 1e-24
        %v1323 = vmax.f32 %v1269, 1e-24
        %v1324 = vmax.f32 %v1272, 1e-24
        %v1325 = vmax.f32 %v1275, 1e-24
        %v1326 = vmax.f32 %v1278, 1e-24
        %v1327 = vmax.f32 %v1281, 1e-24
        %v1328 = vmax.f32 %v1284, 1e-24
        %v1329 = vmax.f32 %v1287, 1e-24
        %v1330 = vmax.f32 %v1290, 1e-24
        %v1331 = vmax.f32 %v1293, 1e-24
        %v1332 = vmax.f32 %v1296, 1e-24
        %v1333 = vmax.f32 %v1299, 1e-24
        %v1334 = vmax.f32 %v1302, 1e-24
        %v1335 = vrsqrt.pop %v1303
        %v1336 = vmul.f32 %v1335, %v1303
        %v1337 = vmul.f32 %v1336, %v1335
        %v1338 = vmul.f32 0.5, %v1337
        %v1339 = vsub.f32 1.5, %v1338
        %v1340 = vmul.f32 %v1335, %v1339
        %vm1341 = vweird.f32 %v1303
        %vm1342 = vweird.f32 %v1335
        %vm1343 = vmor %vm1341, %vm1342
        %v1344 = vsel %vm1343, %v1335, %v1340
        %v1345 = vrsqrt.pop %v1304
        %v1346 = vmul.f32 %v1345, %v1304
        %v1347 = vmul.f32 %v1346, %v1345
        %v1348 = vmul.f32 0.5, %v1347
        %v1349 = vsub.f32 1.5, %v1348
        %v1350 = vmul.f32 %v1345, %v1349
        %vm1351 = vweird.f32 %v1304
        %vm1352 = vweird.f32 %v1345
        %vm1353 = vmor %vm1351, %vm1352
        %v1354 = vsel %vm1353, %v1345, %v1350
        %v1355 = vrsqrt.pop %v1305
        %v1356 = vmul.f32 %v1355, %v1305
        %v1357 = vmul.f32 %v1356, %v1355
        %v1358 = vmul.f32 0.5, %v1357
        %v1359 = vsub.f32 1.5, %v1358
        %v1360 = vmul.f32 %v1355, %v1359
        %vm1361 = vweird.f32 %v1305
        %vm1362 = vweird.f32 %v1355
        %vm1363 = vmor %vm1361, %vm1362
        %v1364 = vsel %vm1363, %v1355, %v1360
        %v1365 = vrsqrt.pop %v1306
        %v1366 = vmul.f32 %v1365, %v1306
        %v1367 = vmul.f32 %v1366, %v1365
        %v1368 = vmul.f32 0.5, %v1367
        %v1369 = vsub.f32 1.5, %v1368
        %v1370 = vmul.f32 %v1365, %v1369
        %vm1371 = vweird.f32 %v1306
        %vm1372 = vweird.f32 %v1365
        %vm1373 = vmor %vm1371, %vm1372
        %v1374 = vsel %vm1373, %v1365, %v1370
        %v1375 = vrsqrt.pop %v1307
        %v1376 = vmul.f32 %v1375, %v1307
        %v1377 = vmul.f32 %v1376, %v1375
        %v1378 = vmul.f32 0.5, %v1377
        %v1379 = vsub.f32 1.5, %v1378
        %v1380 = vmul.f32 %v1375, %v1379
        %vm1381 = vweird.f32 %v1307
        %vm1382 = vweird.f32 %v1375
        %vm1383 = vmor %vm1381, %vm1382
        %v1384 = vsel %vm1383, %v1375, %v1380
        %v1385 = vrsqrt.pop %v1308
        %v1386 = vmul.f32 %v1385, %v1308
        %v1387 = vmul.f32 %v1386, %v1385
        %v1388 = vmul.f32 0.5, %v1387
        %v1389 = vsub.f32 1.5, %v1388
        %v1390 = vmul.f32 %v1385, %v1389
        %vm1391 = vweird.f32 %v1308
        %vm1392 = vweird.f32 %v1385
        %vm1393 = vmor %vm1391, %vm1392
        %v1394 = vsel %vm1393, %v1385, %v1390
        %v1395 = vrsqrt.pop %v1309
        %v1396 = vmul.f32 %v1395, %v1309
        %v1397 = vmul.f32 %v1396, %v1395
        %v1398 = vmul.f32 0.5, %v1397
        %v1399 = vsub.f32 1.5, %v1398
        %v1400 = vmul.f32 %v1395, %v1399
        %vm1401 = vweird.f32 %v1309
        %vm1402 = vweird.f32 %v1395
        %vm1403 = vmor %vm1401, %vm1402
        %v1404 = vsel %vm1403, %v1395, %v1400
        %v1405 = vrsqrt.pop %v1310
        %v1406 = vmul.f32 %v1405, %v1310
        %v1407 = vmul.f32 %v1406, %v1405
        %v1408 = vmul.f32 0.5, %v1407
        %v1409 = vsub.f32 1.5, %v1408
        %v1410 = vmul.f32 %v1405, %v1409
        %vm1411 = vweird.f32 %v1310
        %vm1412 = vweird.f32 %v1405
        %vm1413 = vmor %vm1411, %vm1412
        %v1414 = vsel %vm1413, %v1405, %v1410
        %v1415 = vrsqrt.pop %v1311
        %v1416 = vmul.f32 %v1415, %v1311
        %v1417 = vmul.f32 %v1416, %v1415
        %v1418 = vmul.f32 0.5, %v1417
        %v1419 = vsub.f32 1.5, %v1418
        %v1420 = vmul.f32 %v1415, %v1419
        %vm1421 = vweird.f32 %v1311
        %vm1422 = vweird.f32 %v1415
        %vm1423 = vmor %vm1421, %vm1422
        %v1424 = vsel %vm1423, %v1415, %v1420
        %v1425 = vrsqrt.pop %v1312
        %v1426 = vmul.f32 %v1425, %v1312
        %v1427 = vmul.f32 %v1426, %v1425
        %v1428 = vmul.f32 0.5, %v1427
        %v1429 = vsub.f32 1.5, %v1428
        %v1430 = vmul.f32 %v1425, %v1429
        %vm1431 = vweird.f32 %v1312
        %vm1432 = vweird.f32 %v1425
        %vm1433 = vmor %vm1431, %vm1432
        %v1434 = vsel %vm1433, %v1425, %v1430
        %v1435 = vrsqrt.pop %v1313
        %v1436 = vmul.f32 %v1435, %v1313
        %v1437 = vmul.f32 %v1436, %v1435
        %v1438 = vmul.f32 0.5, %v1437
        %v1439 = vsub.f32 1.5, %v1438
        %v1440 = vmul.f32 %v1435, %v1439
        %vm1441 = vweird.f32 %v1313
        %vm1442 = vweird.f32 %v1435
        %vm1443 = vmor %vm1441, %vm1442
        %v1444 = vsel %vm1443, %v1435, %v1440
        %v1445 = vrsqrt.pop %v1314
        %v1446 = vmul.f32 %v1445, %v1314
        %v1447 = vmul.f32 %v1446, %v1445
        %v1448 = vmul.f32 0.5, %v1447
        %v1449 = vsub.f32 1.5, %v1448
        %v1450 = vmul.f32 %v1445, %v1449
        %vm1451 = vweird.f32 %v1314
        %vm1452 = vweird.f32 %v1445
        %vm1453 = vmor %vm1451, %vm1452
        %v1454 = vsel %vm1453, %v1445, %v1450
        %v1455 = vrsqrt.pop %v1315
        %v1456 = vmul.f32 %v1455, %v1315
        %v1457 = vmul.f32 %v1456, %v1455
        %v1458 = vmul.f32 0.5, %v1457
        %v1459 = vsub.f32 1.5, %v1458
        %v1460 = vmul.f32 %v1455, %v1459
        %vm1461 = vweird.f32 %v1315
        %vm1462 = vweird.f32 %v1455
        %vm1463 = vmor %vm1461, %vm1462
        %v1464 = vsel %vm1463, %v1455, %v1460
        %v1465 = vrsqrt.pop %v1316
        %v1466 = vmul.f32 %v1465, %v1316
        %v1467 = vmul.f32 %v1466, %v1465
        %v1468 = vmul.f32 0.5, %v1467
        %v1469 = vsub.f32 1.5, %v1468
        %v1470 = vmul.f32 %v1465, %v1469
        %vm1471 = vweird.f32 %v1316
        %vm1472 = vweird.f32 %v1465
        %vm1473 = vmor %vm1471, %vm1472
        %v1474 = vsel %vm1473, %v1465, %v1470
        %v1475 = vrsqrt.pop %v1317
        %v1476 = vmul.f32 %v1475, %v1317
        %v1477 = vmul.f32 %v1476, %v1475
        %v1478 = vmul.f32 0.5, %v1477
        %v1479 = vsub.f32 1.5, %v1478
        %v1480 = vmul.f32 %v1475, %v1479
        %vm1481 = vweird.f32 %v1317
        %vm1482 = vweird.f32 %v1475
        %vm1483 = vmor %vm1481, %vm1482
        %v1484 = vsel %vm1483, %v1475, %v1480
        %v1485 = vrsqrt.pop %v1318
        %v1486 = vmul.f32 %v1485, %v1318
        %v1487 = vmul.f32 %v1486, %v1485
        %v1488 = vmul.f32 0.5, %v1487
        %v1489 = vsub.f32 1.5, %v1488
        %v1490 = vmul.f32 %v1485, %v1489
        %vm1491 = vweird.f32 %v1318
        %vm1492 = vweird.f32 %v1485
        %vm1493 = vmor %vm1491, %vm1492
        %v1494 = vsel %vm1493, %v1485, %v1490
        %v1495 = vrsqrt.pop %v1319
        %v1496 = vmul.f32 %v1495, %v1319
        %v1497 = vmul.f32 %v1496, %v1495
        %v1498 = vmul.f32 0.5, %v1497
        %v1499 = vsub.f32 1.5, %v1498
        %v1500 = vmul.f32 %v1495, %v1499
        %vm1501 = vweird.f32 %v1319
        %vm1502 = vweird.f32 %v1495
        %vm1503 = vmor %vm1501, %vm1502
        %v1504 = vsel %vm1503, %v1495, %v1500
        %v1505 = vrsqrt.pop %v1320
        %v1506 = vmul.f32 %v1505, %v1320
        %v1507 = vmul.f32 %v1506, %v1505
        %v1508 = vmul.f32 0.5, %v1507
        %v1509 = vsub.f32 1.5, %v1508
        %v1510 = vmul.f32 %v1505, %v1509
        %vm1511 = vweird.f32 %v1320
        %vm1512 = vweird.f32 %v1505
        %vm1513 = vmor %vm1511, %vm1512
        %v1514 = vsel %vm1513, %v1505, %v1510
        %v1515 = vrsqrt.pop %v1321
        %v1516 = vmul.f32 %v1515, %v1321
        %v1517 = vmul.f32 %v1516, %v1515
        %v1518 = vmul.f32 0.5, %v1517
        %v1519 = vsub.f32 1.5, %v1518
        %v1520 = vmul.f32 %v1515, %v1519
        %vm1521 = vweird.f32 %v1321
        %vm1522 = vweird.f32 %v1515
        %vm1523 = vmor %vm1521, %vm1522
        %v1524 = vsel %vm1523, %v1515, %v1520
        %v1525 = vrsqrt.pop %v1322
        %v1526 = vmul.f32 %v1525, %v1322
        %v1527 = vmul.f32 %v1526, %v1525
        %v1528 = vmul.f32 0.5, %v1527
        %v1529 = vsub.f32 1.5, %v1528
        %v1530 = vmul.f32 %v1525, %v1529
        %vm1531 = vweird.f32 %v1322
        %vm1532 = vweird.f32 %v1525
        %vm1533 = vmor %vm1531, %vm1532
        %v1534 = vsel %vm1533, %v1525, %v1530
        %v1535 = vrsqrt.pop %v1323
        %v1536 = vmul.f32 %v1535, %v1323
        %v1537 = vmul.f32 %v1536, %v1535
        %v1538 = vmul.f32 0.5, %v1537
        %v1539 = vsub.f32 1.5, %v1538
        %v1540 = vmul.f32 %v1535, %v1539
        %vm1541 = vweird.f32 %v1323
        %vm1542 = vweird.f32 %v1535
        %vm1543 = vmor %vm1541, %vm1542
        %v1544 = vsel %vm1543, %v1535, %v1540
        %v1545 = vrsqrt.pop %v1324
        %v1546 = vmul.f32 %v1545, %v1324
        %v1547 = vmul.f32 %v1546, %v1545
        %v1548 = vmul.f32 0.5, %v1547
        %v1549 = vsub.f32 1.5, %v1548
        %v1550 = vmul.f32 %v1545, %v1549
        %vm1551 = vweird.f32 %v1324
        %vm1552 = vweird.f32 %v1545
        %vm1553 = vmor %vm1551, %vm1552
        %v1554 = vsel %vm1553, %v1545, %v1550
        %v1555 = vrsqrt.pop %v1325
        %v1556 = vmul.f32 %v1555, %v1325
        %v1557 = vmul.f32 %v1556, %v1555
        %v1558 = vmul.f32 0.5, %v1557
        %v1559 = vsub.f32 1.5, %v1558
        %v1560 = vmul.f32 %v1555, %v1559
        %vm1561 = vweird.f32 %v1325
        %vm1562 = vweird.f32 %v1555
        %vm1563 = vmor %vm1561, %vm1562
        %v1564 = vsel %vm1563, %v1555, %v1560
        %v1565 = vrsqrt.pop %v1326
        %v1566 = vmul.f32 %v1565, %v1326
        %v1567 = vmul.f32 %v1566, %v1565
        %v1568 = vmul.f32 0.5, %v1567
        %v1569 = vsub.f32 1.5, %v1568
        %v1570 = vmul.f32 %v1565, %v1569
        %vm1571 = vweird.f32 %v1326
        %vm1572 = vweird.f32 %v1565
        %vm1573 = vmor %vm1571, %vm1572
        %v1574 = vsel %vm1573, %v1565, %v1570
        %v1575 = vrsqrt.pop %v1327
        %v1576 = vmul.f32 %v1575, %v1327
        %v1577 = vmul.f32 %v1576, %v1575
        %v1578 = vmul.f32 0.5, %v1577
        %v1579 = vsub.f32 1.5, %v1578
        %v1580 = vmul.f32 %v1575, %v1579
        %vm1581 = vweird.f32 %v1327
        %vm1582 = vweird.f32 %v1575
        %vm1583 = vmor %vm1581, %vm1582
        %v1584 = vsel %vm1583, %v1575, %v1580
        %v1585 = vrsqrt.pop %v1328
        %v1586 = vmul.f32 %v1585, %v1328
        %v1587 = vmul.f32 %v1586, %v1585
        %v1588 = vmul.f32 0.5, %v1587
        %v1589 = vsub.f32 1.5, %v1588
        %v1590 = vmul.f32 %v1585, %v1589
        %vm1591 = vweird.f32 %v1328
        %vm1592 = vweird.f32 %v1585
        %vm1593 = vmor %vm1591, %vm1592
        %v1594 = vsel %vm1593, %v1585, %v1590
        %v1595 = vrsqrt.pop %v1329
        %v1596 = vmul.f32 %v1595, %v1329
        %v1597 = vmul.f32 %v1596, %v1595
        %v1598 = vmul.f32 0.5, %v1597
        %v1599 = vsub.f32 1.5, %v1598
        %v1600 = vmul.f32 %v1595, %v1599
        %vm1601 = vweird.f32 %v1329
        %vm1602 = vweird.f32 %v1595
        %vm1603 = vmor %vm1601, %vm1602
        %v1604 = vsel %vm1603, %v1595, %v1600
        %v1605 = vrsqrt.pop %v1330
        %v1606 = vmul.f32 %v1605, %v1330
        %v1607 = vmul.f32 %v1606, %v1605
        %v1608 = vmul.f32 0.5, %v1607
        %v1609 = vsub.f32 1.5, %v1608
        %v1610 = vmul.f32 %v1605, %v1609
        %vm1611 = vweird.f32 %v1330
        %vm1612 = vweird.f32 %v1605
        %vm1613 = vmor %vm1611, %vm1612
        %v1614 = vsel %vm1613, %v1605, %v1610
        %v1615 = vrsqrt.pop %v1331
        %v1616 = vmul.f32 %v1615, %v1331
        %v1617 = vmul.f32 %v1616, %v1615
        %v1618 = vmul.f32 0.5, %v1617
        %v1619 = vsub.f32 1.5, %v1618
        %v1620 = vmul.f32 %v1615, %v1619
        %vm1621 = vweird.f32 %v1331
        %vm1622 = vweird.f32 %v1615
        %vm1623 = vmor %vm1621, %vm1622
        %v1624 = vsel %vm1623, %v1615, %v1620
        %v1625 = vrsqrt.pop %v1332
        %v1626 = vmul.f32 %v1625, %v1332
        %v1627 = vmul.f32 %v1626, %v1625
        %v1628 = vmul.f32 0.5, %v1627
        %v1629 = vsub.f32 1.5, %v1628
        %v1630 = vmul.f32 %v1625, %v1629
        %vm1631 = vweird.f32 %v1332
        %vm1632 = vweird.f32 %v1625
        %vm1633 = vmor %vm1631, %vm1632
        %v1634 = vsel %vm1633, %v1625, %v1630
        %v1635 = vrsqrt.pop %v1333
        %v1636 = vmul.f32 %v1635, %v1333
        %v1637 = vmul.f32 %v1636, %v1635
        %v1638 = vmul.f32 0.5, %v1637
        %v1639 = vsub.f32 1.5, %v1638
        %v1640 = vmul.f32 %v1635, %v1639
        %vm1641 = vweird.f32 %v1333
        %vm1642 = vweird.f32 %v1635
        %vm1643 = vmor %vm1641, %vm1642
        %v1644 = vsel %vm1643, %v1635, %v1640
        %v1645 = vrsqrt.pop %v1334
        %v1646 = vmul.f32 %v1645, %v1334
        %v1647 = vmul.f32 %v1646, %v1645
        %v1648 = vmul.f32 0.5, %v1647
        %v1649 = vsub.f32 1.5, %v1648
        %v1650 = vmul.f32 %v1645, %v1649
        %vm1651 = vweird.f32 %v1334
        %vm1652 = vweird.f32 %v1645
        %vm1653 = vmor %vm1651, %vm1652
        %v1654 = vsel %vm1653, %v1645, %v1650
        %v1655 = vmul.f32 %v371, %v1344
        %v1656 = vmul.f32 %v373, %v1354
        %v1657 = vmul.f32 %v376, %v1364
        %v1658 = vmul.f32 %v378, %v1374
        %v1659 = vmul.f32 %v381, %v1384
        %v1660 = vmul.f32 %v383, %v1394
        %v1661 = vmul.f32 %v386, %v1404
        %v1662 = vmul.f32 %v388, %v1414
        %v1663 = vmul.f32 %v407, %v1424
        %v1664 = vmul.f32 %v409, %v1434
        %v1665 = vmul.f32 %v411, %v1444
        %v1666 = vmul.f32 %v413, %v1454
        %v1667 = vmul.f32 %v415, %v1464
        %v1668 = vmul.f32 %v417, %v1474
        %v1669 = vmul.f32 %v419, %v1484
        %v1670 = vmul.f32 %v421, %v1494
        %v1671 = vmul.f32 %v431, %v1504
        %v1672 = vmul.f32 %v433, %v1514
        %v1673 = vmul.f32 %v435, %v1524
        %v1674 = vmul.f32 %v437, %v1534
        %v1675 = vmul.f32 %v439, %v1544
        %v1676 = vmul.f32 %v441, %v1554
        %v1677 = vmul.f32 %v443, %v1564
        %v1678 = vmul.f32 %v445, %v1574
        %v1679 = vmul.f32 %v455, %v1584
        %v1680 = vmul.f32 %v457, %v1594
        %v1681 = vmul.f32 %v459, %v1604
        %v1682 = vmul.f32 %v461, %v1614
        %v1683 = vmul.f32 %v463, %v1624
        %v1684 = vmul.f32 %v465, %v1634
        %v1685 = vmul.f32 %v467, %v1644
        %v1686 = vmul.f32 %v469, %v1654
        %v1687 = vld [vmem:[%s3] sm:$0xf]
        %v1689 = vrot.slane %v1687, 1
        %v1690 = vrot.slane %v1687, 2
        %v1691 = vrot.slane %v1687, 3
        %v1692 = vperm.slane %v1687, 0
        %v1693 = vperm.slane %v1689, 0
        %v1694 = vperm.slane %v1690, 0
        %v1695 = vperm.slane %v1691, 0
        %1696 = vset.pattern.permute.xlu0 0
        %1697 = vperm.xlu0 %1696, %v1692
        %v1698 = vpop.permute.xlu0 %1697
        %1700 = vset.pattern.permute.xlu0 0
        %1701 = vperm.xlu0 %1700, %v1693
        %v1702 = vpop.permute.xlu0 %1701
        %1704 = vset.pattern.permute.xlu0 0
        %1705 = vperm.xlu0 %1704, %v1694
        %v1706 = vpop.permute.xlu0 %1705
        %1708 = vset.pattern.permute.xlu0 0
        %1709 = vperm.xlu0 %1708, %v1695
        %v1710 = vpop.permute.xlu0 %1709
        %v1712 = vmul.f32 %v1655, %v1698
        %v1713 = vmul.f32 %v1656, %v1698
        %v1714 = vmul.f32 %v1657, %v1698
        %v1715 = vmul.f32 %v1658, %v1698
        %v1716 = vmul.f32 %v1659, %v1698
        %v1717 = vmul.f32 %v1660, %v1698
        %v1718 = vmul.f32 %v1661, %v1698
        %v1719 = vmul.f32 %v1662, %v1698
        %v1720 = vmul.f32 %v1663, %v1702
        %v1721 = vmul.f32 %v1664, %v1702
        %v1722 = vmul.f32 %v1665, %v1702
        %v1723 = vmul.f32 %v1666, %v1702
        %v1724 = vmul.f32 %v1667, %v1702
        %v1725 = vmul.f32 %v1668, %v1702
        %v1726 = vmul.f32 %v1669, %v1702
        %v1727 = vmul.f32 %v1670, %v1702
        %v1728 = vmul.f32 %v1671, %v1706
        %v1729 = vmul.f32 %v1672, %v1706
        %v1730 = vmul.f32 %v1673, %v1706
        %v1731 = vmul.f32 %v1674, %v1706
        %v1732 = vmul.f32 %v1675, %v1706
        %v1733 = vmul.f32 %v1676, %v1706
        %v1734 = vmul.f32 %v1677, %v1706
        %v1735 = vmul.f32 %v1678, %v1706
        %v1736 = vmul.f32 %v1679, %v1710
        %v1737 = vmul.f32 %v1680, %v1710
        %v1738 = vmul.f32 %v1681, %v1710
        %v1739 = vmul.f32 %v1682, %v1710
        %v1740 = vmul.f32 %v1683, %v1710
        %v1741 = vmul.f32 %v1684, %v1710
        %v1742 = vmul.f32 %v1685, %v1710
        %v1743 = vmul.f32 %v1686, %v1710
        %v1744 = vpack.c.bf16 %v1712, %v1712
        %v1745 = vpack.c.bf16 %v1713, %v1713
        %v1746 = vpack.c.bf16 %v1714, %v1714
        %v1747 = vpack.c.bf16 %v1715, %v1715
        %v1748 = vpack.c.bf16 %v1716, %v1716
        %v1749 = vpack.c.bf16 %v1717, %v1717
        %v1750 = vpack.c.bf16 %v1718, %v1718
        %v1751 = vpack.c.bf16 %v1719, %v1719
        %v1752 = vpack.c.bf16 %v1720, %v1720
        %v1753 = vpack.c.bf16 %v1721, %v1721
        %v1754 = vpack.c.bf16 %v1722, %v1722
        %v1755 = vpack.c.bf16 %v1723, %v1723
        %v1756 = vpack.c.bf16 %v1724, %v1724
        %v1757 = vpack.c.bf16 %v1725, %v1725
        %v1758 = vpack.c.bf16 %v1726, %v1726
        %v1759 = vpack.c.bf16 %v1727, %v1727
        %v1760 = vpack.c.bf16 %v1728, %v1728
        %v1761 = vpack.c.bf16 %v1729, %v1729
        %v1762 = vpack.c.bf16 %v1730, %v1730
        %v1763 = vpack.c.bf16 %v1731, %v1731
        %v1764 = vpack.c.bf16 %v1732, %v1732
        %v1765 = vpack.c.bf16 %v1733, %v1733
        %v1766 = vpack.c.bf16 %v1734, %v1734
        %v1767 = vpack.c.bf16 %v1735, %v1735
        %v1768 = vpack.c.bf16 %v1736, %v1736
        %v1769 = vpack.c.bf16 %v1737, %v1737
        %v1770 = vpack.c.bf16 %v1738, %v1738
        %v1771 = vpack.c.bf16 %v1739, %v1739
        %v1772 = vpack.c.bf16 %v1740, %v1740
        %v1773 = vpack.c.bf16 %v1741, %v1741
        %v1774 = vpack.c.bf16 %v1742, %v1742
        %v1775 = vpack.c.bf16 %v1743, %v1743
        %v1778 = vunpack.c.l.b16 %v1744
        %v1779 = vunpack.c.l.b16 %v1745
        %v1780 = vpack.c.b16 %v1779, %v1778
        %v1783 = vunpack.c.l.b16 %v1175
        %v1784 = vunpack.c.l.b16 %v1176
        %v1785 = vpack.c.b16 %v1784, %v1783
        %1786 = vrot.lane.b32.xlu0 %v1785, 96
        %v1787 = vpop.permute.xlu0 %1786
        %v1789 = vsel %vm694, %v1780, 0
        %v1792 = vsel %vm694, %v1787, 0
        %1794 = vmatpush.bf16.xpose.msra.mxu0 0
        %1795 = vmatpush.bf16.xpose.msra.mxu0 0
        %1796 = vmatpush.bf16.xpose.msra.mxu0 0
        %1797 = vmatpush.bf16.xpose.msra.mxu0 0
        %1798 = vmatpush.bf16.xpose.msra.mxu0 0
        %1799 = vmatpush.bf16.xpose.msra.mxu0 0
        %1800 = vmatpush.bf16.xpose.msra.mxu0 0
        %1801 = vmatpush.bf16.xpose.msra.mxu0 %v1792
        %1802 = vmatmul.bf16.gmra.mxu0 %v1789
        %v1803 = vpop.f32.mrf.mxu0
        %v1804 = vadd.f32 0.0, %v1803
        %v1805 = vpop.f32.mrf.mxu0
        %v1806 = vadd.f32 0.0, %v1805
        %1807 = vdwg.mxu0
        %v1810 = vunpack.c.l.b16 %v1746
        %v1811 = vunpack.c.l.b16 %v1747
        %v1812 = vpack.c.b16 %v1811, %v1810
        %v1815 = vunpack.c.l.b16 %v1177
        %v1816 = vunpack.c.l.b16 %v1178
        %v1817 = vpack.c.b16 %v1816, %v1815
        %1818 = vrot.lane.b32.xlu0 %v1817, 96
        %v1819 = vpop.permute.xlu0 %1818
        %v1821 = vsel %vm694, %v1812, 0
        %v1824 = vsel %vm694, %v1819, 0
        %1826 = vmatpush.bf16.xpose.msra.mxu0 0
        %1827 = vmatpush.bf16.xpose.msra.mxu0 0
        %1828 = vmatpush.bf16.xpose.msra.mxu0 0
        %1829 = vmatpush.bf16.xpose.msra.mxu0 0
        %1830 = vmatpush.bf16.xpose.msra.mxu0 0
        %1831 = vmatpush.bf16.xpose.msra.mxu0 0
        %1832 = vmatpush.bf16.xpose.msra.mxu0 0
        %1833 = vmatpush.bf16.xpose.msra.mxu0 %v1824
        %1834 = vmatmul.bf16.gmra.mxu0 %v1821
        %v1835 = vpop.f32.mrf.mxu0
        %v1836 = vadd.f32 0.0, %v1835
        %v1837 = vpop.f32.mrf.mxu0
        %v1838 = vadd.f32 0.0, %v1837
        %1839 = vdwg.mxu0
        %v1842 = vunpack.c.l.b16 %v1748
        %v1843 = vunpack.c.l.b16 %v1749
        %v1844 = vpack.c.b16 %v1843, %v1842
        %v1847 = vunpack.c.l.b16 %v1179
        %v1848 = vunpack.c.l.b16 %v1180
        %v1849 = vpack.c.b16 %v1848, %v1847
        %1850 = vrot.lane.b32.xlu0 %v1849, 96
        %v1851 = vpop.permute.xlu0 %1850
        %v1853 = vsel %vm694, %v1844, 0
        %v1856 = vsel %vm694, %v1851, 0
        %1858 = vmatpush.bf16.xpose.msra.mxu0 0
        %1859 = vmatpush.bf16.xpose.msra.mxu0 0
        %1860 = vmatpush.bf16.xpose.msra.mxu0 0
        %1861 = vmatpush.bf16.xpose.msra.mxu0 0
        %1862 = vmatpush.bf16.xpose.msra.mxu0 0
        %1863 = vmatpush.bf16.xpose.msra.mxu0 0
        %1864 = vmatpush.bf16.xpose.msra.mxu0 0
        %1865 = vmatpush.bf16.xpose.msra.mxu0 %v1856
        %1866 = vmatmul.bf16.gmra.mxu0 %v1853
        %v1867 = vpop.f32.mrf.mxu0
        %v1868 = vadd.f32 0.0, %v1867
        %v1869 = vpop.f32.mrf.mxu0
        %v1870 = vadd.f32 0.0, %v1869
        %1871 = vdwg.mxu0
        %v1874 = vunpack.c.l.b16 %v1750
        %v1875 = vunpack.c.l.b16 %v1751
        %v1876 = vpack.c.b16 %v1875, %v1874
        %v1879 = vunpack.c.l.b16 %v1181
        %v1880 = vunpack.c.l.b16 %v1182
        %v1881 = vpack.c.b16 %v1880, %v1879
        %1882 = vrot.lane.b32.xlu0 %v1881, 96
        %v1883 = vpop.permute.xlu0 %1882
        %v1885 = vsel %vm694, %v1876, 0
        %v1888 = vsel %vm694, %v1883, 0
        %1890 = vmatpush.bf16.xpose.msra.mxu0 0
        %1891 = vmatpush.bf16.xpose.msra.mxu0 0
        %1892 = vmatpush.bf16.xpose.msra.mxu0 0
        %1893 = vmatpush.bf16.xpose.msra.mxu0 0
        %1894 = vmatpush.bf16.xpose.msra.mxu0 0
        %1895 = vmatpush.bf16.xpose.msra.mxu0 0
        %1896 = vmatpush.bf16.xpose.msra.mxu0 0
        %1897 = vmatpush.bf16.xpose.msra.mxu0 %v1888
        %1898 = vmatmul.bf16.gmra.mxu0 %v1885
        %v1899 = vpop.f32.mrf.mxu0
        %v1900 = vadd.f32 0.0, %v1899
        %v1901 = vpop.f32.mrf.mxu0
        %v1902 = vadd.f32 0.0, %v1901
        %1903 = vdwg.mxu0
        %v1906 = vunpack.c.l.b16 %v1752
        %v1907 = vunpack.c.l.b16 %v1753
        %v1908 = vpack.c.b16 %v1907, %v1906
        %v1911 = vunpack.c.l.b16 %v1183
        %v1912 = vunpack.c.l.b16 %v1184
        %v1913 = vpack.c.b16 %v1912, %v1911
        %1914 = vrot.lane.b32.xlu0 %v1913, 96
        %v1915 = vpop.permute.xlu0 %1914
        %v1917 = vsel %vm694, %v1908, 0
        %v1920 = vsel %vm694, %v1915, 0
        %1922 = vmatpush.bf16.xpose.msra.mxu0 0
        %1923 = vmatpush.bf16.xpose.msra.mxu0 0
        %1924 = vmatpush.bf16.xpose.msra.mxu0 0
        %1925 = vmatpush.bf16.xpose.msra.mxu0 0
        %1926 = vmatpush.bf16.xpose.msra.mxu0 0
        %1927 = vmatpush.bf16.xpose.msra.mxu0 0
        %1928 = vmatpush.bf16.xpose.msra.mxu0 0
        %1929 = vmatpush.bf16.xpose.msra.mxu0 %v1920
        %1930 = vmatmul.bf16.gmra.mxu0 %v1917
        %v1931 = vpop.f32.mrf.mxu0
        %v1932 = vadd.f32 0.0, %v1931
        %v1933 = vpop.f32.mrf.mxu0
        %v1934 = vadd.f32 0.0, %v1933
        %1935 = vdwg.mxu0
        %v1938 = vunpack.c.l.b16 %v1754
        %v1939 = vunpack.c.l.b16 %v1755
        %v1940 = vpack.c.b16 %v1939, %v1938
        %v1943 = vunpack.c.l.b16 %v1185
        %v1944 = vunpack.c.l.b16 %v1186
        %v1945 = vpack.c.b16 %v1944, %v1943
        %1946 = vrot.lane.b32.xlu0 %v1945, 96
        %v1947 = vpop.permute.xlu0 %1946
        %v1949 = vsel %vm694, %v1940, 0
        %v1952 = vsel %vm694, %v1947, 0
        %1954 = vmatpush.bf16.xpose.msra.mxu0 0
        %1955 = vmatpush.bf16.xpose.msra.mxu0 0
        %1956 = vmatpush.bf16.xpose.msra.mxu0 0
        %1957 = vmatpush.bf16.xpose.msra.mxu0 0
        %1958 = vmatpush.bf16.xpose.msra.mxu0 0
        %1959 = vmatpush.bf16.xpose.msra.mxu0 0
        %1960 = vmatpush.bf16.xpose.msra.mxu0 0
        %1961 = vmatpush.bf16.xpose.msra.mxu0 %v1952
        %1962 = vmatmul.bf16.gmra.mxu0 %v1949
        %v1963 = vpop.f32.mrf.mxu0
        %v1964 = vadd.f32 0.0, %v1963
        %v1965 = vpop.f32.mrf.mxu0
        %v1966 = vadd.f32 0.0, %v1965
        %1967 = vdwg.mxu0
        %v1970 = vunpack.c.l.b16 %v1756
        %v1971 = vunpack.c.l.b16 %v1757
        %v1972 = vpack.c.b16 %v1971, %v1970
        %v1975 = vunpack.c.l.b16 %v1187
        %v1976 = vunpack.c.l.b16 %v1188
        %v1977 = vpack.c.b16 %v1976, %v1975
        %1978 = vrot.lane.b32.xlu0 %v1977, 96
        %v1979 = vpop.permute.xlu0 %1978
        %v1981 = vsel %vm694, %v1972, 0
        %v1984 = vsel %vm694, %v1979, 0
        %1986 = vmatpush.bf16.xpose.msra.mxu0 0
        %1987 = vmatpush.bf16.xpose.msra.mxu0 0
        %1988 = vmatpush.bf16.xpose.msra.mxu0 0
        %1989 = vmatpush.bf16.xpose.msra.mxu0 0
        %1990 = vmatpush.bf16.xpose.msra.mxu0 0
        %1991 = vmatpush.bf16.xpose.msra.mxu0 0
        %1992 = vmatpush.bf16.xpose.msra.mxu0 0
        %1993 = vmatpush.bf16.xpose.msra.mxu0 %v1984
        %1994 = vmatmul.bf16.gmra.mxu0 %v1981
        %v1995 = vpop.f32.mrf.mxu0
        %v1996 = vadd.f32 0.0, %v1995
        %v1997 = vpop.f32.mrf.mxu0
        %v1998 = vadd.f32 0.0, %v1997
        %1999 = vdwg.mxu0
        %v2002 = vunpack.c.l.b16 %v1758
        %v2003 = vunpack.c.l.b16 %v1759
        %v2004 = vpack.c.b16 %v2003, %v2002
        %v2007 = vunpack.c.l.b16 %v1189
        %v2008 = vunpack.c.l.b16 %v1190
        %v2009 = vpack.c.b16 %v2008, %v2007
        %2010 = vrot.lane.b32.xlu0 %v2009, 96
        %v2011 = vpop.permute.xlu0 %2010
        %v2013 = vsel %vm694, %v2004, 0
        %v2016 = vsel %vm694, %v2011, 0
        %2018 = vmatpush.bf16.xpose.msra.mxu0 0
        %2019 = vmatpush.bf16.xpose.msra.mxu0 0
        %2020 = vmatpush.bf16.xpose.msra.mxu0 0
        %2021 = vmatpush.bf16.xpose.msra.mxu0 0
        %2022 = vmatpush.bf16.xpose.msra.mxu0 0
        %2023 = vmatpush.bf16.xpose.msra.mxu0 0
        %2024 = vmatpush.bf16.xpose.msra.mxu0 0
        %2025 = vmatpush.bf16.xpose.msra.mxu0 %v2016
        %2026 = vmatmul.bf16.gmra.mxu0 %v2013
        %v2027 = vpop.f32.mrf.mxu0
        %v2028 = vadd.f32 0.0, %v2027
        %v2029 = vpop.f32.mrf.mxu0
        %v2030 = vadd.f32 0.0, %v2029
        %2031 = vdwg.mxu0
        %v2034 = vunpack.c.l.b16 %v1760
        %v2035 = vunpack.c.l.b16 %v1761
        %v2036 = vpack.c.b16 %v2035, %v2034
        %v2039 = vunpack.c.l.b16 %v1191
        %v2040 = vunpack.c.l.b16 %v1192
        %v2041 = vpack.c.b16 %v2040, %v2039
        %2042 = vrot.lane.b32.xlu0 %v2041, 96
        %v2043 = vpop.permute.xlu0 %2042
        %v2045 = vsel %vm694, %v2036, 0
        %v2048 = vsel %vm694, %v2043, 0
        %2050 = vmatpush.bf16.xpose.msra.mxu0 0
        %2051 = vmatpush.bf16.xpose.msra.mxu0 0
        %2052 = vmatpush.bf16.xpose.msra.mxu0 0
        %2053 = vmatpush.bf16.xpose.msra.mxu0 0
        %2054 = vmatpush.bf16.xpose.msra.mxu0 0
        %2055 = vmatpush.bf16.xpose.msra.mxu0 0
        %2056 = vmatpush.bf16.xpose.msra.mxu0 0
        %2057 = vmatpush.bf16.xpose.msra.mxu0 %v2048
        %2058 = vmatmul.bf16.gmra.mxu0 %v2045
        %v2059 = vpop.f32.mrf.mxu0
        %v2060 = vadd.f32 0.0, %v2059
        %v2061 = vpop.f32.mrf.mxu0
        %v2062 = vadd.f32 0.0, %v2061
        %2063 = vdwg.mxu0
        %v2066 = vunpack.c.l.b16 %v1762
        %v2067 = vunpack.c.l.b16 %v1763
        %v2068 = vpack.c.b16 %v2067, %v2066
        %v2071 = vunpack.c.l.b16 %v1193
        %v2072 = vunpack.c.l.b16 %v1194
        %v2073 = vpack.c.b16 %v2072, %v2071
        %2074 = vrot.lane.b32.xlu0 %v2073, 96
        %v2075 = vpop.permute.xlu0 %2074
        %v2077 = vsel %vm694, %v2068, 0
        %v2080 = vsel %vm694, %v2075, 0
        %2082 = vmatpush.bf16.xpose.msra.mxu0 0
        %2083 = vmatpush.bf16.xpose.msra.mxu0 0
        %2084 = vmatpush.bf16.xpose.msra.mxu0 0
        %2085 = vmatpush.bf16.xpose.msra.mxu0 0
        %2086 = vmatpush.bf16.xpose.msra.mxu0 0
        %2087 = vmatpush.bf16.xpose.msra.mxu0 0
        %2088 = vmatpush.bf16.xpose.msra.mxu0 0
        %2089 = vmatpush.bf16.xpose.msra.mxu0 %v2080
        %2090 = vmatmul.bf16.gmra.mxu0 %v2077
        %v2091 = vpop.f32.mrf.mxu0
        %v2092 = vadd.f32 0.0, %v2091
        %v2093 = vpop.f32.mrf.mxu0
        %v2094 = vadd.f32 0.0, %v2093
        %2095 = vdwg.mxu0
        %v2098 = vunpack.c.l.b16 %v1764
        %v2099 = vunpack.c.l.b16 %v1765
        %v2100 = vpack.c.b16 %v2099, %v2098
        %v2103 = vunpack.c.l.b16 %v1195
        %v2104 = vunpack.c.l.b16 %v1196
        %v2105 = vpack.c.b16 %v2104, %v2103
        %2106 = vrot.lane.b32.xlu0 %v2105, 96
        %v2107 = vpop.permute.xlu0 %2106
        %v2109 = vsel %vm694, %v2100, 0
        %v2112 = vsel %vm694, %v2107, 0
        %2114 = vmatpush.bf16.xpose.msra.mxu0 0
        %2115 = vmatpush.bf16.xpose.msra.mxu0 0
        %2116 = vmatpush.bf16.xpose.msra.mxu0 0
        %2117 = vmatpush.bf16.xpose.msra.mxu0 0
        %2118 = vmatpush.bf16.xpose.msra.mxu0 0
        %2119 = vmatpush.bf16.xpose.msra.mxu0 0
        %2120 = vmatpush.bf16.xpose.msra.mxu0 0
        %2121 = vmatpush.bf16.xpose.msra.mxu0 %v2112
        %2122 = vmatmul.bf16.gmra.mxu0 %v2109
        %v2123 = vpop.f32.mrf.mxu0
        %v2124 = vadd.f32 0.0, %v2123
        %v2125 = vpop.f32.mrf.mxu0
        %v2126 = vadd.f32 0.0, %v2125
        %2127 = vdwg.mxu0
        %v2130 = vunpack.c.l.b16 %v1766
        %v2131 = vunpack.c.l.b16 %v1767
        %v2132 = vpack.c.b16 %v2131, %v2130
        %v2135 = vunpack.c.l.b16 %v1197
        %v2136 = vunpack.c.l.b16 %v1198
        %v2137 = vpack.c.b16 %v2136, %v2135
        %2138 = vrot.lane.b32.xlu0 %v2137, 96
        %v2139 = vpop.permute.xlu0 %2138
        %v2141 = vsel %vm694, %v2132, 0
        %v2144 = vsel %vm694, %v2139, 0
        %2146 = vmatpush.bf16.xpose.msra.mxu0 0
        %2147 = vmatpush.bf16.xpose.msra.mxu0 0
        %2148 = vmatpush.bf16.xpose.msra.mxu0 0
        %2149 = vmatpush.bf16.xpose.msra.mxu0 0
        %2150 = vmatpush.bf16.xpose.msra.mxu0 0
        %2151 = vmatpush.bf16.xpose.msra.mxu0 0
        %2152 = vmatpush.bf16.xpose.msra.mxu0 0
        %2153 = vmatpush.bf16.xpose.msra.mxu0 %v2144
        %2154 = vmatmul.bf16.gmra.mxu0 %v2141
        %v2155 = vpop.f32.mrf.mxu0
        %v2156 = vadd.f32 0.0, %v2155
        %v2157 = vpop.f32.mrf.mxu0
        %v2158 = vadd.f32 0.0, %v2157
        %2159 = vdwg.mxu0
        %v2162 = vunpack.c.l.b16 %v1768
        %v2163 = vunpack.c.l.b16 %v1769
        %v2164 = vpack.c.b16 %v2163, %v2162
        %v2167 = vunpack.c.l.b16 %v1199
        %v2168 = vunpack.c.l.b16 %v1200
        %v2169 = vpack.c.b16 %v2168, %v2167
        %2170 = vrot.lane.b32.xlu0 %v2169, 96
        %v2171 = vpop.permute.xlu0 %2170
        %v2173 = vsel %vm694, %v2164, 0
        %v2176 = vsel %vm694, %v2171, 0
        %2178 = vmatpush.bf16.xpose.msra.mxu0 0
        %2179 = vmatpush.bf16.xpose.msra.mxu0 0
        %2180 = vmatpush.bf16.xpose.msra.mxu0 0
        %2181 = vmatpush.bf16.xpose.msra.mxu0 0
        %2182 = vmatpush.bf16.xpose.msra.mxu0 0
        %2183 = vmatpush.bf16.xpose.msra.mxu0 0
        %2184 = vmatpush.bf16.xpose.msra.mxu0 0
        %2185 = vmatpush.bf16.xpose.msra.mxu0 %v2176
        %2186 = vmatmul.bf16.gmra.mxu0 %v2173
        %v2187 = vpop.f32.mrf.mxu0
        %v2188 = vadd.f32 0.0, %v2187
        %v2189 = vpop.f32.mrf.mxu0
        %v2190 = vadd.f32 0.0, %v2189
        %2191 = vdwg.mxu0
        %v2194 = vunpack.c.l.b16 %v1770
        %v2195 = vunpack.c.l.b16 %v1771
        %v2196 = vpack.c.b16 %v2195, %v2194
        %v2199 = vunpack.c.l.b16 %v1201
        %v2200 = vunpack.c.l.b16 %v1202
        %v2201 = vpack.c.b16 %v2200, %v2199
        %2202 = vrot.lane.b32.xlu0 %v2201, 96
        %v2203 = vpop.permute.xlu0 %2202
        %v2205 = vsel %vm694, %v2196, 0
        %v2208 = vsel %vm694, %v2203, 0
        %2210 = vmatpush.bf16.xpose.msra.mxu0 0
        %2211 = vmatpush.bf16.xpose.msra.mxu0 0
        %2212 = vmatpush.bf16.xpose.msra.mxu0 0
        %2213 = vmatpush.bf16.xpose.msra.mxu0 0
        %2214 = vmatpush.bf16.xpose.msra.mxu0 0
        %2215 = vmatpush.bf16.xpose.msra.mxu0 0
        %2216 = vmatpush.bf16.xpose.msra.mxu0 0
        %2217 = vmatpush.bf16.xpose.msra.mxu0 %v2208
        %2218 = vmatmul.bf16.gmra.mxu0 %v2205
        %v2219 = vpop.f32.mrf.mxu0
        %v2220 = vadd.f32 0.0, %v2219
        %v2221 = vpop.f32.mrf.mxu0
        %v2222 = vadd.f32 0.0, %v2221
        %2223 = vdwg.mxu0
        %v2226 = vunpack.c.l.b16 %v1772
        %v2227 = vunpack.c.l.b16 %v1773
        %v2228 = vpack.c.b16 %v2227, %v2226
        %v2231 = vunpack.c.l.b16 %v1203
        %v2232 = vunpack.c.l.b16 %v1204
        %v2233 = vpack.c.b16 %v2232, %v2231
        %2234 = vrot.lane.b32.xlu0 %v2233, 96
        %v2235 = vpop.permute.xlu0 %2234
        %v2237 = vsel %vm694, %v2228, 0
        %v2240 = vsel %vm694, %v2235, 0
        %2242 = vmatpush.bf16.xpose.msra.mxu0 0
        %2243 = vmatpush.bf16.xpose.msra.mxu0 0
        %2244 = vmatpush.bf16.xpose.msra.mxu0 0
        %2245 = vmatpush.bf16.xpose.msra.mxu0 0
        %2246 = vmatpush.bf16.xpose.msra.mxu0 0
        %2247 = vmatpush.bf16.xpose.msra.mxu0 0
        %2248 = vmatpush.bf16.xpose.msra.mxu0 0
        %2249 = vmatpush.bf16.xpose.msra.mxu0 %v2240
        %2250 = vmatmul.bf16.gmra.mxu0 %v2237
        %v2251 = vpop.f32.mrf.mxu0
        %v2252 = vadd.f32 0.0, %v2251
        %v2253 = vpop.f32.mrf.mxu0
        %v2254 = vadd.f32 0.0, %v2253
        %2255 = vdwg.mxu0
        %v2258 = vunpack.c.l.b16 %v1774
        %v2259 = vunpack.c.l.b16 %v1775
        %v2260 = vpack.c.b16 %v2259, %v2258
        %v2263 = vunpack.c.l.b16 %v1205
        %v2264 = vunpack.c.l.b16 %v1206
        %v2265 = vpack.c.b16 %v2264, %v2263
        %2266 = vrot.lane.b32.xlu0 %v2265, 96
        %v2267 = vpop.permute.xlu0 %2266
        %v2269 = vsel %vm694, %v2260, 0
        %v2272 = vsel %vm694, %v2267, 0
        %2274 = vmatpush.bf16.xpose.msra.mxu0 0
        %2275 = vmatpush.bf16.xpose.msra.mxu0 0
        %2276 = vmatpush.bf16.xpose.msra.mxu0 0
        %2277 = vmatpush.bf16.xpose.msra.mxu0 0
        %2278 = vmatpush.bf16.xpose.msra.mxu0 0
        %2279 = vmatpush.bf16.xpose.msra.mxu0 0
        %2280 = vmatpush.bf16.xpose.msra.mxu0 0
        %2281 = vmatpush.bf16.xpose.msra.mxu0 %v2272
        %2282 = vmatmul.bf16.gmra.mxu0 %v2269
        %v2283 = vpop.f32.mrf.mxu0
        %v2284 = vadd.f32 0.0, %v2283
        %v2285 = vpop.f32.mrf.mxu0
        %v2286 = vadd.f32 0.0, %v2285
        %2287 = vdwg.mxu0
        %v2288 = vld [vmem:[%s4] sm:$0xff]
        %v2289 = vld [vmem:[%s4 + $0x8] sm:$0xff]
        %v2290 = vld [vmem:[%s4 + $0x10] sm:$0xff]
        %v2291 = vld [vmem:[%s4 + $0x18] sm:$0xff]
        %v2292 = vld [vmem:[%s4 + $0x20] sm:$0xff]
        %v2293 = vld [vmem:[%s4 + $0x28] sm:$0xff]
        %v2294 = vld [vmem:[%s4 + $0x30] sm:$0xff]
        %v2295 = vld [vmem:[%s4 + $0x38] sm:$0xff]
        %v2296 = vadd.f32 %v1804, %v2288
        %v2297 = vadd.f32 %v1806, %v2289
        %v2298 = vadd.f32 %v1836, %v2288
        %v2299 = vadd.f32 %v1838, %v2289
        %v2300 = vadd.f32 %v1868, %v2288
        %v2301 = vadd.f32 %v1870, %v2289
        %v2302 = vadd.f32 %v1900, %v2288
        %v2303 = vadd.f32 %v1902, %v2289
        %v2304 = vadd.f32 %v1932, %v2290
        %v2305 = vadd.f32 %v1934, %v2291
        %v2306 = vadd.f32 %v1964, %v2290
        %v2307 = vadd.f32 %v1966, %v2291
        %v2308 = vadd.f32 %v1996, %v2290
        %v2309 = vadd.f32 %v1998, %v2291
        %v2310 = vadd.f32 %v2028, %v2290
        %v2311 = vadd.f32 %v2030, %v2291
        %v2312 = vadd.f32 %v2060, %v2292
        %v2313 = vadd.f32 %v2062, %v2293
        %v2314 = vadd.f32 %v2092, %v2292
        %v2315 = vadd.f32 %v2094, %v2293
        %v2316 = vadd.f32 %v2124, %v2292
        %v2317 = vadd.f32 %v2126, %v2293
        %v2318 = vadd.f32 %v2156, %v2292
        %v2319 = vadd.f32 %v2158, %v2293
        %v2320 = vadd.f32 %v2188, %v2294
        %v2321 = vadd.f32 %v2190, %v2295
        %v2322 = vadd.f32 %v2220, %v2294
        %v2323 = vadd.f32 %v2222, %v2295
        %v2324 = vadd.f32 %v2252, %v2294
        %v2325 = vadd.f32 %v2254, %v2295
        %v2326 = vadd.f32 %v2284, %v2294
        %v2327 = vadd.f32 %v2286, %v2295
        %vm2328 = vcmask 130048
        %v2329 = vsel %vm2328, %v2296, -inf
        %2330 = vmax.xlane.f32.xlu0 %v2329
        %v2331 = vpop.xlane.xlu0 %2330
        %v2332 = vsel %vm2328, %v2297, -inf
        %2333 = vmax.xlane.f32.xlu0 %v2332
        %v2334 = vpop.xlane.xlu0 %2333
        %v2335 = vsel %vm2328, %v2298, -inf
        %2336 = vmax.xlane.f32.xlu0 %v2335
        %v2337 = vpop.xlane.xlu0 %2336
        %v2338 = vsel %vm2328, %v2299, -inf
        %2339 = vmax.xlane.f32.xlu0 %v2338
        %v2340 = vpop.xlane.xlu0 %2339
        %v2341 = vsel %vm2328, %v2300, -inf
        %2342 = vmax.xlane.f32.xlu0 %v2341
        %v2343 = vpop.xlane.xlu0 %2342
        %v2344 = vsel %vm2328, %v2301, -inf
        %2345 = vmax.xlane.f32.xlu0 %v2344
        %v2346 = vpop.xlane.xlu0 %2345
        %v2347 = vsel %vm2328, %v2302, -inf
        %2348 = vmax.xlane.f32.xlu0 %v2347
        %v2349 = vpop.xlane.xlu0 %2348
        %v2350 = vsel %vm2328, %v2303, -inf
        %2351 = vmax.xlane.f32.xlu0 %v2350
        %v2352 = vpop.xlane.xlu0 %2351
        %v2353 = vsel %vm2328, %v2304, -inf
        %2354 = vmax.xlane.f32.xlu0 %v2353
        %v2355 = vpop.xlane.xlu0 %2354
        %v2356 = vsel %vm2328, %v2305, -inf
        %2357 = vmax.xlane.f32.xlu0 %v2356
        %v2358 = vpop.xlane.xlu0 %2357
        %v2359 = vsel %vm2328, %v2306, -inf
        %2360 = vmax.xlane.f32.xlu0 %v2359
        %v2361 = vpop.xlane.xlu0 %2360
        %v2362 = vsel %vm2328, %v2307, -inf
        %2363 = vmax.xlane.f32.xlu0 %v2362
        %v2364 = vpop.xlane.xlu0 %2363
        %v2365 = vsel %vm2328, %v2308, -inf
        %2366 = vmax.xlane.f32.xlu0 %v2365
        %v2367 = vpop.xlane.xlu0 %2366
        %v2368 = vsel %vm2328, %v2309, -inf
        %2369 = vmax.xlane.f32.xlu0 %v2368
        %v2370 = vpop.xlane.xlu0 %2369
        %v2371 = vsel %vm2328, %v2310, -inf
        %2372 = vmax.xlane.f32.xlu0 %v2371
        %v2373 = vpop.xlane.xlu0 %2372
        %v2374 = vsel %vm2328, %v2311, -inf
        %2375 = vmax.xlane.f32.xlu0 %v2374
        %v2376 = vpop.xlane.xlu0 %2375
        %v2377 = vsel %vm2328, %v2312, -inf
        %2378 = vmax.xlane.f32.xlu0 %v2377
        %v2379 = vpop.xlane.xlu0 %2378
        %v2380 = vsel %vm2328, %v2313, -inf
        %2381 = vmax.xlane.f32.xlu0 %v2380
        %v2382 = vpop.xlane.xlu0 %2381
        %v2383 = vsel %vm2328, %v2314, -inf
        %2384 = vmax.xlane.f32.xlu0 %v2383
        %v2385 = vpop.xlane.xlu0 %2384
        %v2386 = vsel %vm2328, %v2315, -inf
        %2387 = vmax.xlane.f32.xlu0 %v2386
        %v2388 = vpop.xlane.xlu0 %2387
        %v2389 = vsel %vm2328, %v2316, -inf
        %2390 = vmax.xlane.f32.xlu0 %v2389
        %v2391 = vpop.xlane.xlu0 %2390
        %v2392 = vsel %vm2328, %v2317, -inf
        %2393 = vmax.xlane.f32.xlu0 %v2392
        %v2394 = vpop.xlane.xlu0 %2393
        %v2395 = vsel %vm2328, %v2318, -inf
        %2396 = vmax.xlane.f32.xlu0 %v2395
        %v2397 = vpop.xlane.xlu0 %2396
        %v2398 = vsel %vm2328, %v2319, -inf
        %2399 = vmax.xlane.f32.xlu0 %v2398
        %v2400 = vpop.xlane.xlu0 %2399
        %v2401 = vsel %vm2328, %v2320, -inf
        %2402 = vmax.xlane.f32.xlu0 %v2401
        %v2403 = vpop.xlane.xlu0 %2402
        %v2404 = vsel %vm2328, %v2321, -inf
        %2405 = vmax.xlane.f32.xlu0 %v2404
        %v2406 = vpop.xlane.xlu0 %2405
        %v2407 = vsel %vm2328, %v2322, -inf
        %2408 = vmax.xlane.f32.xlu0 %v2407
        %v2409 = vpop.xlane.xlu0 %2408
        %v2410 = vsel %vm2328, %v2323, -inf
        %2411 = vmax.xlane.f32.xlu0 %v2410
        %v2412 = vpop.xlane.xlu0 %2411
        %v2413 = vsel %vm2328, %v2324, -inf
        %2414 = vmax.xlane.f32.xlu0 %v2413
        %v2415 = vpop.xlane.xlu0 %2414
        %v2416 = vsel %vm2328, %v2325, -inf
        %2417 = vmax.xlane.f32.xlu0 %v2416
        %v2418 = vpop.xlane.xlu0 %2417
        %v2419 = vsel %vm2328, %v2326, -inf
        %2420 = vmax.xlane.f32.xlu0 %v2419
        %v2421 = vpop.xlane.xlu0 %2420
        %v2422 = vsel %vm2328, %v2327, -inf
        %2423 = vmax.xlane.f32.xlu0 %v2422
        %v2424 = vpop.xlane.xlu0 %2423
        %v2425 = vsub.f32 %v2296, %v2331
        %v2426 = vsub.f32 %v2297, %v2334
        %v2427 = vsub.f32 %v2298, %v2337
        %v2428 = vsub.f32 %v2299, %v2340
        %v2429 = vsub.f32 %v2300, %v2343
        %v2430 = vsub.f32 %v2301, %v2346
        %v2431 = vsub.f32 %v2302, %v2349
        %v2432 = vsub.f32 %v2303, %v2352
        %v2433 = vsub.f32 %v2304, %v2355
        %v2434 = vsub.f32 %v2305, %v2358
        %v2435 = vsub.f32 %v2306, %v2361
        %v2436 = vsub.f32 %v2307, %v2364
        %v2437 = vsub.f32 %v2308, %v2367
        %v2438 = vsub.f32 %v2309, %v2370
        %v2439 = vsub.f32 %v2310, %v2373
        %v2440 = vsub.f32 %v2311, %v2376
        %v2441 = vsub.f32 %v2312, %v2379
        %v2442 = vsub.f32 %v2313, %v2382
        %v2443 = vsub.f32 %v2314, %v2385
        %v2444 = vsub.f32 %v2315, %v2388
        %v2445 = vsub.f32 %v2316, %v2391
        %v2446 = vsub.f32 %v2317, %v2394
        %v2447 = vsub.f32 %v2318, %v2397
        %v2448 = vsub.f32 %v2319, %v2400
        %v2449 = vsub.f32 %v2320, %v2403
        %v2450 = vsub.f32 %v2321, %v2406
        %v2451 = vsub.f32 %v2322, %v2409
        %v2452 = vsub.f32 %v2323, %v2412
        %v2453 = vsub.f32 %v2324, %v2415
        %v2454 = vsub.f32 %v2325, %v2418
        %v2455 = vsub.f32 %v2326, %v2421
        %v2456 = vsub.f32 %v2327, %v2424
        %v2457 = vmul.f32 %v2425, 1.442695
        %v2458 = vpow.pop %v2457
        %v2459 = vmul.f32 %v2426, 1.442695
        %v2460 = vpow.pop %v2459
        %v2461 = vmul.f32 %v2427, 1.442695
        %v2462 = vpow.pop %v2461
        %v2463 = vmul.f32 %v2428, 1.442695
        %v2464 = vpow.pop %v2463
        %v2465 = vmul.f32 %v2429, 1.442695
        %v2466 = vpow.pop %v2465
        %v2467 = vmul.f32 %v2430, 1.442695
        %v2468 = vpow.pop %v2467
        %v2469 = vmul.f32 %v2431, 1.442695
        %v2470 = vpow.pop %v2469
        %v2471 = vmul.f32 %v2432, 1.442695
        %v2472 = vpow.pop %v2471
        %v2473 = vmul.f32 %v2433, 1.442695
        %v2474 = vpow.pop %v2473
        %v2475 = vmul.f32 %v2434, 1.442695
        %v2476 = vpow.pop %v2475
        %v2477 = vmul.f32 %v2435, 1.442695
        %v2478 = vpow.pop %v2477
        %v2479 = vmul.f32 %v2436, 1.442695
        %v2480 = vpow.pop %v2479
        %v2481 = vmul.f32 %v2437, 1.442695
        %v2482 = vpow.pop %v2481
        %v2483 = vmul.f32 %v2438, 1.442695
        %v2484 = vpow.pop %v2483
        %v2485 = vmul.f32 %v2439, 1.442695
        %v2486 = vpow.pop %v2485
        %v2487 = vmul.f32 %v2440, 1.442695
        %v2488 = vpow.pop %v2487
        %v2489 = vmul.f32 %v2441, 1.442695
        %v2490 = vpow.pop %v2489
        %v2491 = vmul.f32 %v2442, 1.442695
        %v2492 = vpow.pop %v2491
        %v2493 = vmul.f32 %v2443, 1.442695
        %v2494 = vpow.pop %v2493
        %v2495 = vmul.f32 %v2444, 1.442695
        %v2496 = vpow.pop %v2495
        %v2497 = vmul.f32 %v2445, 1.442695
        %v2498 = vpow.pop %v2497
        %v2499 = vmul.f32 %v2446, 1.442695
        %v2500 = vpow.pop %v2499
        %v2501 = vmul.f32 %v2447, 1.442695
        %v2502 = vpow.pop %v2501
        %v2503 = vmul.f32 %v2448, 1.442695
        %v2504 = vpow.pop %v2503
        %v2505 = vmul.f32 %v2449, 1.442695
        %v2506 = vpow.pop %v2505
        %v2507 = vmul.f32 %v2450, 1.442695
        %v2508 = vpow.pop %v2507
        %v2509 = vmul.f32 %v2451, 1.442695
        %v2510 = vpow.pop %v2509
        %v2511 = vmul.f32 %v2452, 1.442695
        %v2512 = vpow.pop %v2511
        %v2513 = vmul.f32 %v2453, 1.442695
        %v2514 = vpow.pop %v2513
        %v2515 = vmul.f32 %v2454, 1.442695
        %v2516 = vpow.pop %v2515
        %v2517 = vmul.f32 %v2455, 1.442695
        %v2518 = vpow.pop %v2517
        %v2519 = vmul.f32 %v2456, 1.442695
        %v2520 = vpow.pop %v2519
        %v2521 = vsel %vm2328, %v2458, 0.0
        %2522 = vadd.xlane.f32.xlu0 %v2521
        %v2523 = vpop.xlane.xlu0 %2522
        %v2524 = vsel %vm2328, %v2460, 0.0
        %2525 = vadd.xlane.f32.xlu0 %v2524
        %v2526 = vpop.xlane.xlu0 %2525
        %v2527 = vsel %vm2328, %v2462, 0.0
        %2528 = vadd.xlane.f32.xlu0 %v2527
        %v2529 = vpop.xlane.xlu0 %2528
        %v2530 = vsel %vm2328, %v2464, 0.0
        %2531 = vadd.xlane.f32.xlu0 %v2530
        %v2532 = vpop.xlane.xlu0 %2531
        %v2533 = vsel %vm2328, %v2466, 0.0
        %2534 = vadd.xlane.f32.xlu0 %v2533
        %v2535 = vpop.xlane.xlu0 %2534
        %v2536 = vsel %vm2328, %v2468, 0.0
        %2537 = vadd.xlane.f32.xlu0 %v2536
        %v2538 = vpop.xlane.xlu0 %2537
        %v2539 = vsel %vm2328, %v2470, 0.0
        %2540 = vadd.xlane.f32.xlu0 %v2539
        %v2541 = vpop.xlane.xlu0 %2540
        %v2542 = vsel %vm2328, %v2472, 0.0
        %2543 = vadd.xlane.f32.xlu0 %v2542
        %v2544 = vpop.xlane.xlu0 %2543
        %v2545 = vsel %vm2328, %v2474, 0.0
        %2546 = vadd.xlane.f32.xlu0 %v2545
        %v2547 = vpop.xlane.xlu0 %2546
        %v2548 = vsel %vm2328, %v2476, 0.0
        %2549 = vadd.xlane.f32.xlu0 %v2548
        %v2550 = vpop.xlane.xlu0 %2549
        %v2551 = vsel %vm2328, %v2478, 0.0
        %2552 = vadd.xlane.f32.xlu0 %v2551
        %v2553 = vpop.xlane.xlu0 %2552
        %v2554 = vsel %vm2328, %v2480, 0.0
        %2555 = vadd.xlane.f32.xlu0 %v2554
        %v2556 = vpop.xlane.xlu0 %2555
        %v2557 = vsel %vm2328, %v2482, 0.0
        %2558 = vadd.xlane.f32.xlu0 %v2557
        %v2559 = vpop.xlane.xlu0 %2558
        %v2560 = vsel %vm2328, %v2484, 0.0
        %2561 = vadd.xlane.f32.xlu0 %v2560
        %v2562 = vpop.xlane.xlu0 %2561
        %v2563 = vsel %vm2328, %v2486, 0.0
        %2564 = vadd.xlane.f32.xlu0 %v2563
        %v2565 = vpop.xlane.xlu0 %2564
        %v2566 = vsel %vm2328, %v2488, 0.0
        %2567 = vadd.xlane.f32.xlu0 %v2566
        %v2568 = vpop.xlane.xlu0 %2567
        %v2569 = vsel %vm2328, %v2490, 0.0
        %2570 = vadd.xlane.f32.xlu0 %v2569
        %v2571 = vpop.xlane.xlu0 %2570
        %v2572 = vsel %vm2328, %v2492, 0.0
        %2573 = vadd.xlane.f32.xlu0 %v2572
        %v2574 = vpop.xlane.xlu0 %2573
        %v2575 = vsel %vm2328, %v2494, 0.0
        %2576 = vadd.xlane.f32.xlu0 %v2575
        %v2577 = vpop.xlane.xlu0 %2576
        %v2578 = vsel %vm2328, %v2496, 0.0
        %2579 = vadd.xlane.f32.xlu0 %v2578
        %v2580 = vpop.xlane.xlu0 %2579
        %v2581 = vsel %vm2328, %v2498, 0.0
        %2582 = vadd.xlane.f32.xlu0 %v2581
        %v2583 = vpop.xlane.xlu0 %2582
        %v2584 = vsel %vm2328, %v2500, 0.0
        %2585 = vadd.xlane.f32.xlu0 %v2584
        %v2586 = vpop.xlane.xlu0 %2585
        %v2587 = vsel %vm2328, %v2502, 0.0
        %2588 = vadd.xlane.f32.xlu0 %v2587
        %v2589 = vpop.xlane.xlu0 %2588
        %v2590 = vsel %vm2328, %v2504, 0.0
        %2591 = vadd.xlane.f32.xlu0 %v2590
        %v2592 = vpop.xlane.xlu0 %2591
        %v2593 = vsel %vm2328, %v2506, 0.0
        %2594 = vadd.xlane.f32.xlu0 %v2593
        %v2595 = vpop.xlane.xlu0 %2594
        %v2596 = vsel %vm2328, %v2508, 0.0
        %2597 = vadd.xlane.f32.xlu0 %v2596
        %v2598 = vpop.xlane.xlu0 %2597
        %v2599 = vsel %vm2328, %v2510, 0.0
        %2600 = vadd.xlane.f32.xlu0 %v2599
        %v2601 = vpop.xlane.xlu0 %2600
        %v2602 = vsel %vm2328, %v2512, 0.0
        %2603 = vadd.xlane.f32.xlu0 %v2602
        %v2604 = vpop.xlane.xlu0 %2603
        %v2605 = vsel %vm2328, %v2514, 0.0
        %2606 = vadd.xlane.f32.xlu0 %v2605
        %v2607 = vpop.xlane.xlu0 %2606
        %v2608 = vsel %vm2328, %v2516, 0.0
        %2609 = vadd.xlane.f32.xlu0 %v2608
        %v2610 = vpop.xlane.xlu0 %2609
        %v2611 = vsel %vm2328, %v2518, 0.0
        %2612 = vadd.xlane.f32.xlu0 %v2611
        %v2613 = vpop.xlane.xlu0 %2612
        %v2614 = vsel %vm2328, %v2520, 0.0
        %2615 = vadd.xlane.f32.xlu0 %v2614
        %v2616 = vpop.xlane.xlu0 %2615
        %v2617 = vrcp.pop %v2523
        %v2618 = vrcp.pop %v2526
        %v2619 = vrcp.pop %v2529
        %v2620 = vrcp.pop %v2532
        %v2621 = vrcp.pop %v2535
        %v2622 = vrcp.pop %v2538
        %v2623 = vrcp.pop %v2541
        %v2624 = vrcp.pop %v2544
        %v2625 = vrcp.pop %v2547
        %v2626 = vrcp.pop %v2550
        %v2627 = vrcp.pop %v2553
        %v2628 = vrcp.pop %v2556
        %v2629 = vrcp.pop %v2559
        %v2630 = vrcp.pop %v2562
        %v2631 = vrcp.pop %v2565
        %v2632 = vrcp.pop %v2568
        %v2633 = vrcp.pop %v2571
        %v2634 = vrcp.pop %v2574
        %v2635 = vrcp.pop %v2577
        %v2636 = vrcp.pop %v2580
        %v2637 = vrcp.pop %v2583
        %v2638 = vrcp.pop %v2586
        %v2639 = vrcp.pop %v2589
        %v2640 = vrcp.pop %v2592
        %v2641 = vrcp.pop %v2595
        %v2642 = vrcp.pop %v2598
        %v2643 = vrcp.pop %v2601
        %v2644 = vrcp.pop %v2604
        %v2645 = vrcp.pop %v2607
        %v2646 = vrcp.pop %v2610
        %v2647 = vrcp.pop %v2613
        %v2648 = vrcp.pop %v2616
        %v2649 = vmul.f32 %v2458, %v2617
        %v2650 = vmul.f32 %v2460, %v2618
        %v2651 = vmul.f32 %v2462, %v2619
        %v2652 = vmul.f32 %v2464, %v2620
        %v2653 = vmul.f32 %v2466, %v2621
        %v2654 = vmul.f32 %v2468, %v2622
        %v2655 = vmul.f32 %v2470, %v2623
        %v2656 = vmul.f32 %v2472, %v2624
        %v2657 = vmul.f32 %v2474, %v2625
        %v2658 = vmul.f32 %v2476, %v2626
        %v2659 = vmul.f32 %v2478, %v2627
        %v2660 = vmul.f32 %v2480, %v2628
        %v2661 = vmul.f32 %v2482, %v2629
        %v2662 = vmul.f32 %v2484, %v2630
        %v2663 = vmul.f32 %v2486, %v2631
        %v2664 = vmul.f32 %v2488, %v2632
        %v2665 = vmul.f32 %v2490, %v2633
        %v2666 = vmul.f32 %v2492, %v2634
        %v2667 = vmul.f32 %v2494, %v2635
        %v2668 = vmul.f32 %v2496, %v2636
        %v2669 = vmul.f32 %v2498, %v2637
        %v2670 = vmul.f32 %v2500, %v2638
        %v2671 = vmul.f32 %v2502, %v2639
        %v2672 = vmul.f32 %v2504, %v2640
        %v2673 = vmul.f32 %v2506, %v2641
        %v2674 = vmul.f32 %v2508, %v2642
        %v2675 = vmul.f32 %v2510, %v2643
        %v2676 = vmul.f32 %v2512, %v2644
        %v2677 = vmul.f32 %v2514, %v2645
        %v2678 = vmul.f32 %v2516, %v2646
        %v2679 = vmul.f32 %v2518, %v2647
        %v2680 = vmul.f32 %v2520, %v2648
        %v2681 = vpack.c.bf16 %v2649, %v2649
        %v2682 = vpack.c.bf16 %v2650, %v2650
        %v2683 = vpack.c.bf16 %v2651, %v2651
        %v2684 = vpack.c.bf16 %v2652, %v2652
        %v2685 = vpack.c.bf16 %v2653, %v2653
        %v2686 = vpack.c.bf16 %v2654, %v2654
        %v2687 = vpack.c.bf16 %v2655, %v2655
        %v2688 = vpack.c.bf16 %v2656, %v2656
        %v2689 = vpack.c.bf16 %v2657, %v2657
        %v2690 = vpack.c.bf16 %v2658, %v2658
        %v2691 = vpack.c.bf16 %v2659, %v2659
        %v2692 = vpack.c.bf16 %v2660, %v2660
        %v2693 = vpack.c.bf16 %v2661, %v2661
        %v2694 = vpack.c.bf16 %v2662, %v2662
        %v2695 = vpack.c.bf16 %v2663, %v2663
        %v2696 = vpack.c.bf16 %v2664, %v2664
        %v2697 = vpack.c.bf16 %v2665, %v2665
        %v2698 = vpack.c.bf16 %v2666, %v2666
        %v2699 = vpack.c.bf16 %v2667, %v2667
        %v2700 = vpack.c.bf16 %v2668, %v2668
        %v2701 = vpack.c.bf16 %v2669, %v2669
        %v2702 = vpack.c.bf16 %v2670, %v2670
        %v2703 = vpack.c.bf16 %v2671, %v2671
        %v2704 = vpack.c.bf16 %v2672, %v2672
        %v2705 = vpack.c.bf16 %v2673, %v2673
        %v2706 = vpack.c.bf16 %v2674, %v2674
        %v2707 = vpack.c.bf16 %v2675, %v2675
        %v2708 = vpack.c.bf16 %v2676, %v2676
        %v2709 = vpack.c.bf16 %v2677, %v2677
        %v2710 = vpack.c.bf16 %v2678, %v2678
        %v2711 = vpack.c.bf16 %v2679, %v2679
        %v2712 = vpack.c.bf16 %v2680, %v2680
        %v2715 = vunpack.c.l.b16 %v2681
        %v2716 = vunpack.c.l.b16 %v2682
        %v2717 = vpack.c.b16 %v2716, %v2715
        %v2718 = vunpack.c.l.b16 %v390
        %v2719 = vunpack.c.l.b16 %v391
        %v2720 = vpack.c.b16 %v2719, %v2718
        %2721 = vrot.lane.b32.xlu0 %v2720, 64
        %v2722 = vpop.permute.xlu0 %2721
        %v2725 = vsel %vm2328, %v2717, 0
        %2727 = vmatpush.bf16.msra.mxu0 0
        %2728 = vmatpush.bf16.msra.mxu0 0
        %2729 = vmatpush.bf16.msra.mxu0 0
        %2730 = vmatpush.bf16.msra.mxu0 0
        %2731 = vmatpush.bf16.msra.mxu0 0
        %2732 = vmatpush.bf16.msra.mxu0 0
        %2733 = vmatpush.bf16.msra.mxu0 0
        %2734 = vmatpush.bf16.msra.mxu0 %v2722
        %2735 = vmatmul.bf16.gmra.mxu0 %v2725
        %v2736 = vpop.f32.mrf.mxu0
        %v2737 = vadd.f32 0.0, %v2736
        %v2738 = vpop.f32.mrf.mxu0
        %v2739 = vadd.f32 0.0, %v2738
        %2740 = vdwg.mxu0
        %v2743 = vunpack.c.l.b16 %v2683
        %v2744 = vunpack.c.l.b16 %v2684
        %v2745 = vpack.c.b16 %v2744, %v2743
        %v2746 = vunpack.c.l.b16 %v392
        %v2747 = vunpack.c.l.b16 %v393
        %v2748 = vpack.c.b16 %v2747, %v2746
        %2749 = vrot.lane.b32.xlu0 %v2748, 64
        %v2750 = vpop.permute.xlu0 %2749
        %v2753 = vsel %vm2328, %v2745, 0
        %2755 = vmatpush.bf16.msra.mxu0 0
        %2756 = vmatpush.bf16.msra.mxu0 0
        %2757 = vmatpush.bf16.msra.mxu0 0
        %2758 = vmatpush.bf16.msra.mxu0 0
        %2759 = vmatpush.bf16.msra.mxu0 0
        %2760 = vmatpush.bf16.msra.mxu0 0
        %2761 = vmatpush.bf16.msra.mxu0 0
        %2762 = vmatpush.bf16.msra.mxu0 %v2750
        %2763 = vmatmul.bf16.gmra.mxu0 %v2753
        %v2764 = vpop.f32.mrf.mxu0
        %v2765 = vadd.f32 0.0, %v2764
        %v2766 = vpop.f32.mrf.mxu0
        %v2767 = vadd.f32 0.0, %v2766
        %2768 = vdwg.mxu0
        %v2771 = vunpack.c.l.b16 %v2685
        %v2772 = vunpack.c.l.b16 %v2686
        %v2773 = vpack.c.b16 %v2772, %v2771
        %v2774 = vunpack.c.l.b16 %v394
        %v2775 = vunpack.c.l.b16 %v395
        %v2776 = vpack.c.b16 %v2775, %v2774
        %2777 = vrot.lane.b32.xlu0 %v2776, 64
        %v2778 = vpop.permute.xlu0 %2777
        %v2781 = vsel %vm2328, %v2773, 0
        %2783 = vmatpush.bf16.msra.mxu0 0
        %2784 = vmatpush.bf16.msra.mxu0 0
        %2785 = vmatpush.bf16.msra.mxu0 0
        %2786 = vmatpush.bf16.msra.mxu0 0
        %2787 = vmatpush.bf16.msra.mxu0 0
        %2788 = vmatpush.bf16.msra.mxu0 0
        %2789 = vmatpush.bf16.msra.mxu0 0
        %2790 = vmatpush.bf16.msra.mxu0 %v2778
        %2791 = vmatmul.bf16.gmra.mxu0 %v2781
        %v2792 = vpop.f32.mrf.mxu0
        %v2793 = vadd.f32 0.0, %v2792
        %v2794 = vpop.f32.mrf.mxu0
        %v2795 = vadd.f32 0.0, %v2794
        %2796 = vdwg.mxu0
        %v2799 = vunpack.c.l.b16 %v2687
        %v2800 = vunpack.c.l.b16 %v2688
        %v2801 = vpack.c.b16 %v2800, %v2799
        %v2802 = vunpack.c.l.b16 %v396
        %v2803 = vunpack.c.l.b16 %v397
        %v2804 = vpack.c.b16 %v2803, %v2802
        %2805 = vrot.lane.b32.xlu0 %v2804, 64
        %v2806 = vpop.permute.xlu0 %2805
        %v2809 = vsel %vm2328, %v2801, 0
        %2811 = vmatpush.bf16.msra.mxu0 0
        %2812 = vmatpush.bf16.msra.mxu0 0
        %2813 = vmatpush.bf16.msra.mxu0 0
        %2814 = vmatpush.bf16.msra.mxu0 0
        %2815 = vmatpush.bf16.msra.mxu0 0
        %2816 = vmatpush.bf16.msra.mxu0 0
        %2817 = vmatpush.bf16.msra.mxu0 0
        %2818 = vmatpush.bf16.msra.mxu0 %v2806
        %2819 = vmatmul.bf16.gmra.mxu0 %v2809
        %v2820 = vpop.f32.mrf.mxu0
        %v2821 = vadd.f32 0.0, %v2820
        %v2822 = vpop.f32.mrf.mxu0
        %v2823 = vadd.f32 0.0, %v2822
        %2824 = vdwg.mxu0
        %v2827 = vunpack.c.l.b16 %v2689
        %v2828 = vunpack.c.l.b16 %v2690
        %v2829 = vpack.c.b16 %v2828, %v2827
        %v2830 = vunpack.c.l.b16 %v487
        %v2831 = vunpack.c.l.b16 %v489
        %v2832 = vpack.c.b16 %v2831, %v2830
        %2833 = vrot.lane.b32.xlu0 %v2832, 64
        %v2834 = vpop.permute.xlu0 %2833
        %v2837 = vsel %vm2328, %v2829, 0
        %2839 = vmatpush.bf16.msra.mxu0 0
        %2840 = vmatpush.bf16.msra.mxu0 0
        %2841 = vmatpush.bf16.msra.mxu0 0
        %2842 = vmatpush.bf16.msra.mxu0 0
        %2843 = vmatpush.bf16.msra.mxu0 0
        %2844 = vmatpush.bf16.msra.mxu0 0
        %2845 = vmatpush.bf16.msra.mxu0 0
        %2846 = vmatpush.bf16.msra.mxu0 %v2834
        %2847 = vmatmul.bf16.gmra.mxu0 %v2837
        %v2848 = vpop.f32.mrf.mxu0
        %v2849 = vadd.f32 0.0, %v2848
        %v2850 = vpop.f32.mrf.mxu0
        %v2851 = vadd.f32 0.0, %v2850
        %2852 = vdwg.mxu0
        %v2855 = vunpack.c.l.b16 %v2691
        %v2856 = vunpack.c.l.b16 %v2692
        %v2857 = vpack.c.b16 %v2856, %v2855
        %v2858 = vunpack.c.l.b16 %v491
        %v2859 = vunpack.c.l.b16 %v493
        %v2860 = vpack.c.b16 %v2859, %v2858
        %2861 = vrot.lane.b32.xlu0 %v2860, 64
        %v2862 = vpop.permute.xlu0 %2861
        %v2865 = vsel %vm2328, %v2857, 0
        %2867 = vmatpush.bf16.msra.mxu0 0
        %2868 = vmatpush.bf16.msra.mxu0 0
        %2869 = vmatpush.bf16.msra.mxu0 0
        %2870 = vmatpush.bf16.msra.mxu0 0
        %2871 = vmatpush.bf16.msra.mxu0 0
        %2872 = vmatpush.bf16.msra.mxu0 0
        %2873 = vmatpush.bf16.msra.mxu0 0
        %2874 = vmatpush.bf16.msra.mxu0 %v2862
        %2875 = vmatmul.bf16.gmra.mxu0 %v2865
        %v2876 = vpop.f32.mrf.mxu0
        %v2877 = vadd.f32 0.0, %v2876
        %v2878 = vpop.f32.mrf.mxu0
        %v2879 = vadd.f32 0.0, %v2878
        %2880 = vdwg.mxu0
        %v2883 = vunpack.c.l.b16 %v2693
        %v2884 = vunpack.c.l.b16 %v2694
        %v2885 = vpack.c.b16 %v2884, %v2883
        %v2886 = vunpack.c.l.b16 %v495
        %v2887 = vunpack.c.l.b16 %v497
        %v2888 = vpack.c.b16 %v2887, %v2886
        %2889 = vrot.lane.b32.xlu0 %v2888, 64
        %v2890 = vpop.permute.xlu0 %2889
        %v2893 = vsel %vm2328, %v2885, 0
        %2895 = vmatpush.bf16.msra.mxu0 0
        %2896 = vmatpush.bf16.msra.mxu0 0
        %2897 = vmatpush.bf16.msra.mxu0 0
        %2898 = vmatpush.bf16.msra.mxu0 0
        %2899 = vmatpush.bf16.msra.mxu0 0
        %2900 = vmatpush.bf16.msra.mxu0 0
        %2901 = vmatpush.bf16.msra.mxu0 0
        %2902 = vmatpush.bf16.msra.mxu0 %v2890
        %2903 = vmatmul.bf16.gmra.mxu0 %v2893
        %v2904 = vpop.f32.mrf.mxu0
        %v2905 = vadd.f32 0.0, %v2904
        %v2906 = vpop.f32.mrf.mxu0
        %v2907 = vadd.f32 0.0, %v2906
        %2908 = vdwg.mxu0
        %v2911 = vunpack.c.l.b16 %v2695
        %v2912 = vunpack.c.l.b16 %v2696
        %v2913 = vpack.c.b16 %v2912, %v2911
        %v2914 = vunpack.c.l.b16 %v499
        %v2915 = vunpack.c.l.b16 %v501
        %v2916 = vpack.c.b16 %v2915, %v2914
        %2917 = vrot.lane.b32.xlu0 %v2916, 64
        %v2918 = vpop.permute.xlu0 %2917
        %v2921 = vsel %vm2328, %v2913, 0
        %2923 = vmatpush.bf16.msra.mxu0 0
        %2924 = vmatpush.bf16.msra.mxu0 0
        %2925 = vmatpush.bf16.msra.mxu0 0
        %2926 = vmatpush.bf16.msra.mxu0 0
        %2927 = vmatpush.bf16.msra.mxu0 0
        %2928 = vmatpush.bf16.msra.mxu0 0
        %2929 = vmatpush.bf16.msra.mxu0 0
        %2930 = vmatpush.bf16.msra.mxu0 %v2918
        %2931 = vmatmul.bf16.gmra.mxu0 %v2921
        %v2932 = vpop.f32.mrf.mxu0
        %v2933 = vadd.f32 0.0, %v2932
        %v2934 = vpop.f32.mrf.mxu0
        %v2935 = vadd.f32 0.0, %v2934
        %2936 = vdwg.mxu0
        %v2939 = vunpack.c.l.b16 %v2697
        %v2940 = vunpack.c.l.b16 %v2698
        %v2941 = vpack.c.b16 %v2940, %v2939
        %v2942 = vunpack.c.l.b16 %v503
        %v2943 = vunpack.c.l.b16 %v505
        %v2944 = vpack.c.b16 %v2943, %v2942
        %2945 = vrot.lane.b32.xlu0 %v2944, 64
        %v2946 = vpop.permute.xlu0 %2945
        %v2949 = vsel %vm2328, %v2941, 0
        %2951 = vmatpush.bf16.msra.mxu0 0
        %2952 = vmatpush.bf16.msra.mxu0 0
        %2953 = vmatpush.bf16.msra.mxu0 0
        %2954 = vmatpush.bf16.msra.mxu0 0
        %2955 = vmatpush.bf16.msra.mxu0 0
        %2956 = vmatpush.bf16.msra.mxu0 0
        %2957 = vmatpush.bf16.msra.mxu0 0
        %2958 = vmatpush.bf16.msra.mxu0 %v2946
        %2959 = vmatmul.bf16.gmra.mxu0 %v2949
        %v2960 = vpop.f32.mrf.mxu0
        %v2961 = vadd.f32 0.0, %v2960
        %v2962 = vpop.f32.mrf.mxu0
        %v2963 = vadd.f32 0.0, %v2962
        %2964 = vdwg.mxu0
        %v2967 = vunpack.c.l.b16 %v2699
        %v2968 = vunpack.c.l.b16 %v2700
        %v2969 = vpack.c.b16 %v2968, %v2967
        %v2970 = vunpack.c.l.b16 %v507
        %v2971 = vunpack.c.l.b16 %v509
        %v2972 = vpack.c.b16 %v2971, %v2970
        %2973 = vrot.lane.b32.xlu0 %v2972, 64
        %v2974 = vpop.permute.xlu0 %2973
        %v2977 = vsel %vm2328, %v2969, 0
        %2979 = vmatpush.bf16.msra.mxu0 0
        %2980 = vmatpush.bf16.msra.mxu0 0
        %2981 = vmatpush.bf16.msra.mxu0 0
        %2982 = vmatpush.bf16.msra.mxu0 0
        %2983 = vmatpush.bf16.msra.mxu0 0
        %2984 = vmatpush.bf16.msra.mxu0 0
        %2985 = vmatpush.bf16.msra.mxu0 0
        %2986 = vmatpush.bf16.msra.mxu0 %v2974
        %2987 = vmatmul.bf16.gmra.mxu0 %v2977
        %v2988 = vpop.f32.mrf.mxu0
        %v2989 = vadd.f32 0.0, %v2988
        %v2990 = vpop.f32.mrf.mxu0
        %v2991 = vadd.f32 0.0, %v2990
        %2992 = vdwg.mxu0
        %v2995 = vunpack.c.l.b16 %v2701
        %v2996 = vunpack.c.l.b16 %v2702
        %v2997 = vpack.c.b16 %v2996, %v2995
        %v2998 = vunpack.c.l.b16 %v511
        %v2999 = vunpack.c.l.b16 %v513
        %v3000 = vpack.c.b16 %v2999, %v2998
        %3001 = vrot.lane.b32.xlu0 %v3000, 64
        %v3002 = vpop.permute.xlu0 %3001
        %v3005 = vsel %vm2328, %v2997, 0
        %3007 = vmatpush.bf16.msra.mxu0 0
        %3008 = vmatpush.bf16.msra.mxu0 0
        %3009 = vmatpush.bf16.msra.mxu0 0
        %3010 = vmatpush.bf16.msra.mxu0 0
        %3011 = vmatpush.bf16.msra.mxu0 0
        %3012 = vmatpush.bf16.msra.mxu0 0
        %3013 = vmatpush.bf16.msra.mxu0 0
        %3014 = vmatpush.bf16.msra.mxu0 %v3002
        %3015 = vmatmul.bf16.gmra.mxu0 %v3005
        %v3016 = vpop.f32.mrf.mxu0
        %v3017 = vadd.f32 0.0, %v3016
        %v3018 = vpop.f32.mrf.mxu0
        %v3019 = vadd.f32 0.0, %v3018
        %3020 = vdwg.mxu0
        %v3023 = vunpack.c.l.b16 %v2703
        %v3024 = vunpack.c.l.b16 %v2704
        %v3025 = vpack.c.b16 %v3024, %v3023
        %v3026 = vunpack.c.l.b16 %v515
        %v3027 = vunpack.c.l.b16 %v517
        %v3028 = vpack.c.b16 %v3027, %v3026
        %3029 = vrot.lane.b32.xlu0 %v3028, 64
        %v3030 = vpop.permute.xlu0 %3029
        %v3033 = vsel %vm2328, %v3025, 0
        %3035 = vmatpush.bf16.msra.mxu0 0
        %3036 = vmatpush.bf16.msra.mxu0 0
        %3037 = vmatpush.bf16.msra.mxu0 0
        %3038 = vmatpush.bf16.msra.mxu0 0
        %3039 = vmatpush.bf16.msra.mxu0 0
        %3040 = vmatpush.bf16.msra.mxu0 0
        %3041 = vmatpush.bf16.msra.mxu0 0
        %3042 = vmatpush.bf16.msra.mxu0 %v3030
        %3043 = vmatmul.bf16.gmra.mxu0 %v3033
        %v3044 = vpop.f32.mrf.mxu0
        %v3045 = vadd.f32 0.0, %v3044
        %v3046 = vpop.f32.mrf.mxu0
        %v3047 = vadd.f32 0.0, %v3046
        %3048 = vdwg.mxu0
        %v3051 = vunpack.c.l.b16 %v2705
        %v3052 = vunpack.c.l.b16 %v2706
        %v3053 = vpack.c.b16 %v3052, %v3051
        %v3054 = vunpack.c.l.b16 %v519
        %v3055 = vunpack.c.l.b16 %v521
        %v3056 = vpack.c.b16 %v3055, %v3054
        %3057 = vrot.lane.b32.xlu0 %v3056, 64
        %v3058 = vpop.permute.xlu0 %3057
        %v3061 = vsel %vm2328, %v3053, 0
        %3063 = vmatpush.bf16.msra.mxu0 0
        %3064 = vmatpush.bf16.msra.mxu0 0
        %3065 = vmatpush.bf16.msra.mxu0 0
        %3066 = vmatpush.bf16.msra.mxu0 0
        %3067 = vmatpush.bf16.msra.mxu0 0
        %3068 = vmatpush.bf16.msra.mxu0 0
        %3069 = vmatpush.bf16.msra.mxu0 0
        %3070 = vmatpush.bf16.msra.mxu0 %v3058
        %3071 = vmatmul.bf16.gmra.mxu0 %v3061
        %v3072 = vpop.f32.mrf.mxu0
        %v3073 = vadd.f32 0.0, %v3072
        %v3074 = vpop.f32.mrf.mxu0
        %v3075 = vadd.f32 0.0, %v3074
        %3076 = vdwg.mxu0
        %v3079 = vunpack.c.l.b16 %v2707
        %v3080 = vunpack.c.l.b16 %v2708
        %v3081 = vpack.c.b16 %v3080, %v3079
        %v3082 = vunpack.c.l.b16 %v523
        %v3083 = vunpack.c.l.b16 %v525
        %v3084 = vpack.c.b16 %v3083, %v3082
        %3085 = vrot.lane.b32.xlu0 %v3084, 64
        %v3086 = vpop.permute.xlu0 %3085
        %v3089 = vsel %vm2328, %v3081, 0
        %3091 = vmatpush.bf16.msra.mxu0 0
        %3092 = vmatpush.bf16.msra.mxu0 0
        %3093 = vmatpush.bf16.msra.mxu0 0
        %3094 = vmatpush.bf16.msra.mxu0 0
        %3095 = vmatpush.bf16.msra.mxu0 0
        %3096 = vmatpush.bf16.msra.mxu0 0
        %3097 = vmatpush.bf16.msra.mxu0 0
        %3098 = vmatpush.bf16.msra.mxu0 %v3086
        %3099 = vmatmul.bf16.gmra.mxu0 %v3089
        %v3100 = vpop.f32.mrf.mxu0
        %v3101 = vadd.f32 0.0, %v3100
        %v3102 = vpop.f32.mrf.mxu0
        %v3103 = vadd.f32 0.0, %v3102
        %3104 = vdwg.mxu0
        %v3107 = vunpack.c.l.b16 %v2709
        %v3108 = vunpack.c.l.b16 %v2710
        %v3109 = vpack.c.b16 %v3108, %v3107
        %v3110 = vunpack.c.l.b16 %v527
        %v3111 = vunpack.c.l.b16 %v529
        %v3112 = vpack.c.b16 %v3111, %v3110
        %3113 = vrot.lane.b32.xlu0 %v3112, 64
        %v3114 = vpop.permute.xlu0 %3113
        %v3117 = vsel %vm2328, %v3109, 0
        %3119 = vmatpush.bf16.msra.mxu0 0
        %3120 = vmatpush.bf16.msra.mxu0 0
        %3121 = vmatpush.bf16.msra.mxu0 0
        %3122 = vmatpush.bf16.msra.mxu0 0
        %3123 = vmatpush.bf16.msra.mxu0 0
        %3124 = vmatpush.bf16.msra.mxu0 0
        %3125 = vmatpush.bf16.msra.mxu0 0
        %3126 = vmatpush.bf16.msra.mxu0 %v3114
        %3127 = vmatmul.bf16.gmra.mxu0 %v3117
        %v3128 = vpop.f32.mrf.mxu0
        %v3129 = vadd.f32 0.0, %v3128
        %v3130 = vpop.f32.mrf.mxu0
        %v3131 = vadd.f32 0.0, %v3130
        %3132 = vdwg.mxu0
        %v3135 = vunpack.c.l.b16 %v2711
        %v3136 = vunpack.c.l.b16 %v2712
        %v3137 = vpack.c.b16 %v3136, %v3135
        %v3138 = vunpack.c.l.b16 %v531
        %v3139 = vunpack.c.l.b16 %v533
        %v3140 = vpack.c.b16 %v3139, %v3138
        %3141 = vrot.lane.b32.xlu0 %v3140, 64
        %v3142 = vpop.permute.xlu0 %3141
        %v3145 = vsel %vm2328, %v3137, 0
        %3147 = vmatpush.bf16.msra.mxu0 0
        %3148 = vmatpush.bf16.msra.mxu0 0
        %3149 = vmatpush.bf16.msra.mxu0 0
        %3150 = vmatpush.bf16.msra.mxu0 0
        %3151 = vmatpush.bf16.msra.mxu0 0
        %3152 = vmatpush.bf16.msra.mxu0 0
        %3153 = vmatpush.bf16.msra.mxu0 0
        %3154 = vmatpush.bf16.msra.mxu0 %v3142
        %3155 = vmatmul.bf16.gmra.mxu0 %v3145
        %v3156 = vpop.f32.mrf.mxu0
        %v3157 = vadd.f32 0.0, %v3156
        %v3158 = vpop.f32.mrf.mxu0
        %v3159 = vadd.f32 0.0, %v3158
        %3160 = vdwg.mxu0
        %v3161 = vpack.c.bf16 %v2737, %v2737
        %v3162 = vpack.c.bf16 %v2739, %v2739
        %v3163 = vpack.c.bf16 %v2765, %v2765
        %v3164 = vpack.c.bf16 %v2767, %v2767
        %v3165 = vpack.c.bf16 %v2793, %v2793
        %v3166 = vpack.c.bf16 %v2795, %v2795
        %v3167 = vpack.c.bf16 %v2821, %v2821
        %v3168 = vpack.c.bf16 %v2823, %v2823
        %v3169 = vpack.c.bf16 %v2849, %v2849
        %v3170 = vpack.c.bf16 %v2851, %v2851
        %v3171 = vpack.c.bf16 %v2877, %v2877
        %v3172 = vpack.c.bf16 %v2879, %v2879
        %v3173 = vpack.c.bf16 %v2905, %v2905
        %v3174 = vpack.c.bf16 %v2907, %v2907
        %v3175 = vpack.c.bf16 %v2933, %v2933
        %v3176 = vpack.c.bf16 %v2935, %v2935
        %v3177 = vpack.c.bf16 %v2961, %v2961
        %v3178 = vpack.c.bf16 %v2963, %v2963
        %v3179 = vpack.c.bf16 %v2989, %v2989
        %v3180 = vpack.c.bf16 %v2991, %v2991
        %v3181 = vpack.c.bf16 %v3017, %v3017
        %v3182 = vpack.c.bf16 %v3019, %v3019
        %v3183 = vpack.c.bf16 %v3045, %v3045
        %v3184 = vpack.c.bf16 %v3047, %v3047
        %v3185 = vpack.c.bf16 %v3073, %v3073
        %v3186 = vpack.c.bf16 %v3075, %v3075
        %v3187 = vpack.c.bf16 %v3101, %v3101
        %v3188 = vpack.c.bf16 %v3103, %v3103
        %v3189 = vpack.c.bf16 %v3129, %v3129
        %v3190 = vpack.c.bf16 %v3131, %v3131
        %v3191 = vpack.c.bf16 %v3157, %v3157
        %v3192 = vpack.c.bf16 %v3159, %v3159
        %v3201 = vunpack.c.l.b16 %v3161
        %v3202 = vunpack.c.l.b16 %v3162
        %v3203 = vunpack.c.l.b16 %v3163
        %v3204 = vunpack.c.l.b16 %v3164
        %v3205 = vunpack.c.l.b16 %v3165
        %v3206 = vunpack.c.l.b16 %v3166
        %v3207 = vunpack.c.l.b16 %v3167
        %v3208 = vunpack.c.l.b16 %v3168
        %v3209 = vpack.c.b16 %v3202, %v3201
        %v3210 = vpack.c.b16 %v3204, %v3203
        %v3211 = vpack.c.b16 %v3206, %v3205
        %v3212 = vpack.c.b16 %v3208, %v3207
        %v3221 = vunpack.c.l.b16 %v3169
        %v3222 = vunpack.c.l.b16 %v3170
        %v3223 = vunpack.c.l.b16 %v3171
        %v3224 = vunpack.c.l.b16 %v3172
        %v3225 = vunpack.c.l.b16 %v3173
        %v3226 = vunpack.c.l.b16 %v3174
        %v3227 = vunpack.c.l.b16 %v3175
        %v3228 = vunpack.c.l.b16 %v3176
        %v3229 = vpack.c.b16 %v3222, %v3221
        %v3230 = vpack.c.b16 %v3224, %v3223
        %v3231 = vpack.c.b16 %v3226, %v3225
        %v3232 = vpack.c.b16 %v3228, %v3227
        %3233 = vrot.lane.b32.xlu0 %v3229, 8
        %v3234 = vpop.permute.xlu0 %3233
        %3235 = vrot.lane.b32.xlu0 %v3230, 8
        %v3236 = vpop.permute.xlu0 %3235
        %3237 = vrot.lane.b32.xlu0 %v3231, 8
        %v3238 = vpop.permute.xlu0 %3237
        %3239 = vrot.lane.b32.xlu0 %v3232, 8
        %v3240 = vpop.permute.xlu0 %3239
        %v3249 = vunpack.c.l.b16 %v3177
        %v3250 = vunpack.c.l.b16 %v3178
        %v3251 = vunpack.c.l.b16 %v3179
        %v3252 = vunpack.c.l.b16 %v3180
        %v3253 = vunpack.c.l.b16 %v3181
        %v3254 = vunpack.c.l.b16 %v3182
        %v3255 = vunpack.c.l.b16 %v3183
        %v3256 = vunpack.c.l.b16 %v3184
        %v3257 = vpack.c.b16 %v3250, %v3249
        %v3258 = vpack.c.b16 %v3252, %v3251
        %v3259 = vpack.c.b16 %v3254, %v3253
        %v3260 = vpack.c.b16 %v3256, %v3255
        %3261 = vrot.lane.b32.xlu0 %v3257, 16
        %v3262 = vpop.permute.xlu0 %3261
        %3263 = vrot.lane.b32.xlu0 %v3258, 16
        %v3264 = vpop.permute.xlu0 %3263
        %3265 = vrot.lane.b32.xlu0 %v3259, 16
        %v3266 = vpop.permute.xlu0 %3265
        %3267 = vrot.lane.b32.xlu0 %v3260, 16
        %v3268 = vpop.permute.xlu0 %3267
        %v3277 = vunpack.c.l.b16 %v3185
        %v3278 = vunpack.c.l.b16 %v3186
        %v3279 = vunpack.c.l.b16 %v3187
        %v3280 = vunpack.c.l.b16 %v3188
        %v3281 = vunpack.c.l.b16 %v3189
        %v3282 = vunpack.c.l.b16 %v3190
        %v3283 = vunpack.c.l.b16 %v3191
        %v3284 = vunpack.c.l.b16 %v3192
        %v3285 = vpack.c.b16 %v3278, %v3277
        %v3286 = vpack.c.b16 %v3280, %v3279
        %v3287 = vpack.c.b16 %v3282, %v3281
        %v3288 = vpack.c.b16 %v3284, %v3283
        %3289 = vrot.lane.b32.xlu0 %v3285, 24
        %v3290 = vpop.permute.xlu0 %3289
        %3291 = vrot.lane.b32.xlu0 %v3286, 24
        %v3292 = vpop.permute.xlu0 %3291
        %3293 = vrot.lane.b32.xlu0 %v3287, 24
        %v3294 = vpop.permute.xlu0 %3293
        %3295 = vrot.lane.b32.xlu0 %v3288, 24
        %v3296 = vpop.permute.xlu0 %3295
        %v3299 = vsel %vm694, %v3209, %v3234
        %v3302 = vsel %vm694, %v3210, %v3236
        %v3305 = vsel %vm694, %v3211, %v3238
        %v3308 = vsel %vm694, %v3212, %v3240
        %v3310 = vsel %vm2328, %v3299, %v3262
        %v3312 = vsel %vm2328, %v3302, %v3264
        %v3314 = vsel %vm2328, %v3305, %v3266
        %v3316 = vsel %vm2328, %v3308, %v3268
        %vm3317 = vcmask 195584
        %v3319 = vsel %vm3317, %v3310, %v3290
        %v3321 = vsel %vm3317, %v3312, %v3292
        %v3323 = vsel %vm3317, %v3314, %v3294
        %v3325 = vsel %vm3317, %v3316, %v3296
        %v3326 = vld [vmem:[#allocation2] sm:$0xf]
        %v3327 = vld [vmem:[#allocation2 + $0x4] sm:$0xf]
        %v3328 = vld [vmem:[#allocation2 + $0x8] sm:$0xf]
        %v3329 = vld [vmem:[#allocation2 + $0xc] sm:$0xf]
        %v3330 = vld [vmem:[%s6] sm:$0x1]
        %v3332 = vperm.slane %v3330, 0
        %v3338 = vunpack.c.l.b16 %v3326
        %v3339 = vunpack.c.l.b16 %v3327
        %v3340 = vunpack.c.l.b16 %v3328
        %v3341 = vunpack.c.l.b16 %v3329
        %v3342 = vpack.c.b16 %v3339, %v3338
        %v3343 = vpack.c.b16 %v3341, %v3340
        %v3346 = vsel %vm348, %v3319, 0
        %v3348 = vsel %vm348, %v3321, 0
        %v3350 = vsel %vm348, %v3323, 0
        %v3352 = vsel %vm348, %v3325, 0
        %3354 = vmatpush.bf16.msra.mxu0 0
        %3355 = vmatpush.bf16.msra.mxu0 0
        %3356 = vmatpush.bf16.msra.mxu0 0
        %3357 = vmatpush.bf16.msra.mxu0 0
        %3358 = vmatpush.bf16.msra.mxu0 0
        %3359 = vmatpush.bf16.msra.mxu0 0
        %3360 = vmatpush.bf16.msra.mxu0 %v3343
        %3361 = vmatpush.bf16.msra.mxu0 %v3342
        %3362 = vmatmul.bf16.gmra.mxu0 %v3346
        %v3363 = vpop.f32.mrf.mxu0
        %v3364 = vadd.f32 %v3332, %v3363
        %v3365 = vpop.f32.mrf.mxu0
        %v3366 = vadd.f32 %v3332, %v3365
        %3367 = vmatmul.bf16.gmra.mxu0 %v3348
        %v3368 = vpop.f32.mrf.mxu0
        %v3369 = vadd.f32 %v3332, %v3368
        %v3370 = vpop.f32.mrf.mxu0
        %v3371 = vadd.f32 %v3332, %v3370
        %3372 = vmatmul.bf16.gmra.mxu0 %v3350
        %v3373 = vpop.f32.mrf.mxu0
        %v3374 = vadd.f32 %v3332, %v3373
        %v3375 = vpop.f32.mrf.mxu0
        %v3376 = vadd.f32 %v3332, %v3375
        %3377 = vmatmul.bf16.gmra.mxu0 %v3352
        %v3378 = vpop.f32.mrf.mxu0
        %v3379 = vadd.f32 %v3332, %v3378
        %v3380 = vpop.f32.mrf.mxu0
        %v3381 = vadd.f32 %v3332, %v3380
        %3382 = vdwg.mxu0
        %3383 = vst.msk [vmem:[%s297] sm:$0xff] %vm348, %v3364
        %3384 = vst.msk [vmem:[%s297 + $0x8] sm:$0xff] %vm348, %v3366
        %3385 = vst.msk [vmem:[%s297 + $0x10] sm:$0xff] %vm348, %v3369
        %3386 = vst.msk [vmem:[%s297 + $0x18] sm:$0xff] %vm348, %v3371
        %3387 = vst.msk [vmem:[%s297 + $0x20] sm:$0xff] %vm348, %v3374
        %3388 = vst.msk [vmem:[%s297 + $0x28] sm:$0xff] %vm348, %v3376
        %3389 = vst.msk [vmem:[%s297 + $0x30] sm:$0xff] %vm348, %v3379
        %3390 = vst.msk [vmem:[%s297 + $0x38] sm:$0xff] %vm348, %v3381
        %s3391 = smul.u32 8, %s19
        %p3392 = scmp.lt.s32.totalorder %s3391, 15
        %s3393 = scalar_select %p3392, %s3391, 15
        %s3394 = smul.addr %s3393, 8
        %s3395 = scalar_lea.vmem %s7, %s3394
        // Predicated region
        $region53: #{tpu_custom_call.1} parent=47 // pred_check
          %p3396 = pneg %p189
        $region54: #{tpu_custom_call.1} parent=47 // pred_check_branch
          %3398 = sbr.rel (%p3396) target = $region56
        $region55: #{tpu_custom_call.1} parent=47 // pred_region
          %s3399 = smul.u32 8, %s19
        $region56: #{tpu_custom_call.1} parent=47 // pred_fallthru
          _
      $region48: #{tpu_custom_call.1} parent=5 // pred_fallthru
        _
      %p3400 = scmp.le.s32.totalorder 2, %s14
      // Predicated region
      $region57: #{tpu_custom_call.1} parent=5 // pred_check
        %p3401 = pneg %p3400
      $region58: #{tpu_custom_call.1} parent=5 // pred_check_branch
        %3403 = sbr.rel (%p3401) target = $region60
      $region59: #{tpu_custom_call.1} parent=5 // pred_region
        %s3404 = ssub.s32 %s14, 2
        // Predicated region
        $region61: #{tpu_custom_call.1} parent=59 // pred_check
          %p3405 = pneg %p195
        $region62: #{tpu_custom_call.1} parent=59 // pred_check_branch
          %3407 = sbr.rel (%p3405) target = $region64
        $region63: #{tpu_custom_call.1} parent=59 // pred_region
          %s3408 = smul.u32 8, %s20
          %p3409 = scmp.lt.s32.totalorder %s3408, 15
          %s3410 = scalar_select %p3409, %s3408, 15
          %s3411 = smul.addr %s3410, 8
          %s3412 = scalar_lea.vmem %s7, %s3411
        $region64: #{tpu_custom_call.1} parent=59 // pred_fallthru
          _
      $region60: #{tpu_custom_call.1} parent=5 // pred_fallthru
        _
    $region6: #{tpu_custom_call.1} parent=1 // loop_footer
      %s18 = sadd.s32 1, %s14
    $region7: #{tpu_custom_call.1} parent=1 // loop_footer_branch
      %13 = sbr.rel target = $region3
    $region8: #{tpu_custom_call.1} parent=1 // loop_exit
      _
    %3413 = vsyncpa [#allocation3], 1
    %s3414 = scalar_lea.sflag [#allocation3], 1
    %3415 = vsyncpa %s3414, 1

</llo_original>
